<compile_context>
chip_gen: v6e
topology: v6e:2x2x1
jax: 0.10.0
libtpu: 0.0.40
codegen_flags: <defaults>
</compile_context>

<pallas_src>
import math
import functools

import jax
import jax.numpy as jnp
from jax.experimental import pallas as pl
from jax.experimental.pallas import tpu as pltpu

# ----- model hyper-parameters (small, consistent with the module's __init__) -----
PAD = 0            # onmt.Constants.PAD
VOCAB = 50         # dicts.size()
MODEL_SIZE = 32    # opt.model_size
N_HEADS = 4        # opt.n_heads
INNER_SIZE = 64    # opt.inner_size
N_LAYERS = 2       # opt.layers
BATCH = 2
SEQ = 8
LN_EPS = 1e-6


# ---------------------------------------------------------------------------
# in-kernel helpers
# ---------------------------------------------------------------------------
def _layer_norm(x, g, b):
    mu = jnp.mean(x, axis=-1, keepdims=True)
    var = jnp.mean((x - mu) ** 2, axis=-1, keepdims=True)
    return (x - mu) * jax.lax.rsqrt(var + LN_EPS) * g + b


# ---------------------------------------------------------------------------
# fused whole-model encoder kernel (all layers + final LN, whole batch at once)
# ---------------------------------------------------------------------------
def fused_encoder_kernel(x_ref, amask_ref,
                         ln1_g_ref, ln1_b_ref,
                         wqkv_ref, bqkv_ref,
                         wo_ref, bo_ref,
                         ln2_g_ref, ln2_b_ref,
                         w1_ref, b1_ref, w2_ref, b2_ref,
                         lnf_g_ref, lnf_b_ref,
                         o_ref, *, n_layers, n_heads):
    x = x_ref[...]                          # (B*L, D), all sequences stacked
    amask = amask_ref[...]                  # (B*L, B*L) additive mask:
                                            #   0 same-seq non-pad key, -1e9 pad key,
                                            #   -2e9 cross-sequence (block-diagonal batching)
    D = x.shape[-1]
    dh = D // n_heads
    scale = 1.0 / math.sqrt(dh)

    for l in range(n_layers):               # static unroll, weights stay VMEM-resident
        # ---- self-attention block (preprocess = LayerNorm) ----
        xn = _layer_norm(x, ln1_g_ref[l], ln1_b_ref[l])
        qkv = jnp.dot(xn, wqkv_ref[l], preferred_element_type=jnp.float32) + bqkv_ref[l]

        ctx_heads = []
        for h in range(n_heads):            # static unroll over heads
            qh = qkv[:, h * dh:(h + 1) * dh]
            kh = qkv[:, D + h * dh:D + (h + 1) * dh]
            vh = qkv[:, 2 * D + h * dh:2 * D + (h + 1) * dh]
            s = jnp.dot(qh, kh.T, preferred_element_type=jnp.float32) * scale + amask
            s = s - jnp.max(s, axis=-1, keepdims=True)
            p = jnp.exp(s)                  # cross-seq / pad keys underflow to exactly 0
            p = p * pl.reciprocal(jnp.sum(p, axis=-1, keepdims=True), approx=True)
            ctx_heads.append(jnp.dot(p, vh, preferred_element_type=jnp.float32))

        ctx = jnp.concatenate(ctx_heads, axis=-1)                    # (B*L, D)
        attn = jnp.dot(ctx, wo_ref[l], preferred_element_type=jnp.float32) + bo_ref[l]
        x = x + attn                          # postprocess 'da' (dropout = identity)

        # ---- feed-forward block (preprocess = LayerNorm) ----
        xn2 = _layer_norm(x, ln2_g_ref[l], ln2_b_ref[l])
        hid = jnp.maximum(
            jnp.dot(xn2, w1_ref[l], preferred_element_type=jnp.float32) + b1_ref[l],
            0.0)
        ff = jnp.dot(hid, w2_ref[l], preferred_element_type=jnp.float32) + b2_ref[l]
        x = x + ff                            # postprocess 'da'

    # ---- encoder postprocess_layer: final LayerNorm ----
    o_ref[...] = _layer_norm(x, lnf_g_ref[...], lnf_b_ref[...])


# ---------------------------------------------------------------------------
# wrapper around a single pallas_call
# ---------------------------------------------------------------------------
def _full_spec(shape):
    n = len(shape)
    return pl.BlockSpec(shape, lambda i, _n=n: (0,) * _n)


def fused_encoder(x_flat, amask, p):
    BL, D = x_flat.shape
    NL = p["wqkv"].shape[0]
    F = p["w1"].shape[-1]

    in_specs = [
        _full_spec((BL, D)),                  # x
        _full_spec((BL, BL)),                 # additive attention mask
        _full_spec((NL, 1, D)), _full_spec((NL, 1, D)),       # ln1 gamma/beta
        _full_spec((NL, D, 3 * D)), _full_spec((NL, 1, 3 * D)),  # Wqkv, bqkv
        _full_spec((NL, D, D)), _full_spec((NL, 1, D)),        # Wo, bo
        _full_spec((NL, 1, D)), _full_spec((NL, 1, D)),        # ln2 gamma/beta
        _full_spec((NL, D, F)), _full_spec((NL, 1, F)),        # W1, b1
        _full_spec((NL, F, D)), _full_spec((NL, 1, D)),        # W2, b2
        _full_spec((1, D)), _full_spec((1, D)),                # final LN gamma/beta
    ]
    return pl.pallas_call(
        functools.partial(fused_encoder_kernel, n_layers=NL, n_heads=N_HEADS),
        out_shape=jax.ShapeDtypeStruct((BL, D), jnp.float32),
        grid=(1,),
        in_specs=in_specs,
        out_specs=pl.BlockSpec((BL, D), lambda i: (0, 0)),
        compiler_params=pltpu.CompilerParams(
            dimension_semantics=("arbitrary",)),
    )(x_flat, amask,
      p["ln1_g"], p["ln1_b"],
      p["wqkv"], p["bqkv"],
      p["wo"], p["bo"],
      p["ln2_g"], p["ln2_b"],
      p["w1"], p["b1"], p["w2"], p["b2"],
      p["lnf_g"], p["lnf_b"])


# ---------------------------------------------------------------------------
# glue: embedding + positional encoding + full forward
# ---------------------------------------------------------------------------
def sinusoidal_pe(length, d_model):
    pos = jnp.arange(length, dtype=jnp.float32)[:, None]
    idx = jnp.arange(d_model // 2, dtype=jnp.float32)[None, :]
    inv = jnp.exp(-(math.log(10000.0)) * (2.0 * idx) / d_model)
    ang = pos * inv
    return jnp.concatenate([jnp.sin(ang), jnp.cos(ang)], axis=1)   # (L, D)


def init_params(key):
    D, F, NL = MODEL_SIZE, INNER_SIZE, N_LAYERS
    ks = jax.random.split(key, 6)
    s = 0.02
    emb = s * jax.random.normal(ks[0], (VOCAB, D), jnp.float32)
    emb = emb.at[PAD].set(0.0)                                   # padding_idx row = 0
    params = {
        "emb": emb,
        # per-layer weights stacked on a leading layer axis (kept VMEM-resident)
        "ln1_g": jnp.ones((NL, 1, D), jnp.float32),
        "ln1_b": jnp.zeros((NL, 1, D), jnp.float32),
        "wqkv": s * jax.random.normal(ks[1], (NL, D, 3 * D), jnp.float32),
        "bqkv": jnp.zeros((NL, 1, 3 * D), jnp.float32),
        "wo": s * jax.random.normal(ks[2], (NL, D, D), jnp.float32),
        "bo": jnp.zeros((NL, 1, D), jnp.float32),
        "ln2_g": jnp.ones((NL, 1, D), jnp.float32),
        "ln2_b": jnp.zeros((NL, 1, D), jnp.float32),
        "w1": s * jax.random.normal(ks[3], (NL, D, F), jnp.float32),
        "b1": jnp.zeros((NL, 1, F), jnp.float32),
        "w2": s * jax.random.normal(ks[4], (NL, F, D), jnp.float32),
        "b2": jnp.zeros((NL, 1, D), jnp.float32),
        # final postprocess LayerNorm
        "lnf_g": jnp.ones((1, D), jnp.float32),
        "lnf_b": jnp.zeros((1, D), jnp.float32),
    }
    return params


def transformer_encoder_forward(tokens, params):
    B, L = tokens.shape
    D = MODEL_SIZE

    mask_src = (tokens == PAD)[:, None, :]                       # (B, 1, L) bool
    emb = jnp.take(params["emb"], tokens, axis=0)                # (B, L, D)
    emb = emb * math.sqrt(D)                                     # scale by sqrt(d_model)
    emb = emb + sinusoidal_pe(L, D)[None, :, :]                  # time == positional_encoding
    # preprocess_layer sequence='d' -> dropout -> identity at inference
    x_flat = emb.reshape(B * L, D).astype(jnp.float32)

    # additive attention mask for batched (block-diagonal) attention:
    #   0      : same sequence, non-PAD key
    #   -1e9   : same sequence, PAD key   (== masked_fill(mask, -inf))
    #   -2e9   : different sequence       (strictly below pad scores, so even an
    #            all-PAD sequence never attends across sequences)
    idx = jnp.arange(B * L)
    same_seq = (idx[:, None] // L) == (idx[None, :] // L)
    pad_key = (tokens.reshape(-1) == PAD)[None, :]
    amask = jnp.where(same_seq,
                      jnp.where(pad_key, -1e9, 0.0),
                      -2e9).astype(jnp.float32)

    out = fused_encoder(x_flat, amask, params)                   # (B*L, D)
    context = jnp.transpose(out.reshape(B, L, D), (1, 0, 2))     # (L, B, D) == transpose(0, 1)
    # TODO(synk): word_dropout / embedded_dropout, attn/emb dropout and the GRU/LSTM
    # time transforms (and the audio 'audio_trans' input path) are training-/config-only
    # paths and are not implemented (inference, text input, positional_encoding).
    return {"context": context, "src_mask": mask_src}


if __name__ == "__main__":
    key = jax.random.PRNGKey(0)
    pkey, tkey = jax.random.split(key)
    params = init_params(pkey)

    tokens = jax.random.randint(tkey, (BATCH, SEQ), 1, VOCAB, dtype=jnp.int32)
    tokens = tokens.at[1, -2:].set(PAD)            # introduce some padding

    out = transformer_encoder_forward(tokens, params)
    jax.block_until_ready(out["context"])

    assert out["context"].shape == (SEQ, BATCH, MODEL_SIZE)
    assert out["src_mask"].shape == (BATCH, 1, SEQ)
    assert bool(jnp.all(jnp.isfinite(out["context"])))
    print("KERNEL_OK")
</pallas_src>

<mosaic_0001>
module attributes {stable_mosaic.version = 11 : i64} {
  func.func @fused_encoder_kernel(%arg0: i32, %arg1: memref<16x32xf32, #tpu.memory_space<vmem>>, %arg2: memref<16x16xf32, #tpu.memory_space<vmem>>, %arg3: memref<2x1x32xf32, #tpu.memory_space<vmem>>, %arg4: memref<2x1x32xf32, #tpu.memory_space<vmem>>, %arg5: memref<2x32x96xf32, #tpu.memory_space<vmem>>, %arg6: memref<2x1x96xf32, #tpu.memory_space<vmem>>, %arg7: memref<2x32x32xf32, #tpu.memory_space<vmem>>, %arg8: memref<2x1x32xf32, #tpu.memory_space<vmem>>, %arg9: memref<2x1x32xf32, #tpu.memory_space<vmem>>, %arg10: memref<2x1x32xf32, #tpu.memory_space<vmem>>, %arg11: memref<2x32x64xf32, #tpu.memory_space<vmem>>, %arg12: memref<2x1x64xf32, #tpu.memory_space<vmem>>, %arg13: memref<2x64x32xf32, #tpu.memory_space<vmem>>, %arg14: memref<2x1x32xf32, #tpu.memory_space<vmem>>, %arg15: memref<1x32xf32, #tpu.memory_space<vmem>>, %arg16: memref<1x32xf32, #tpu.memory_space<vmem>>, %arg17: memref<16x32xf32, #tpu.memory_space<vmem>>) attributes {dimension_semantics = [#tpu.dimension_semantics<arbitrary>], iteration_bounds = array<i64: 1>, scalar_prefetch = 0 : i64, scratch_operands = 0 : i64, tpu.core_type = #tpu.core_type<tc>, window_params = [{pipeline_mode = #tpu.pipeline_mode<synchronous>, transform_indices = @transform_0, window_bounds = array<i64: 16, 32>}, {pipeline_mode = #tpu.pipeline_mode<synchronous>, transform_indices = @transform_1, window_bounds = array<i64: 16, 16>}, {pipeline_mode = #tpu.pipeline_mode<synchronous>, transform_indices = @transform_2, window_bounds = array<i64: 2, 1, 32>}, {pipeline_mode = #tpu.pipeline_mode<synchronous>, transform_indices = @transform_3, window_bounds = array<i64: 2, 1, 32>}, {pipeline_mode = #tpu.pipeline_mode<synchronous>, transform_indices = @transform_4, window_bounds = array<i64: 2, 32, 96>}, {pipeline_mode = #tpu.pipeline_mode<synchronous>, transform_indices = @transform_5, window_bounds = array<i64: 2, 1, 96>}, {pipeline_mode = #tpu.pipeline_mode<synchronous>, transform_indices = @transform_6, window_bounds = array<i64: 2, 32, 32>}, {pipeline_mode = #tpu.pipeline_mode<synchronous>, transform_indices = @transform_7, window_bounds = array<i64: 2, 1, 32>}, {pipeline_mode = #tpu.pipeline_mode<synchronous>, transform_indices = @transform_8, window_bounds = array<i64: 2, 1, 32>}, {pipeline_mode = #tpu.pipeline_mode<synchronous>, transform_indices = @transform_9, window_bounds = array<i64: 2, 1, 32>}, {pipeline_mode = #tpu.pipeline_mode<synchronous>, transform_indices = @transform_10, window_bounds = array<i64: 2, 32, 64>}, {pipeline_mode = #tpu.pipeline_mode<synchronous>, transform_indices = @transform_11, window_bounds = array<i64: 2, 1, 64>}, {pipeline_mode = #tpu.pipeline_mode<synchronous>, transform_indices = @transform_12, window_bounds = array<i64: 2, 64, 32>}, {pipeline_mode = #tpu.pipeline_mode<synchronous>, transform_indices = @transform_13, window_bounds = array<i64: 2, 1, 32>}, {pipeline_mode = #tpu.pipeline_mode<synchronous>, transform_indices = @transform_14, window_bounds = array<i64: 1, 32>}, {pipeline_mode = #tpu.pipeline_mode<synchronous>, transform_indices = @transform_15, window_bounds = array<i64: 1, 32>}, {pipeline_mode = #tpu.pipeline_mode<synchronous>, transform_indices = @transform_16, window_bounds = array<i64: 16, 32>}]} {
    %c0 = arith.constant 0 : index
    %c0_0 = arith.constant 0 : index
    %0 = vector.load %arg1[%c0, %c0_0] : memref<16x32xf32, #tpu.memory_space<vmem>>, vector<16x32xf32>
    %c0_1 = arith.constant 0 : index
    %c0_2 = arith.constant 0 : index
    %1 = vector.load %arg2[%c0_1, %c0_2] : memref<16x16xf32, #tpu.memory_space<vmem>>, vector<16x16xf32>
    %c0_3 = arith.constant 0 : index
    %c0_4 = arith.constant 0 : index
    %c0_5 = arith.constant 0 : index
    %2 = vector.load %arg3[%c0_3, %c0_4, %c0_5] : memref<2x1x32xf32, #tpu.memory_space<vmem>>, vector<1x1x32xf32>
    %3 = vector.shape_cast %2 : vector<1x1x32xf32> to vector<1x32xf32>
    %c0_6 = arith.constant 0 : index
    %c0_7 = arith.constant 0 : index
    %c0_8 = arith.constant 0 : index
    %4 = vector.load %arg4[%c0_6, %c0_7, %c0_8] : memref<2x1x32xf32, #tpu.memory_space<vmem>>, vector<1x1x32xf32>
    %5 = vector.shape_cast %4 : vector<1x1x32xf32> to vector<1x32xf32>
    %cst = arith.constant dense<0.000000e+00> : vector<16xf32>
    %6 = vector.multi_reduction <add>, %0, %cst [1] : vector<16x32xf32> to vector<16xf32>
    %7 = vector.shape_cast %6 : vector<16xf32> to vector<16x1xf32>
    %cst_9 = arith.constant 3.200000e+01 : f32
    %8 = vector.broadcast %cst_9 : f32 to vector<16x1xf32>
    %9 = arith.divf %7, %8 : vector<16x1xf32>
    %10 = vector.broadcast %9 : vector<16x1xf32> to vector<16x32xf32>
    %11 = arith.subf %0, %10 : vector<16x32xf32>
    %12 = arith.mulf %11, %11 : vector<16x32xf32>
    %cst_10 = arith.constant dense<0.000000e+00> : vector<16xf32>
    %13 = vector.multi_reduction <add>, %12, %cst_10 [1] : vector<16x32xf32> to vector<16xf32>
    %14 = vector.shape_cast %13 : vector<16xf32> to vector<16x1xf32>
    %cst_11 = arith.constant 3.200000e+01 : f32
    %15 = vector.broadcast %cst_11 : f32 to vector<16x1xf32>
    %16 = arith.divf %14, %15 : vector<16x1xf32>
    %17 = vector.broadcast %9 : vector<16x1xf32> to vector<16x32xf32>
    %18 = arith.subf %0, %17 : vector<16x32xf32>
    %cst_12 = arith.constant 9.99999997E-7 : f32
    %19 = vector.broadcast %cst_12 : f32 to vector<16x1xf32>
    %20 = arith.addf %16, %19 : vector<16x1xf32>
    %21 = math.rsqrt %20 : vector<16x1xf32>
    %22 = vector.broadcast %21 : vector<16x1xf32> to vector<16x32xf32>
    %23 = arith.mulf %18, %22 : vector<16x32xf32>
    %24 = vector.broadcast %3 : vector<1x32xf32> to vector<16x32xf32>
    %25 = arith.mulf %23, %24 : vector<16x32xf32>
    %26 = vector.broadcast %5 : vector<1x32xf32> to vector<16x32xf32>
    %27 = arith.addf %25, %26 : vector<16x32xf32>
    %c0_13 = arith.constant 0 : index
    %c0_14 = arith.constant 0 : index
    %c0_15 = arith.constant 0 : index
    %28 = vector.load %arg5[%c0_13, %c0_14, %c0_15] : memref<2x32x96xf32, #tpu.memory_space<vmem>>, vector<1x32x96xf32>
    %29 = vector.shape_cast %28 : vector<1x32x96xf32> to vector<32x96xf32>
    %cst_16 = arith.constant dense<0.000000e+00> : vector<16x96xf32>
    %30 = tpu.matmul %27, %29, %cst_16 {dimension_numbers = #tpu.dot_dimension_numbers<[1], [0], [0], [1], [0, 0, 1, 1], [], []>} : vector<16x32xf32>, vector<32x96xf32>, vector<16x96xf32> -> vector<16x96xf32>
    %c0_17 = arith.constant 0 : index
    %c0_18 = arith.constant 0 : index
    %c0_19 = arith.constant 0 : index
    %31 = vector.load %arg6[%c0_17, %c0_18, %c0_19] : memref<2x1x96xf32, #tpu.memory_space<vmem>>, vector<1x1x96xf32>
    %32 = vector.shape_cast %31 : vector<1x1x96xf32> to vector<1x96xf32>
    %33 = vector.broadcast %32 : vector<1x96xf32> to vector<16x96xf32>
    %34 = arith.addf %30, %33 : vector<16x96xf32>
    %35 = vector.extract_strided_slice %34 {offsets = [0, 0], sizes = [16, 8], strides = [1, 1]} : vector<16x96xf32> to vector<16x8xf32>
    %36 = vector.extract_strided_slice %34 {offsets = [0, 32], sizes = [16, 8], strides = [1, 1]} : vector<16x96xf32> to vector<16x8xf32>
    %37 = vector.extract_strided_slice %34 {offsets = [0, 64], sizes = [16, 8], strides = [1, 1]} : vector<16x96xf32> to vector<16x8xf32>
    %38 = tpu.transpose %36, [1, 0] : vector<16x8xf32> -> vector<8x16xf32>
    %cst_20 = arith.constant dense<0.000000e+00> : vector<16x16xf32>
    %39 = tpu.matmul %35, %38, %cst_20 {dimension_numbers = #tpu.dot_dimension_numbers<[1], [0], [0], [1], [0, 0, 1, 1], [], []>} : vector<16x8xf32>, vector<8x16xf32>, vector<16x16xf32> -> vector<16x16xf32>
    %cst_21 = arith.constant 0.353553385 : f32
    %40 = vector.broadcast %cst_21 : f32 to vector<16x16xf32>
    %41 = arith.mulf %39, %40 : vector<16x16xf32>
    %42 = arith.addf %41, %1 : vector<16x16xf32>
    %cst_22 = arith.constant dense<0xFF800000> : vector<16xf32>
    %43 = vector.multi_reduction <maximumf>, %42, %cst_22 [1] : vector<16x16xf32> to vector<16xf32>
    %44 = vector.shape_cast %43 : vector<16xf32> to vector<16x1xf32>
    %45 = vector.broadcast %44 : vector<16x1xf32> to vector<16x16xf32>
    %46 = arith.subf %42, %45 : vector<16x16xf32>
    %47 = math.exp %46 : vector<16x16xf32>
    %cst_23 = arith.constant dense<0.000000e+00> : vector<16xf32>
    %48 = vector.multi_reduction <add>, %47, %cst_23 [1] : vector<16x16xf32> to vector<16xf32>
    %49 = vector.shape_cast %48 : vector<16xf32> to vector<16x1xf32>
    %50 = tpu.reciprocal %49 {approx = true} : vector<16x1xf32> -> vector<16x1xf32>
    %51 = vector.broadcast %50 : vector<16x1xf32> to vector<16x16xf32>
    %52 = arith.mulf %47, %51 : vector<16x16xf32>
    %cst_24 = arith.constant dense<0.000000e+00> : vector<16x8xf32>
    %53 = tpu.matmul %52, %37, %cst_24 {dimension_numbers = #tpu.dot_dimension_numbers<[1], [0], [0], [1], [0, 0, 1, 1], [], []>} : vector<16x16xf32>, vector<16x8xf32>, vector<16x8xf32> -> vector<16x8xf32>
    %54 = vector.extract_strided_slice %34 {offsets = [0, 8], sizes = [16, 8], strides = [1, 1]} : vector<16x96xf32> to vector<16x8xf32>
    %55 = vector.extract_strided_slice %34 {offsets = [0, 40], sizes = [16, 8], strides = [1, 1]} : vector<16x96xf32> to vector<16x8xf32>
    %56 = vector.extract_strided_slice %34 {offsets = [0, 72], sizes = [16, 8], strides = [1, 1]} : vector<16x96xf32> to vector<16x8xf32>
    %57 = tpu.transpose %55, [1, 0] : vector<16x8xf32> -> vector<8x16xf32>
    %cst_25 = arith.constant dense<0.000000e+00> : vector<16x16xf32>
    %58 = tpu.matmul %54, %57, %cst_25 {dimension_numbers = #tpu.dot_dimension_numbers<[1], [0], [0], [1], [0, 0, 1, 1], [], []>} : vector<16x8xf32>, vector<8x16xf32>, vector<16x16xf32> -> vector<16x16xf32>
    %cst_26 = arith.constant 0.353553385 : f32
    %59 = vector.broadcast %cst_26 : f32 to vector<16x16xf32>
    %60 = arith.mulf %58, %59 : vector<16x16xf32>
    %61 = arith.addf %60, %1 : vector<16x16xf32>
    %cst_27 = arith.constant dense<0xFF800000> : vector<16xf32>
    %62 = vector.multi_reduction <maximumf>, %61, %cst_27 [1] : vector<16x16xf32> to vector<16xf32>
    %63 = vector.shape_cast %62 : vector<16xf32> to vector<16x1xf32>
    %64 = vector.broadcast %63 : vector<16x1xf32> to vector<16x16xf32>
    %65 = arith.subf %61, %64 : vector<16x16xf32>
    %66 = math.exp %65 : vector<16x16xf32>
    %cst_28 = arith.constant dense<0.000000e+00> : vector<16xf32>
    %67 = vector.multi_reduction <add>, %66, %cst_28 [1] : vector<16x16xf32> to vector<16xf32>
    %68 = vector.shape_cast %67 : vector<16xf32> to vector<16x1xf32>
    %69 = tpu.reciprocal %68 {approx = true} : vector<16x1xf32> -> vector<16x1xf32>
    %70 = vector.broadcast %69 : vector<16x1xf32> to vector<16x16xf32>
    %71 = arith.mulf %66, %70 : vector<16x16xf32>
    %cst_29 = arith.constant dense<0.000000e+00> : vector<16x8xf32>
    %72 = tpu.matmul %71, %56, %cst_29 {dimension_numbers = #tpu.dot_dimension_numbers<[1], [0], [0], [1], [0, 0, 1, 1], [], []>} : vector<16x16xf32>, vector<16x8xf32>, vector<16x8xf32> -> vector<16x8xf32>
    %73 = vector.extract_strided_slice %34 {offsets = [0, 16], sizes = [16, 8], strides = [1, 1]} : vector<16x96xf32> to vector<16x8xf32>
    %74 = vector.extract_strided_slice %34 {offsets = [0, 48], sizes = [16, 8], strides = [1, 1]} : vector<16x96xf32> to vector<16x8xf32>
    %75 = vector.extract_strided_slice %34 {offsets = [0, 80], sizes = [16, 8], strides = [1, 1]} : vector<16x96xf32> to vector<16x8xf32>
    %76 = tpu.transpose %74, [1, 0] : vector<16x8xf32> -> vector<8x16xf32>
    %cst_30 = arith.constant dense<0.000000e+00> : vector<16x16xf32>
    %77 = tpu.matmul %73, %76, %cst_30 {dimension_numbers = #tpu.dot_dimension_numbers<[1], [0], [0], [1], [0, 0, 1, 1], [], []>} : vector<16x8xf32>, vector<8x16xf32>, vector<16x16xf32> -> vector<16x16xf32>
    %cst_31 = arith.constant 0.353553385 : f32
    %78 = vector.broadcast %cst_31 : f32 to vector<16x16xf32>
    %79 = arith.mulf %77, %78 : vector<16x16xf32>
    %80 = arith.addf %79, %1 : vector<16x16xf32>
    %cst_32 = arith.constant dense<0xFF800000> : vector<16xf32>
    %81 = vector.multi_reduction <maximumf>, %80, %cst_32 [1] : vector<16x16xf32> to vector<16xf32>
    %82 = vector.shape_cast %81 : vector<16xf32> to vector<16x1xf32>
    %83 = vector.broadcast %82 : vector<16x1xf32> to vector<16x16xf32>
    %84 = arith.subf %80, %83 : vector<16x16xf32>
    %85 = math.exp %84 : vector<16x16xf32>
    %cst_33 = arith.constant dense<0.000000e+00> : vector<16xf32>
    %86 = vector.multi_reduction <add>, %85, %cst_33 [1] : vector<16x16xf32> to vector<16xf32>
    %87 = vector.shape_cast %86 : vector<16xf32> to vector<16x1xf32>
    %88 = tpu.reciprocal %87 {approx = true} : vector<16x1xf32> -> vector<16x1xf32>
    %89 = vector.broadcast %88 : vector<16x1xf32> to vector<16x16xf32>
    %90 = arith.mulf %85, %89 : vector<16x16xf32>
    %cst_34 = arith.constant dense<0.000000e+00> : vector<16x8xf32>
    %91 = tpu.matmul %90, %75, %cst_34 {dimension_numbers = #tpu.dot_dimension_numbers<[1], [0], [0], [1], [0, 0, 1, 1], [], []>} : vector<16x16xf32>, vector<16x8xf32>, vector<16x8xf32> -> vector<16x8xf32>
    %92 = vector.extract_strided_slice %34 {offsets = [0, 24], sizes = [16, 8], strides = [1, 1]} : vector<16x96xf32> to vector<16x8xf32>
    %93 = vector.extract_strided_slice %34 {offsets = [0, 56], sizes = [16, 8], strides = [1, 1]} : vector<16x96xf32> to vector<16x8xf32>
    %94 = vector.extract_strided_slice %34 {offsets = [0, 88], sizes = [16, 8], strides = [1, 1]} : vector<16x96xf32> to vector<16x8xf32>
    %95 = tpu.transpose %93, [1, 0] : vector<16x8xf32> -> vector<8x16xf32>
    %cst_35 = arith.constant dense<0.000000e+00> : vector<16x16xf32>
    %96 = tpu.matmul %92, %95, %cst_35 {dimension_numbers = #tpu.dot_dimension_numbers<[1], [0], [0], [1], [0, 0, 1, 1], [], []>} : vector<16x8xf32>, vector<8x16xf32>, vector<16x16xf32> -> vector<16x16xf32>
    %cst_36 = arith.constant 0.353553385 : f32
    %97 = vector.broadcast %cst_36 : f32 to vector<16x16xf32>
    %98 = arith.mulf %96, %97 : vector<16x16xf32>
    %99 = arith.addf %98, %1 : vector<16x16xf32>
    %cst_37 = arith.constant dense<0xFF800000> : vector<16xf32>
    %100 = vector.multi_reduction <maximumf>, %99, %cst_37 [1] : vector<16x16xf32> to vector<16xf32>
    %101 = vector.shape_cast %100 : vector<16xf32> to vector<16x1xf32>
    %102 = vector.broadcast %101 : vector<16x1xf32> to vector<16x16xf32>
    %103 = arith.subf %99, %102 : vector<16x16xf32>
    %104 = math.exp %103 : vector<16x16xf32>
    %cst_38 = arith.constant dense<0.000000e+00> : vector<16xf32>
    %105 = vector.multi_reduction <add>, %104, %cst_38 [1] : vector<16x16xf32> to vector<16xf32>
    %106 = vector.shape_cast %105 : vector<16xf32> to vector<16x1xf32>
    %107 = tpu.reciprocal %106 {approx = true} : vector<16x1xf32> -> vector<16x1xf32>
    %108 = vector.broadcast %107 : vector<16x1xf32> to vector<16x16xf32>
    %109 = arith.mulf %104, %108 : vector<16x16xf32>
    %cst_39 = arith.constant dense<0.000000e+00> : vector<16x8xf32>
    %110 = tpu.matmul %109, %94, %cst_39 {dimension_numbers = #tpu.dot_dimension_numbers<[1], [0], [0], [1], [0, 0, 1, 1], [], []>} : vector<16x16xf32>, vector<16x8xf32>, vector<16x8xf32> -> vector<16x8xf32>
    %111 = tpu.concatenate %53, %72, %91, %110 in 1 : vector<16x8xf32>, vector<16x8xf32>, vector<16x8xf32>, vector<16x8xf32> -> vector<16x32xf32>
    %c0_40 = arith.constant 0 : index
    %c0_41 = arith.constant 0 : index
    %c0_42 = arith.constant 0 : index
    %112 = vector.load %arg7[%c0_40, %c0_41, %c0_42] : memref<2x32x32xf32, #tpu.memory_space<vmem>>, vector<1x32x32xf32>
    %113 = vector.shape_cast %112 : vector<1x32x32xf32> to vector<32x32xf32>
    %cst_43 = arith.constant dense<0.000000e+00> : vector<16x32xf32>
    %114 = tpu.matmul %111, %113, %cst_43 {dimension_numbers = #tpu.dot_dimension_numbers<[1], [0], [0], [1], [0, 0, 1, 1], [], []>} : vector<16x32xf32>, vector<32x32xf32>, vector<16x32xf32> -> vector<16x32xf32>
    %c0_44 = arith.constant 0 : index
    %c0_45 = arith.constant 0 : index
    %c0_46 = arith.constant 0 : index
    %115 = vector.load %arg8[%c0_44, %c0_45, %c0_46] : memref<2x1x32xf32, #tpu.memory_space<vmem>>, vector<1x1x32xf32>
    %116 = vector.shape_cast %115 : vector<1x1x32xf32> to vector<1x32xf32>
    %117 = vector.broadcast %116 : vector<1x32xf32> to vector<16x32xf32>
    %118 = arith.addf %114, %117 : vector<16x32xf32>
    %119 = arith.addf %0, %118 : vector<16x32xf32>
    %c0_47 = arith.constant 0 : index
    %c0_48 = arith.constant 0 : index
    %c0_49 = arith.constant 0 : index
    %120 = vector.load %arg9[%c0_47, %c0_48, %c0_49] : memref<2x1x32xf32, #tpu.memory_space<vmem>>, vector<1x1x32xf32>
    %121 = vector.shape_cast %120 : vector<1x1x32xf32> to vector<1x32xf32>
    %c0_50 = arith.constant 0 : index
    %c0_51 = arith.constant 0 : index
    %c0_52 = arith.constant 0 : index
    %122 = vector.load %arg10[%c0_50, %c0_51, %c0_52] : memref<2x1x32xf32, #tpu.memory_space<vmem>>, vector<1x1x32xf32>
    %123 = vector.shape_cast %122 : vector<1x1x32xf32> to vector<1x32xf32>
    %cst_53 = arith.constant dense<0.000000e+00> : vector<16xf32>
    %124 = vector.multi_reduction <add>, %119, %cst_53 [1] : vector<16x32xf32> to vector<16xf32>
    %125 = vector.shape_cast %124 : vector<16xf32> to vector<16x1xf32>
    %cst_54 = arith.constant 3.200000e+01 : f32
    %126 = vector.broadcast %cst_54 : f32 to vector<16x1xf32>
    %127 = arith.divf %125, %126 : vector<16x1xf32>
    %128 = vector.broadcast %127 : vector<16x1xf32> to vector<16x32xf32>
    %129 = arith.subf %119, %128 : vector<16x32xf32>
    %130 = arith.mulf %129, %129 : vector<16x32xf32>
    %cst_55 = arith.constant dense<0.000000e+00> : vector<16xf32>
    %131 = vector.multi_reduction <add>, %130, %cst_55 [1] : vector<16x32xf32> to vector<16xf32>
    %132 = vector.shape_cast %131 : vector<16xf32> to vector<16x1xf32>
    %cst_56 = arith.constant 3.200000e+01 : f32
    %133 = vector.broadcast %cst_56 : f32 to vector<16x1xf32>
    %134 = arith.divf %132, %133 : vector<16x1xf32>
    %135 = vector.broadcast %127 : vector<16x1xf32> to vector<16x32xf32>
    %136 = arith.subf %119, %135 : vector<16x32xf32>
    %cst_57 = arith.constant 9.99999997E-7 : f32
    %137 = vector.broadcast %cst_57 : f32 to vector<16x1xf32>
    %138 = arith.addf %134, %137 : vector<16x1xf32>
    %139 = math.rsqrt %138 : vector<16x1xf32>
    %140 = vector.broadcast %139 : vector<16x1xf32> to vector<16x32xf32>
    %141 = arith.mulf %136, %140 : vector<16x32xf32>
    %142 = vector.broadcast %121 : vector<1x32xf32> to vector<16x32xf32>
    %143 = arith.mulf %141, %142 : vector<16x32xf32>
    %144 = vector.broadcast %123 : vector<1x32xf32> to vector<16x32xf32>
    %145 = arith.addf %143, %144 : vector<16x32xf32>
    %c0_58 = arith.constant 0 : index
    %c0_59 = arith.constant 0 : index
    %c0_60 = arith.constant 0 : index
    %146 = vector.load %arg11[%c0_58, %c0_59, %c0_60] : memref<2x32x64xf32, #tpu.memory_space<vmem>>, vector<1x32x64xf32>
    %147 = vector.shape_cast %146 : vector<1x32x64xf32> to vector<32x64xf32>
    %cst_61 = arith.constant dense<0.000000e+00> : vector<16x64xf32>
    %148 = tpu.matmul %145, %147, %cst_61 {dimension_numbers = #tpu.dot_dimension_numbers<[1], [0], [0], [1], [0, 0, 1, 1], [], []>} : vector<16x32xf32>, vector<32x64xf32>, vector<16x64xf32> -> vector<16x64xf32>
    %c0_62 = arith.constant 0 : index
    %c0_63 = arith.constant 0 : index
    %c0_64 = arith.constant 0 : index
    %149 = vector.load %arg12[%c0_62, %c0_63, %c0_64] : memref<2x1x64xf32, #tpu.memory_space<vmem>>, vector<1x1x64xf32>
    %150 = vector.shape_cast %149 : vector<1x1x64xf32> to vector<1x64xf32>
    %151 = vector.broadcast %150 : vector<1x64xf32> to vector<16x64xf32>
    %152 = arith.addf %148, %151 : vector<16x64xf32>
    %cst_65 = arith.constant 0.000000e+00 : f32
    %153 = vector.broadcast %cst_65 : f32 to vector<16x64xf32>
    %154 = arith.maximumf %152, %153 : vector<16x64xf32>
    %c0_66 = arith.constant 0 : index
    %c0_67 = arith.constant 0 : index
    %c0_68 = arith.constant 0 : index
    %155 = vector.load %arg13[%c0_66, %c0_67, %c0_68] : memref<2x64x32xf32, #tpu.memory_space<vmem>>, vector<1x64x32xf32>
    %156 = vector.shape_cast %155 : vector<1x64x32xf32> to vector<64x32xf32>
    %cst_69 = arith.constant dense<0.000000e+00> : vector<16x32xf32>
    %157 = tpu.matmul %154, %156, %cst_69 {dimension_numbers = #tpu.dot_dimension_numbers<[1], [0], [0], [1], [0, 0, 1, 1], [], []>} : vector<16x64xf32>, vector<64x32xf32>, vector<16x32xf32> -> vector<16x32xf32>
    %c0_70 = arith.constant 0 : index
    %c0_71 = arith.constant 0 : index
    %c0_72 = arith.constant 0 : index
    %158 = vector.load %arg14[%c0_70, %c0_71, %c0_72] : memref<2x1x32xf32, #tpu.memory_space<vmem>>, vector<1x1x32xf32>
    %159 = vector.shape_cast %158 : vector<1x1x32xf32> to vector<1x32xf32>
    %160 = vector.broadcast %159 : vector<1x32xf32> to vector<16x32xf32>
    %161 = arith.addf %157, %160 : vector<16x32xf32>
    %162 = arith.addf %119, %161 : vector<16x32xf32>
    %c1 = arith.constant 1 : index
    %c0_73 = arith.constant 0 : index
    %c0_74 = arith.constant 0 : index
    %163 = vector.load %arg3[%c1, %c0_73, %c0_74] : memref<2x1x32xf32, #tpu.memory_space<vmem>>, vector<1x1x32xf32>
    %164 = vector.shape_cast %163 : vector<1x1x32xf32> to vector<1x32xf32>
    %c1_75 = arith.constant 1 : index
    %c0_76 = arith.constant 0 : index
    %c0_77 = arith.constant 0 : index
    %165 = vector.load %arg4[%c1_75, %c0_76, %c0_77] : memref<2x1x32xf32, #tpu.memory_space<vmem>>, vector<1x1x32xf32>
    %166 = vector.shape_cast %165 : vector<1x1x32xf32> to vector<1x32xf32>
    %cst_78 = arith.constant dense<0.000000e+00> : vector<16xf32>
    %167 = vector.multi_reduction <add>, %162, %cst_78 [1] : vector<16x32xf32> to vector<16xf32>
    %168 = vector.shape_cast %167 : vector<16xf32> to vector<16x1xf32>
    %cst_79 = arith.constant 3.200000e+01 : f32
    %169 = vector.broadcast %cst_79 : f32 to vector<16x1xf32>
    %170 = arith.divf %168, %169 : vector<16x1xf32>
    %171 = vector.broadcast %170 : vector<16x1xf32> to vector<16x32xf32>
    %172 = arith.subf %162, %171 : vector<16x32xf32>
    %173 = arith.mulf %172, %172 : vector<16x32xf32>
    %cst_80 = arith.constant dense<0.000000e+00> : vector<16xf32>
    %174 = vector.multi_reduction <add>, %173, %cst_80 [1] : vector<16x32xf32> to vector<16xf32>
    %175 = vector.shape_cast %174 : vector<16xf32> to vector<16x1xf32>
    %cst_81 = arith.constant 3.200000e+01 : f32
    %176 = vector.broadcast %cst_81 : f32 to vector<16x1xf32>
    %177 = arith.divf %175, %176 : vector<16x1xf32>
    %178 = vector.broadcast %170 : vector<16x1xf32> to vector<16x32xf32>
    %179 = arith.subf %162, %178 : vector<16x32xf32>
    %cst_82 = arith.constant 9.99999997E-7 : f32
    %180 = vector.broadcast %cst_82 : f32 to vector<16x1xf32>
    %181 = arith.addf %177, %180 : vector<16x1xf32>
    %182 = math.rsqrt %181 : vector<16x1xf32>
    %183 = vector.broadcast %182 : vector<16x1xf32> to vector<16x32xf32>
    %184 = arith.mulf %179, %183 : vector<16x32xf32>
    %185 = vector.broadcast %164 : vector<1x32xf32> to vector<16x32xf32>
    %186 = arith.mulf %184, %185 : vector<16x32xf32>
    %187 = vector.broadcast %166 : vector<1x32xf32> to vector<16x32xf32>
    %188 = arith.addf %186, %187 : vector<16x32xf32>
    %c1_83 = arith.constant 1 : index
    %c0_84 = arith.constant 0 : index
    %c0_85 = arith.constant 0 : index
    %189 = vector.load %arg5[%c1_83, %c0_84, %c0_85] : memref<2x32x96xf32, #tpu.memory_space<vmem>>, vector<1x32x96xf32>
    %190 = vector.shape_cast %189 : vector<1x32x96xf32> to vector<32x96xf32>
    %cst_86 = arith.constant dense<0.000000e+00> : vector<16x96xf32>
    %191 = tpu.matmul %188, %190, %cst_86 {dimension_numbers = #tpu.dot_dimension_numbers<[1], [0], [0], [1], [0, 0, 1, 1], [], []>} : vector<16x32xf32>, vector<32x96xf32>, vector<16x96xf32> -> vector<16x96xf32>
    %c1_87 = arith.constant 1 : index
    %c0_88 = arith.constant 0 : index
    %c0_89 = arith.constant 0 : index
    %192 = vector.load %arg6[%c1_87, %c0_88, %c0_89] : memref<2x1x96xf32, #tpu.memory_space<vmem>>, vector<1x1x96xf32>
    %193 = vector.shape_cast %192 : vector<1x1x96xf32> to vector<1x96xf32>
    %194 = vector.broadcast %193 : vector<1x96xf32> to vector<16x96xf32>
    %195 = arith.addf %191, %194 : vector<16x96xf32>
    %196 = vector.extract_strided_slice %195 {offsets = [0, 0], sizes = [16, 8], strides = [1, 1]} : vector<16x96xf32> to vector<16x8xf32>
    %197 = vector.extract_strided_slice %195 {offsets = [0, 32], sizes = [16, 8], strides = [1, 1]} : vector<16x96xf32> to vector<16x8xf32>
    %198 = vector.extract_strided_slice %195 {offsets = [0, 64], sizes = [16, 8], strides = [1, 1]} : vector<16x96xf32> to vector<16x8xf32>
    %199 = tpu.transpose %197, [1, 0] : vector<16x8xf32> -> vector<8x16xf32>
    %cst_90 = arith.constant dense<0.000000e+00> : vector<16x16xf32>
    %200 = tpu.matmul %196, %199, %cst_90 {dimension_numbers = #tpu.dot_dimension_numbers<[1], [0], [0], [1], [0, 0, 1, 1], [], []>} : vector<16x8xf32>, vector<8x16xf32>, vector<16x16xf32> -> vector<16x16xf32>
    %cst_91 = arith.constant 0.353553385 : f32
    %201 = vector.broadcast %cst_91 : f32 to vector<16x16xf32>
    %202 = arith.mulf %200, %201 : vector<16x16xf32>
    %203 = arith.addf %202, %1 : vector<16x16xf32>
    %cst_92 = arith.constant dense<0xFF800000> : vector<16xf32>
    %204 = vector.multi_reduction <maximumf>, %203, %cst_92 [1] : vector<16x16xf32> to vector<16xf32>
    %205 = vector.shape_cast %204 : vector<16xf32> to vector<16x1xf32>
    %206 = vector.broadcast %205 : vector<16x1xf32> to vector<16x16xf32>
    %207 = arith.subf %203, %206 : vector<16x16xf32>
    %208 = math.exp %207 : vector<16x16xf32>
    %cst_93 = arith.constant dense<0.000000e+00> : vector<16xf32>
    %209 = vector.multi_reduction <add>, %208, %cst_93 [1] : vector<16x16xf32> to vector<16xf32>
    %210 = vector.shape_cast %209 : vector<16xf32> to vector<16x1xf32>
    %211 = tpu.reciprocal %210 {approx = true} : vector<16x1xf32> -> vector<16x1xf32>
    %212 = vector.broadcast %211 : vector<16x1xf32> to vector<16x16xf32>
    %213 = arith.mulf %208, %212 : vector<16x16xf32>
    %cst_94 = arith.constant dense<0.000000e+00> : vector<16x8xf32>
    %214 = tpu.matmul %213, %198, %cst_94 {dimension_numbers = #tpu.dot_dimension_numbers<[1], [0], [0], [1], [0, 0, 1, 1], [], []>} : vector<16x16xf32>, vector<16x8xf32>, vector<16x8xf32> -> vector<16x8xf32>
    %215 = vector.extract_strided_slice %195 {offsets = [0, 8], sizes = [16, 8], strides = [1, 1]} : vector<16x96xf32> to vector<16x8xf32>
    %216 = vector.extract_strided_slice %195 {offsets = [0, 40], sizes = [16, 8], strides = [1, 1]} : vector<16x96xf32> to vector<16x8xf32>
    %217 = vector.extract_strided_slice %195 {offsets = [0, 72], sizes = [16, 8], strides = [1, 1]} : vector<16x96xf32> to vector<16x8xf32>
    %218 = tpu.transpose %216, [1, 0] : vector<16x8xf32> -> vector<8x16xf32>
    %cst_95 = arith.constant dense<0.000000e+00> : vector<16x16xf32>
    %219 = tpu.matmul %215, %218, %cst_95 {dimension_numbers = #tpu.dot_dimension_numbers<[1], [0], [0], [1], [0, 0, 1, 1], [], []>} : vector<16x8xf32>, vector<8x16xf32>, vector<16x16xf32> -> vector<16x16xf32>
    %cst_96 = arith.constant 0.353553385 : f32
    %220 = vector.broadcast %cst_96 : f32 to vector<16x16xf32>
    %221 = arith.mulf %219, %220 : vector<16x16xf32>
    %222 = arith.addf %221, %1 : vector<16x16xf32>
    %cst_97 = arith.constant dense<0xFF800000> : vector<16xf32>
    %223 = vector.multi_reduction <maximumf>, %222, %cst_97 [1] : vector<16x16xf32> to vector<16xf32>
    %224 = vector.shape_cast %223 : vector<16xf32> to vector<16x1xf32>
    %225 = vector.broadcast %224 : vector<16x1xf32> to vector<16x16xf32>
    %226 = arith.subf %222, %225 : vector<16x16xf32>
    %227 = math.exp %226 : vector<16x16xf32>
    %cst_98 = arith.constant dense<0.000000e+00> : vector<16xf32>
    %228 = vector.multi_reduction <add>, %227, %cst_98 [1] : vector<16x16xf32> to vector<16xf32>
    %229 = vector.shape_cast %228 : vector<16xf32> to vector<16x1xf32>
    %230 = tpu.reciprocal %229 {approx = true} : vector<16x1xf32> -> vector<16x1xf32>
    %231 = vector.broadcast %230 : vector<16x1xf32> to vector<16x16xf32>
    %232 = arith.mulf %227, %231 : vector<16x16xf32>
    %cst_99 = arith.constant dense<0.000000e+00> : vector<16x8xf32>
    %233 = tpu.matmul %232, %217, %cst_99 {dimension_numbers = #tpu.dot_dimension_numbers<[1], [0], [0], [1], [0, 0, 1, 1], [], []>} : vector<16x16xf32>, vector<16x8xf32>, vector<16x8xf32> -> vector<16x8xf32>
    %234 = vector.extract_strided_slice %195 {offsets = [0, 16], sizes = [16, 8], strides = [1, 1]} : vector<16x96xf32> to vector<16x8xf32>
    %235 = vector.extract_strided_slice %195 {offsets = [0, 48], sizes = [16, 8], strides = [1, 1]} : vector<16x96xf32> to vector<16x8xf32>
    %236 = vector.extract_strided_slice %195 {offsets = [0, 80], sizes = [16, 8], strides = [1, 1]} : vector<16x96xf32> to vector<16x8xf32>
    %237 = tpu.transpose %235, [1, 0] : vector<16x8xf32> -> vector<8x16xf32>
    %cst_100 = arith.constant dense<0.000000e+00> : vector<16x16xf32>
    %238 = tpu.matmul %234, %237, %cst_100 {dimension_numbers = #tpu.dot_dimension_numbers<[1], [0], [0], [1], [0, 0, 1, 1], [], []>} : vector<16x8xf32>, vector<8x16xf32>, vector<16x16xf32> -> vector<16x16xf32>
    %cst_101 = arith.constant 0.353553385 : f32
    %239 = vector.broadcast %cst_101 : f32 to vector<16x16xf32>
    %240 = arith.mulf %238, %239 : vector<16x16xf32>
    %241 = arith.addf %240, %1 : vector<16x16xf32>
    %cst_102 = arith.constant dense<0xFF800000> : vector<16xf32>
    %242 = vector.multi_reduction <maximumf>, %241, %cst_102 [1] : vector<16x16xf32> to vector<16xf32>
    %243 = vector.shape_cast %242 : vector<16xf32> to vector<16x1xf32>
    %244 = vector.broadcast %243 : vector<16x1xf32> to vector<16x16xf32>
    %245 = arith.subf %241, %244 : vector<16x16xf32>
    %246 = math.exp %245 : vector<16x16xf32>
    %cst_103 = arith.constant dense<0.000000e+00> : vector<16xf32>
    %247 = vector.multi_reduction <add>, %246, %cst_103 [1] : vector<16x16xf32> to vector<16xf32>
    %248 = vector.shape_cast %247 : vector<16xf32> to vector<16x1xf32>
    %249 = tpu.reciprocal %248 {approx = true} : vector<16x1xf32> -> vector<16x1xf32>
    %250 = vector.broadcast %249 : vector<16x1xf32> to vector<16x16xf32>
    %251 = arith.mulf %246, %250 : vector<16x16xf32>
    %cst_104 = arith.constant dense<0.000000e+00> : vector<16x8xf32>
    %252 = tpu.matmul %251, %236, %cst_104 {dimension_numbers = #tpu.dot_dimension_numbers<[1], [0], [0], [1], [0, 0, 1, 1], [], []>} : vector<16x16xf32>, vector<16x8xf32>, vector<16x8xf32> -> vector<16x8xf32>
    %253 = vector.extract_strided_slice %195 {offsets = [0, 24], sizes = [16, 8], strides = [1, 1]} : vector<16x96xf32> to vector<16x8xf32>
    %254 = vector.extract_strided_slice %195 {offsets = [0, 56], sizes = [16, 8], strides = [1, 1]} : vector<16x96xf32> to vector<16x8xf32>
    %255 = vector.extract_strided_slice %195 {offsets = [0, 88], sizes = [16, 8], strides = [1, 1]} : vector<16x96xf32> to vector<16x8xf32>
    %256 = tpu.transpose %254, [1, 0] : vector<16x8xf32> -> vector<8x16xf32>
    %cst_105 = arith.constant dense<0.000000e+00> : vector<16x16xf32>
    %257 = tpu.matmul %253, %256, %cst_105 {dimension_numbers = #tpu.dot_dimension_numbers<[1], [0], [0], [1], [0, 0, 1, 1], [], []>} : vector<16x8xf32>, vector<8x16xf32>, vector<16x16xf32> -> vector<16x16xf32>
    %cst_106 = arith.constant 0.353553385 : f32
    %258 = vector.broadcast %cst_106 : f32 to vector<16x16xf32>
    %259 = arith.mulf %257, %258 : vector<16x16xf32>
    %260 = arith.addf %259, %1 : vector<16x16xf32>
    %cst_107 = arith.constant dense<0xFF800000> : vector<16xf32>
    %261 = vector.multi_reduction <maximumf>, %260, %cst_107 [1] : vector<16x16xf32> to vector<16xf32>
    %262 = vector.shape_cast %261 : vector<16xf32> to vector<16x1xf32>
    %263 = vector.broadcast %262 : vector<16x1xf32> to vector<16x16xf32>
    %264 = arith.subf %260, %263 : vector<16x16xf32>
    %265 = math.exp %264 : vector<16x16xf32>
    %cst_108 = arith.constant dense<0.000000e+00> : vector<16xf32>
    %266 = vector.multi_reduction <add>, %265, %cst_108 [1] : vector<16x16xf32> to vector<16xf32>
    %267 = vector.shape_cast %266 : vector<16xf32> to vector<16x1xf32>
    %268 = tpu.reciprocal %267 {approx = true} : vector<16x1xf32> -> vector<16x1xf32>
    %269 = vector.broadcast %268 : vector<16x1xf32> to vector<16x16xf32>
    %270 = arith.mulf %265, %269 : vector<16x16xf32>
    %cst_109 = arith.constant dense<0.000000e+00> : vector<16x8xf32>
    %271 = tpu.matmul %270, %255, %cst_109 {dimension_numbers = #tpu.dot_dimension_numbers<[1], [0], [0], [1], [0, 0, 1, 1], [], []>} : vector<16x16xf32>, vector<16x8xf32>, vector<16x8xf32> -> vector<16x8xf32>
    %272 = tpu.concatenate %214, %233, %252, %271 in 1 : vector<16x8xf32>, vector<16x8xf32>, vector<16x8xf32>, vector<16x8xf32> -> vector<16x32xf32>
    %c1_110 = arith.constant 1 : index
    %c0_111 = arith.constant 0 : index
    %c0_112 = arith.constant 0 : index
    %273 = vector.load %arg7[%c1_110, %c0_111, %c0_112] : memref<2x32x32xf32, #tpu.memory_space<vmem>>, vector<1x32x32xf32>
    %274 = vector.shape_cast %273 : vector<1x32x32xf32> to vector<32x32xf32>
    %cst_113 = arith.constant dense<0.000000e+00> : vector<16x32xf32>
    %275 = tpu.matmul %272, %274, %cst_113 {dimension_numbers = #tpu.dot_dimension_numbers<[1], [0], [0], [1], [0, 0, 1, 1], [], []>} : vector<16x32xf32>, vector<32x32xf32>, vector<16x32xf32> -> vector<16x32xf32>
    %c1_114 = arith.constant 1 : index
    %c0_115 = arith.constant 0 : index
    %c0_116 = arith.constant 0 : index
    %276 = vector.load %arg8[%c1_114, %c0_115, %c0_116] : memref<2x1x32xf32, #tpu.memory_space<vmem>>, vector<1x1x32xf32>
    %277 = vector.shape_cast %276 : vector<1x1x32xf32> to vector<1x32xf32>
    %278 = vector.broadcast %277 : vector<1x32xf32> to vector<16x32xf32>
    %279 = arith.addf %275, %278 : vector<16x32xf32>
    %280 = arith.addf %162, %279 : vector<16x32xf32>
    %c1_117 = arith.constant 1 : index
    %c0_118 = arith.constant 0 : index
    %c0_119 = arith.constant 0 : index
    %281 = vector.load %arg9[%c1_117, %c0_118, %c0_119] : memref<2x1x32xf32, #tpu.memory_space<vmem>>, vector<1x1x32xf32>
    %282 = vector.shape_cast %281 : vector<1x1x32xf32> to vector<1x32xf32>
    %c1_120 = arith.constant 1 : index
    %c0_121 = arith.constant 0 : index
    %c0_122 = arith.constant 0 : index
    %283 = vector.load %arg10[%c1_120, %c0_121, %c0_122] : memref<2x1x32xf32, #tpu.memory_space<vmem>>, vector<1x1x32xf32>
    %284 = vector.shape_cast %283 : vector<1x1x32xf32> to vector<1x32xf32>
    %cst_123 = arith.constant dense<0.000000e+00> : vector<16xf32>
    %285 = vector.multi_reduction <add>, %280, %cst_123 [1] : vector<16x32xf32> to vector<16xf32>
    %286 = vector.shape_cast %285 : vector<16xf32> to vector<16x1xf32>
    %cst_124 = arith.constant 3.200000e+01 : f32
    %287 = vector.broadcast %cst_124 : f32 to vector<16x1xf32>
    %288 = arith.divf %286, %287 : vector<16x1xf32>
    %289 = vector.broadcast %288 : vector<16x1xf32> to vector<16x32xf32>
    %290 = arith.subf %280, %289 : vector<16x32xf32>
    %291 = arith.mulf %290, %290 : vector<16x32xf32>
    %cst_125 = arith.constant dense<0.000000e+00> : vector<16xf32>
    %292 = vector.multi_reduction <add>, %291, %cst_125 [1] : vector<16x32xf32> to vector<16xf32>
    %293 = vector.shape_cast %292 : vector<16xf32> to vector<16x1xf32>
    %cst_126 = arith.constant 3.200000e+01 : f32
    %294 = vector.broadcast %cst_126 : f32 to vector<16x1xf32>
    %295 = arith.divf %293, %294 : vector<16x1xf32>
    %296 = vector.broadcast %288 : vector<16x1xf32> to vector<16x32xf32>
    %297 = arith.subf %280, %296 : vector<16x32xf32>
    %cst_127 = arith.constant 9.99999997E-7 : f32
    %298 = vector.broadcast %cst_127 : f32 to vector<16x1xf32>
    %299 = arith.addf %295, %298 : vector<16x1xf32>
    %300 = math.rsqrt %299 : vector<16x1xf32>
    %301 = vector.broadcast %300 : vector<16x1xf32> to vector<16x32xf32>
    %302 = arith.mulf %297, %301 : vector<16x32xf32>
    %303 = vector.broadcast %282 : vector<1x32xf32> to vector<16x32xf32>
    %304 = arith.mulf %302, %303 : vector<16x32xf32>
    %305 = vector.broadcast %284 : vector<1x32xf32> to vector<16x32xf32>
    %306 = arith.addf %304, %305 : vector<16x32xf32>
    %c1_128 = arith.constant 1 : index
    %c0_129 = arith.constant 0 : index
    %c0_130 = arith.constant 0 : index
    %307 = vector.load %arg11[%c1_128, %c0_129, %c0_130] : memref<2x32x64xf32, #tpu.memory_space<vmem>>, vector<1x32x64xf32>
    %308 = vector.shape_cast %307 : vector<1x32x64xf32> to vector<32x64xf32>
    %cst_131 = arith.constant dense<0.000000e+00> : vector<16x64xf32>
    %309 = tpu.matmul %306, %308, %cst_131 {dimension_numbers = #tpu.dot_dimension_numbers<[1], [0], [0], [1], [0, 0, 1, 1], [], []>} : vector<16x32xf32>, vector<32x64xf32>, vector<16x64xf32> -> vector<16x64xf32>
    %c1_132 = arith.constant 1 : index
    %c0_133 = arith.constant 0 : index
    %c0_134 = arith.constant 0 : index
    %310 = vector.load %arg12[%c1_132, %c0_133, %c0_134] : memref<2x1x64xf32, #tpu.memory_space<vmem>>, vector<1x1x64xf32>
    %311 = vector.shape_cast %310 : vector<1x1x64xf32> to vector<1x64xf32>
    %312 = vector.broadcast %311 : vector<1x64xf32> to vector<16x64xf32>
    %313 = arith.addf %309, %312 : vector<16x64xf32>
    %cst_135 = arith.constant 0.000000e+00 : f32
    %314 = vector.broadcast %cst_135 : f32 to vector<16x64xf32>
    %315 = arith.maximumf %313, %314 : vector<16x64xf32>
    %c1_136 = arith.constant 1 : index
    %c0_137 = arith.constant 0 : index
    %c0_138 = arith.constant 0 : index
    %316 = vector.load %arg13[%c1_136, %c0_137, %c0_138] : memref<2x64x32xf32, #tpu.memory_space<vmem>>, vector<1x64x32xf32>
    %317 = vector.shape_cast %316 : vector<1x64x32xf32> to vector<64x32xf32>
    %cst_139 = arith.constant dense<0.000000e+00> : vector<16x32xf32>
    %318 = tpu.matmul %315, %317, %cst_139 {dimension_numbers = #tpu.dot_dimension_numbers<[1], [0], [0], [1], [0, 0, 1, 1], [], []>} : vector<16x64xf32>, vector<64x32xf32>, vector<16x32xf32> -> vector<16x32xf32>
    %c1_140 = arith.constant 1 : index
    %c0_141 = arith.constant 0 : index
    %c0_142 = arith.constant 0 : index
    %319 = vector.load %arg14[%c1_140, %c0_141, %c0_142] : memref<2x1x32xf32, #tpu.memory_space<vmem>>, vector<1x1x32xf32>
    %320 = vector.shape_cast %319 : vector<1x1x32xf32> to vector<1x32xf32>
    %321 = vector.broadcast %320 : vector<1x32xf32> to vector<16x32xf32>
    %322 = arith.addf %318, %321 : vector<16x32xf32>
    %323 = arith.addf %280, %322 : vector<16x32xf32>
    %c0_143 = arith.constant 0 : index
    %c0_144 = arith.constant 0 : index
    %324 = vector.load %arg15[%c0_143, %c0_144] : memref<1x32xf32, #tpu.memory_space<vmem>>, vector<1x32xf32>
    %c0_145 = arith.constant 0 : index
    %c0_146 = arith.constant 0 : index
    %325 = vector.load %arg16[%c0_145, %c0_146] : memref<1x32xf32, #tpu.memory_space<vmem>>, vector<1x32xf32>
    %cst_147 = arith.constant dense<0.000000e+00> : vector<16xf32>
    %326 = vector.multi_reduction <add>, %323, %cst_147 [1] : vector<16x32xf32> to vector<16xf32>
    %327 = vector.shape_cast %326 : vector<16xf32> to vector<16x1xf32>
    %cst_148 = arith.constant 3.200000e+01 : f32
    %328 = vector.broadcast %cst_148 : f32 to vector<16x1xf32>
    %329 = arith.divf %327, %328 : vector<16x1xf32>
    %330 = vector.broadcast %329 : vector<16x1xf32> to vector<16x32xf32>
    %331 = arith.subf %323, %330 : vector<16x32xf32>
    %332 = arith.mulf %331, %331 : vector<16x32xf32>
    %cst_149 = arith.constant dense<0.000000e+00> : vector<16xf32>
    %333 = vector.multi_reduction <add>, %332, %cst_149 [1] : vector<16x32xf32> to vector<16xf32>
    %334 = vector.shape_cast %333 : vector<16xf32> to vector<16x1xf32>
    %cst_150 = arith.constant 3.200000e+01 : f32
    %335 = vector.broadcast %cst_150 : f32 to vector<16x1xf32>
    %336 = arith.divf %334, %335 : vector<16x1xf32>
    %337 = vector.broadcast %329 : vector<16x1xf32> to vector<16x32xf32>
    %338 = arith.subf %323, %337 : vector<16x32xf32>
    %cst_151 = arith.constant 9.99999997E-7 : f32
    %339 = vector.broadcast %cst_151 : f32 to vector<16x1xf32>
    %340 = arith.addf %336, %339 : vector<16x1xf32>
    %341 = math.rsqrt %340 : vector<16x1xf32>
    %342 = vector.broadcast %341 : vector<16x1xf32> to vector<16x32xf32>
    %343 = arith.mulf %338, %342 : vector<16x32xf32>
    %344 = vector.broadcast %324 : vector<1x32xf32> to vector<16x32xf32>
    %345 = arith.mulf %343, %344 : vector<16x32xf32>
    %346 = vector.broadcast %325 : vector<1x32xf32> to vector<16x32xf32>
    %347 = arith.addf %345, %346 : vector<16x32xf32>
    %c0_152 = arith.constant 0 : index
    %c0_153 = arith.constant 0 : index
    %348 = vector.load %arg17[%c0_152, %c0_153] : memref<16x32xf32, #tpu.memory_space<vmem>>, vector<16x32xf32>
    tpu.vector_store %arg17[%c0_152, %c0_153], %347 {strides = array<i32>} : memref<16x32xf32, #tpu.memory_space<vmem>>, vector<16x32xf32>,
    return
  }
  func.func @transform_0(%arg0: i32) -> (i32, i32) {
    %c0_i32 = arith.constant 0 : i32
    %c0_i32_0 = arith.constant 0 : i32
    %c0_i32_1 = arith.constant 0 : i32
    return %c0_i32, %c0_i32_0 : i32, i32
  }
  func.func @transform_1(%arg0: i32) -> (i32, i32) {
    %c0_i32 = arith.constant 0 : i32
    %c0_i32_0 = arith.constant 0 : i32
    %c0_i32_1 = arith.constant 0 : i32
    return %c0_i32, %c0_i32_0 : i32, i32
  }
  func.func @transform_2(%arg0: i32) -> (i32, i32, i32) {
    %c0_i32 = arith.constant 0 : i32
    %c0_i32_0 = arith.constant 0 : i32
    %c0_i32_1 = arith.constant 0 : i32
    %c0_i32_2 = arith.constant 0 : i32
    return %c0_i32, %c0_i32_0, %c0_i32_1 : i32, i32, i32
  }
  func.func @transform_3(%arg0: i32) -> (i32, i32, i32) {
    %c0_i32 = arith.constant 0 : i32
    %c0_i32_0 = arith.constant 0 : i32
    %c0_i32_1 = arith.constant 0 : i32
    %c0_i32_2 = arith.constant 0 : i32
    return %c0_i32, %c0_i32_0, %c0_i32_1 : i32, i32, i32
  }
  func.func @transform_4(%arg0: i32) -> (i32, i32, i32) {
    %c0_i32 = arith.constant 0 : i32
    %c0_i32_0 = arith.constant 0 : i32
    %c0_i32_1 = arith.constant 0 : i32
    %c0_i32_2 = arith.constant 0 : i32
    return %c0_i32, %c0_i32_0, %c0_i32_1 : i32, i32, i32
  }
  func.func @transform_5(%arg0: i32) -> (i32, i32, i32) {
    %c0_i32 = arith.constant 0 : i32
    %c0_i32_0 = arith.constant 0 : i32
    %c0_i32_1 = arith.constant 0 : i32
    %c0_i32_2 = arith.constant 0 : i32
    return %c0_i32, %c0_i32_0, %c0_i32_1 : i32, i32, i32
  }
  func.func @transform_6(%arg0: i32) -> (i32, i32, i32) {
    %c0_i32 = arith.constant 0 : i32
    %c0_i32_0 = arith.constant 0 : i32
    %c0_i32_1 = arith.constant 0 : i32
    %c0_i32_2 = arith.constant 0 : i32
    return %c0_i32, %c0_i32_0, %c0_i32_1 : i32, i32, i32
  }
  func.func @transform_7(%arg0: i32) -> (i32, i32, i32) {
    %c0_i32 = arith.constant 0 : i32
    %c0_i32_0 = arith.constant 0 : i32
    %c0_i32_1 = arith.constant 0 : i32
    %c0_i32_2 = arith.constant 0 : i32
    return %c0_i32, %c0_i32_0, %c0_i32_1 : i32, i32, i32
  }
  func.func @transform_8(%arg0: i32) -> (i32, i32, i32) {
    %c0_i32 = arith.constant 0 : i32
    %c0_i32_0 = arith.constant 0 : i32
    %c0_i32_1 = arith.constant 0 : i32
    %c0_i32_2 = arith.constant 0 : i32
    return %c0_i32, %c0_i32_0, %c0_i32_1 : i32, i32, i32
  }
  func.func @transform_9(%arg0: i32) -> (i32, i32, i32) {
    %c0_i32 = arith.constant 0 : i32
    %c0_i32_0 = arith.constant 0 : i32
    %c0_i32_1 = arith.constant 0 : i32
    %c0_i32_2 = arith.constant 0 : i32
    return %c0_i32, %c0_i32_0, %c0_i32_1 : i32, i32, i32
  }
  func.func @transform_10(%arg0: i32) -> (i32, i32, i32) {
    %c0_i32 = arith.constant 0 : i32
    %c0_i32_0 = arith.constant 0 : i32
    %c0_i32_1 = arith.constant 0 : i32
    %c0_i32_2 = arith.constant 0 : i32
    return %c0_i32, %c0_i32_0, %c0_i32_1 : i32, i32, i32
  }
  func.func @transform_11(%arg0: i32) -> (i32, i32, i32) {
    %c0_i32 = arith.constant 0 : i32
    %c0_i32_0 = arith.constant 0 : i32
    %c0_i32_1 = arith.constant 0 : i32
    %c0_i32_2 = arith.constant 0 : i32
    return %c0_i32, %c0_i32_0, %c0_i32_1 : i32, i32, i32
  }
  func.func @transform_12(%arg0: i32) -> (i32, i32, i32) {
    %c0_i32 = arith.constant 0 : i32
    %c0_i32_0 = arith.constant 0 : i32
    %c0_i32_1 = arith.constant 0 : i32
    %c0_i32_2 = arith.constant 0 : i32
    return %c0_i32, %c0_i32_0, %c0_i32_1 : i32, i32, i32
  }
  func.func @transform_13(%arg0: i32) -> (i32, i32, i32) {
    %c0_i32 = arith.constant 0 : i32
    %c0_i32_0 = arith.constant 0 : i32
    %c0_i32_1 = arith.constant 0 : i32
    %c0_i32_2 = arith.constant 0 : i32
    return %c0_i32, %c0_i32_0, %c0_i32_1 : i32, i32, i32
  }
  func.func @transform_14(%arg0: i32) -> (i32, i32) {
    %c0_i32 = arith.constant 0 : i32
    %c0_i32_0 = arith.constant 0 : i32
    %c0_i32_1 = arith.constant 0 : i32
    return %c0_i32, %c0_i32_0 : i32, i32
  }
  func.func @transform_15(%arg0: i32) -> (i32, i32) {
    %c0_i32 = arith.constant 0 : i32
    %c0_i32_0 = arith.constant 0 : i32
    %c0_i32_1 = arith.constant 0 : i32
    return %c0_i32, %c0_i32_0 : i32, i32
  }
  func.func @transform_16(%arg0: i32) -> (i32, i32) {
    %c0_i32 = arith.constant 0 : i32
    %c0_i32_0 = arith.constant 0 : i32
    %c0_i32_1 = arith.constant 0 : i32
    return %c0_i32, %c0_i32_0 : i32, i32
  }
}

</mosaic_0001>

<llo_original>
// kernel: tpu_custom_call.1
$region0: #{tpu_custom_call.1}
  #allocation0 [shape = 'u32[]', space=smem, size = 0x4, offset = 0x4, fixed_abs, tag = 'smem constant byte address 0x4 - core index']
  #allocation1 [shape = 'u32[144,128]{1,0:T(1,128)}', space=vmem, size = 0x12000, scoped, tag = 'internal scratch']
  %s0 = inlined_call_operand.hbm [shape: f32[16,32], index: 0, kind: input, shape index: {}]
  %s1 = inlined_call_operand.hbm [shape: f32[16,16], index: 1, kind: input, shape index: {}]
  %s2 = inlined_call_operand.vmem [shape: f32[2,1,32], index: 2, kind: input, shape index: {}]
  %s3 = inlined_call_operand.hbm [shape: f32[2,1,32], index: 3, kind: input, shape index: {}]
  %s4 = inlined_call_operand.vmem [shape: f32[2,32,96], index: 4, kind: input, shape index: {}]
  %s5 = inlined_call_operand.vmem [shape: f32[2,1,96], index: 5, kind: input, shape index: {}]
  %s6 = inlined_call_operand.vmem [shape: f32[2,32,32], index: 6, kind: input, shape index: {}]
  %s7 = inlined_call_operand.vmem [shape: f32[2,1,32], index: 7, kind: input, shape index: {}]
  %s8 = inlined_call_operand.vmem [shape: f32[2,1,32], index: 8, kind: input, shape index: {}]
  %s9 = inlined_call_operand.vmem [shape: f32[2,1,32], index: 9, kind: input, shape index: {}]
  %s10 = inlined_call_operand.vmem [shape: f32[2,32,64], index: 10, kind: input, shape index: {}]
  %s11 = inlined_call_operand.vmem [shape: f32[2,1,64], index: 11, kind: input, shape index: {}]
  %s12 = inlined_call_operand.vmem [shape: f32[2,64,32], index: 12, kind: input, shape index: {}]
  %s13 = inlined_call_operand.vmem [shape: f32[2,1,32], index: 13, kind: input, shape index: {}]
  %s14 = inlined_call_operand.vmem [shape: f32[1,32], index: 14, kind: input, shape index: {}]
  %s15 = inlined_call_operand.vmem [shape: f32[1,32], index: 15, kind: input, shape index: {}]
  %s16 = inlined_call_operand.hbm [shape: f32[16,32], index: 16, kind: output, shape index: {}]
  %s17 = sld [smem:[#allocation0]]
  $region86: #{tpu_custom_call.1} parent=0
    _
  %s19 = ssub.s32 1, %s17
  %s20 = scalar_select 0, %s19, %s17
  $region1: #{tpu_custom_call.1} parent=0
    #allocation2 [shape = 'u8[8192]{0}', space=vmem, size = 0x2000, scoped, tag = 'input window, operand 0, single buffered']
    #allocation3 [shape = 's32[1]{0}', space=sflag, size = 0x4, scoped, tag = 'scoped memory for tpu_custom_call.1']
    #allocation4 [shape = 's32[1]{0}', space=sflag, size = 0x4, scoped, tag = 'scoped memory for tpu_custom_call.1']
    #allocation5 [shape = 'u8[8192]{0}', space=vmem, size = 0x2000, scoped, tag = 'input window, operand 1, single buffered']
    #allocation6 [shape = 's32[1]{0}', space=sflag, size = 0x4, scoped, tag = 'scoped memory for tpu_custom_call.1']
    #allocation7 [shape = 'u8[1024]{0}', space=vmem, size = 0x400, scoped, tag = 'input window, operand 3, single buffered']
    #allocation8 [shape = 'u8[8192]{0}', space=vmem, size = 0x2000, scoped, tag = 'output window, operand 0, single buffered']
    %21 = vsyncpa [#allocation3], 0
    %22 = vsyncpa [#allocation6], 0
    %23 = vsyncpa [#allocation4], 0
    // Predicated region
    $region2: #{tpu_custom_call.1} parent=1 // pred_check
      _
    $region3: #{tpu_custom_call.1} parent=1 // pred_check_branch
      %25 = sbr.rel (0) target = $region5
    $region4: #{tpu_custom_call.1} parent=1 // pred_region
      %s27 = ssub.s32 256, 256
      %28 = vsyncadd [#allocation3], %s27
      %s29 = sshll.u32 [#allocation2], 4
      %s30 = int_to_ptr.vmem [resolvable:$true] %s29
      %35 = dma.hbm_to_vmem [thread:$0]  %s0, 256, %s30, [#allocation3], 128, 128, 8
    $region5: #{tpu_custom_call.1} parent=1 // pred_fallthru
      _
    // Predicated region
    $region6: #{tpu_custom_call.1} parent=1 // pred_check
      _
    $region7: #{tpu_custom_call.1} parent=1 // pred_check_branch
      %37 = sbr.rel (0) target = $region9
    $region8: #{tpu_custom_call.1} parent=1 // pred_region
      %s39 = ssub.s32 256, 256
      %40 = vsyncadd [#allocation6], %s39
      %s41 = sshll.u32 [#allocation5], 4
      %s42 = int_to_ptr.vmem [resolvable:$true] %s41
      %47 = dma.hbm_to_vmem [thread:$0]  %s1, 256, %s42, [#allocation6], 128, 128, 8
    $region9: #{tpu_custom_call.1} parent=1 // pred_fallthru
      _
    // Predicated region
    $region10: #{tpu_custom_call.1} parent=1 // pred_check
      _
    $region11: #{tpu_custom_call.1} parent=1 // pred_check_branch
      %49 = sbr.rel (0) target = $region13
    $region12: #{tpu_custom_call.1} parent=1 // pred_region
      _
    $region13: #{tpu_custom_call.1} parent=1 // pred_fallthru
      _
    // Predicated region
    $region14: #{tpu_custom_call.1} parent=1 // pred_check
      _
    $region15: #{tpu_custom_call.1} parent=1 // pred_check_branch
      %51 = sbr.rel (0) target = $region17
    $region16: #{tpu_custom_call.1} parent=1 // pred_region
      %s53 = ssub.s32 32, 32
      %54 = vsyncadd [#allocation6], %s53
      %s55 = sshll.u32 [#allocation7], 4
      %s56 = int_to_ptr.vmem [resolvable:$true] %s55
      %61 = dma.hbm_to_vmem [thread:$0]  %s3, 32, %s56, [#allocation6], 16, 16, 1
    $region17: #{tpu_custom_call.1} parent=1 // pred_fallthru
      _
    // Predicated region
    $region18: #{tpu_custom_call.1} parent=1 // pred_check
      _
    $region19: #{tpu_custom_call.1} parent=1 // pred_check_branch
      %63 = sbr.rel (0) target = $region21
    $region20: #{tpu_custom_call.1} parent=1 // pred_region
      _
    $region21: #{tpu_custom_call.1} parent=1 // pred_fallthru
      _
    // Predicated region
    $region22: #{tpu_custom_call.1} parent=1 // pred_check
      _
    $region23: #{tpu_custom_call.1} parent=1 // pred_check_branch
      %65 = sbr.rel (0) target = $region25
    $region24: #{tpu_custom_call.1} parent=1 // pred_region
      _
    $region25: #{tpu_custom_call.1} parent=1 // pred_fallthru
      _
    // Predicated region
    $region26: #{tpu_custom_call.1} parent=1 // pred_check
      _
    $region27: #{tpu_custom_call.1} parent=1 // pred_check_branch
      %67 = sbr.rel (0) target = $region29
    $region28: #{tpu_custom_call.1} parent=1 // pred_region
      _
    $region29: #{tpu_custom_call.1} parent=1 // pred_fallthru
      _
    // Predicated region
    $region30: #{tpu_custom_call.1} parent=1 // pred_check
      _
    $region31: #{tpu_custom_call.1} parent=1 // pred_check_branch
      %69 = sbr.rel (0) target = $region33
    $region32: #{tpu_custom_call.1} parent=1 // pred_region
      _
    $region33: #{tpu_custom_call.1} parent=1 // pred_fallthru
      _
    // Predicated region
    $region34: #{tpu_custom_call.1} parent=1 // pred_check
      _
    $region35: #{tpu_custom_call.1} parent=1 // pred_check_branch
      %71 = sbr.rel (0) target = $region37
    $region36: #{tpu_custom_call.1} parent=1 // pred_region
      _
    $region37: #{tpu_custom_call.1} parent=1 // pred_fallthru
      _
    // Predicated region
    $region38: #{tpu_custom_call.1} parent=1 // pred_check
      _
    $region39: #{tpu_custom_call.1} parent=1 // pred_check_branch
      %73 = sbr.rel (0) target = $region41
    $region40: #{tpu_custom_call.1} parent=1 // pred_region
      _
    $region41: #{tpu_custom_call.1} parent=1 // pred_fallthru
      _
    // Predicated region
    $region42: #{tpu_custom_call.1} parent=1 // pred_check
      _
    $region43: #{tpu_custom_call.1} parent=1 // pred_check_branch
      %75 = sbr.rel (0) target = $region45
    $region44: #{tpu_custom_call.1} parent=1 // pred_region
      _
    $region45: #{tpu_custom_call.1} parent=1 // pred_fallthru
      _
    // Predicated region
    $region46: #{tpu_custom_call.1} parent=1 // pred_check
      _
    $region47: #{tpu_custom_call.1} parent=1 // pred_check_branch
      %77 = sbr.rel (0) target = $region49
    $region48: #{tpu_custom_call.1} parent=1 // pred_region
      _
    $region49: #{tpu_custom_call.1} parent=1 // pred_fallthru
      _
    // Predicated region
    $region50: #{tpu_custom_call.1} parent=1 // pred_check
      _
    $region51: #{tpu_custom_call.1} parent=1 // pred_check_branch
      %79 = sbr.rel (0) target = $region53
    $region52: #{tpu_custom_call.1} parent=1 // pred_region
      _
    $region53: #{tpu_custom_call.1} parent=1 // pred_fallthru
      _
    // Predicated region
    $region54: #{tpu_custom_call.1} parent=1 // pred_check
      _
    $region55: #{tpu_custom_call.1} parent=1 // pred_check_branch
      %81 = sbr.rel (0) target = $region57
    $region56: #{tpu_custom_call.1} parent=1 // pred_region
      _
    $region57: #{tpu_custom_call.1} parent=1 // pred_fallthru
      _
    // Predicated region
    $region58: #{tpu_custom_call.1} parent=1 // pred_check
      _
    $region59: #{tpu_custom_call.1} parent=1 // pred_check_branch
      %83 = sbr.rel (0) target = $region61
    $region60: #{tpu_custom_call.1} parent=1 // pred_region
      _
    $region61: #{tpu_custom_call.1} parent=1 // pred_fallthru
      _
    // Predicated region
    $region62: #{tpu_custom_call.1} parent=1 // pred_check
      _
    $region63: #{tpu_custom_call.1} parent=1 // pred_check_branch
      %85 = sbr.rel (0) target = $region65
    $region64: #{tpu_custom_call.1} parent=1 // pred_region
      _
    $region65: #{tpu_custom_call.1} parent=1 // pred_fallthru
      _
    // Predicated region
    $region66: #{tpu_custom_call.1} parent=1 // pred_check
      _
    $region67: #{tpu_custom_call.1} parent=1 // pred_check_branch
      %87 = sbr.rel (0) target = $region69
    $region68: #{tpu_custom_call.1} parent=1 // pred_region
      %88 = dma.done [#allocation3], 256
    $region69: #{tpu_custom_call.1} parent=1 // pred_fallthru
      _
    // Predicated region
    $region70: #{tpu_custom_call.1} parent=1 // pred_check
      _
    $region71: #{tpu_custom_call.1} parent=1 // pred_check_branch
      %90 = sbr.rel (0) target = $region73
    $region72: #{tpu_custom_call.1} parent=1 // pred_region
      %91 = dma.done [#allocation6], 256
    $region73: #{tpu_custom_call.1} parent=1 // pred_fallthru
      _
    // Predicated region
    $region74: #{tpu_custom_call.1} parent=1 // pred_check
      _
    $region75: #{tpu_custom_call.1} parent=1 // pred_check_branch
      %93 = sbr.rel (0) target = $region77
    $region76: #{tpu_custom_call.1} parent=1 // pred_region
      %94 = dma.done [#allocation6], 32
    $region77: #{tpu_custom_call.1} parent=1 // pred_fallthru
      _
    %v95 = vld [vmem:[#allocation2] sm:$0xff]
    %v96 = vld [vmem:[#allocation2 + $0x8] sm:$0xff]
    %v97 = vld [vmem:[#allocation5] sm:$0xff]
    %v98 = vld [vmem:[#allocation5 + $0x8] sm:$0xff]
    %v99 = vld [vmem:[%s2] sm:$0x1]
    %v100 = vld [vmem:[#allocation7] sm:$0x1]
    %vm101 = vcmask 261120
    %v102 = vsel %vm101, %v95, 0.0
    %103 = vadd.xlane.f32.xlu0 %v102
    %v104 = vpop.xlane.xlu0 %103
    %v105 = vsel %vm101, %v96, 0.0
    %106 = vadd.xlane.f32.xlu0 %v105
    %v107 = vpop.xlane.xlu0 %106
    %v108 = vrcp.pop 32.0
    %v109 = vmul.f32 %v104, %v108
    %v110 = vmul.f32 %v107, %v108
    %v111 = vsub.f32 %v95, %v109
    %v112 = vsub.f32 %v96, %v110
    %v113 = vmul.f32 %v111, %v111
    %v114 = vmul.f32 %v112, %v112
    %v115 = vsel %vm101, %v113, 0.0
    %116 = vadd.xlane.f32.xlu0 %v115
    %v117 = vpop.xlane.xlu0 %116
    %v118 = vsel %vm101, %v114, 0.0
    %119 = vadd.xlane.f32.xlu0 %v118
    %v120 = vpop.xlane.xlu0 %119
    %v121 = vmul.f32 %v117, %v108
    %v122 = vmul.f32 %v120, %v108
    %v123 = vadd.f32 %v121, 1e-06
    %v124 = vadd.f32 %v122, 1e-06
    %v125 = vrsqrt.pop %v123
    %v126 = vrsqrt.pop %v124
    %v127 = vmul.f32 %v111, %v125
    %v128 = vmul.f32 %v112, %v126
    %v130 = vlaneseq
    %v131 = vshrl.u32 %v130, 7
    %v132 = vsub.s32 0, %v131
    %v133 = vrot.slane %v99, %v132
    %v135 = vmul.f32 %v127, %v133
    %v136 = vmul.f32 %v128, %v133
    %v138 = vlaneseq
    %v139 = vshrl.u32 %v138, 7
    %v140 = vsub.s32 0, %v139
    %v141 = vrot.slane %v100, %v140
    %v143 = vadd.f32 %v135, %v141
    %v144 = vadd.f32 %v136, %v141
    %v145 = vld [vmem:[%s4] sm:$0xff]
    %v146 = vld [vmem:[%s4 + $0x8] sm:$0xff]
    %v147 = vld [vmem:[%s4 + $0x10] sm:$0xff]
    %v148 = vld [vmem:[%s4 + $0x18] sm:$0xff]
    %v149 = vld [vmem:[%s5] sm:$0x1]
    %v151 = vlaneseq
    %v152 = vshrl.u32 %v151, 7
    %v153 = vsub.s32 0, %v152
    %v154 = vrot.slane %v149, %v153
    %v157 = vsel %vm101, %v143, 0
    %v160 = vsel %vm101, %v144, 0
    %162 = vmatprep.subr.mxu0 0.0
    %163 = vmatpush1.msra.mxu0 0.0
    %164 = vmatprep.subr.mxu0 0.0
    %165 = vmatpush1.msra.mxu0 0.0
    %166 = vmatprep.subr.mxu0 0.0
    %167 = vmatpush1.msra.mxu0 0.0
    %168 = vmatprep.subr.mxu0 0.0
    %169 = vmatpush1.msra.mxu0 0.0
    %170 = vmatprep.subr.mxu0 0.0
    %171 = vmatpush1.msra.mxu0 0.0
    %172 = vmatprep.subr.mxu0 0.0
    %173 = vmatpush1.msra.mxu0 0.0
    %174 = vmatprep.subr.mxu0 0.0
    %175 = vmatpush1.msra.mxu0 0.0
    %176 = vmatprep.subr.mxu0 0.0
    %177 = vmatpush1.msra.mxu0 0.0
    %178 = vmatprep.subr.mxu0 0.0
    %179 = vmatpush1.msra.mxu0 0.0
    %180 = vmatprep.subr.mxu0 0.0
    %181 = vmatpush1.msra.mxu0 0.0
    %182 = vmatprep.subr.mxu0 0.0
    %183 = vmatpush1.msra.mxu0 0.0
    %184 = vmatprep.subr.mxu0 0.0
    %185 = vmatpush1.msra.mxu0 0.0
    %186 = vmatprep.subr.mxu0 0.0
    %187 = vmatpush1.msra.mxu0 %v148
    %188 = vmatprep.subr.mxu0 0.0
    %189 = vmatpush1.msra.mxu0 %v147
    %190 = vmatprep.subr.mxu0 0.0
    %191 = vmatpush1.msra.mxu0 %v146
    %192 = vmatprep.subr.mxu0 0.0
    %193 = vmatpush1.msra.mxu0 %v145
    %194 = vmatprep.subr.mxu0 0.0
    %195 = vmatpush2.msra.mxu0 0.0
    %196 = vmatprep.subr.mxu0 0.0
    %197 = vmatpush2.msra.mxu0 0.0
    %198 = vmatprep.subr.mxu0 0.0
    %199 = vmatpush2.msra.mxu0 0.0
    %200 = vmatprep.subr.mxu0 0.0
    %201 = vmatpush2.msra.mxu0 0.0
    %202 = vmatprep.subr.mxu0 0.0
    %203 = vmatpush2.msra.mxu0 0.0
    %204 = vmatprep.subr.mxu0 0.0
    %205 = vmatpush2.msra.mxu0 0.0
    %206 = vmatprep.subr.mxu0 0.0
    %207 = vmatpush2.msra.mxu0 0.0
    %208 = vmatprep.subr.mxu0 0.0
    %209 = vmatpush2.msra.mxu0 0.0
    %210 = vmatprep.subr.mxu0 0.0
    %211 = vmatpush2.msra.mxu0 0.0
    %212 = vmatprep.subr.mxu0 0.0
    %213 = vmatpush2.msra.mxu0 0.0
    %214 = vmatprep.subr.mxu0 0.0
    %215 = vmatpush2.msra.mxu0 0.0
    %216 = vmatprep.subr.mxu0 0.0
    %217 = vmatpush2.msra.mxu0 0.0
    %218 = vmatprep.subr.mxu0 0.0
    %219 = vmatpush2.msra.mxu0 0.0
    %220 = vmatprep.subr.mxu0 0.0
    %221 = vmatpush2.msra.mxu0 0.0
    %222 = vmatprep.subr.mxu0 0.0
    %223 = vmatpush2.msra.mxu0 0.0
    %224 = vmatprep.subr.mxu0 0.0
    %225 = vmatpush2.msra.mxu0 0.0
    %226 = vmatprep.mubr.f32.mxu0 0.0
    %227 = vmatmul.mubr.f32.gmra.mxu0 %v157
    %v228 = vpop.f32.mrf.mxu0
    %v229 = vadd.f32 %v154, %v228
    %v230 = vpop.f32.mrf.mxu0
    %231 = vmatprep.mubr.f32.mxu0 0.0
    %232 = vmatmul.mubr.f32.gmra.mxu0 %v160
    %v233 = vpop.f32.mrf.mxu0
    %v234 = vadd.f32 %v154, %v233
    %v235 = vpop.f32.mrf.mxu0
    %236 = vdwg.mxu0
    %239 = vrot.lane.b32.xlu0 %v229, 96
    %v240 = vpop.permute.xlu0 %239
    %241 = vrot.lane.b32.xlu0 %v234, 96
    %v242 = vpop.permute.xlu0 %241
    %vm243 = vcmask 64512
    %v244 = vsel %vm243, %v229, 0
    %v246 = vsel %vm243, %v234, 0
    %v248 = vsel %vm243, %v240, 0
    %v250 = vsel %vm243, %v242, 0
    %252 = vmatprep.subr.mxu0 0.0
    %253 = vmatpush1.xpose.msra.mxu0 0.0
    %254 = vmatprep.subr.mxu0 0.0
    %255 = vmatpush1.xpose.msra.mxu0 0.0
    %256 = vmatprep.subr.mxu0 0.0
    %257 = vmatpush1.xpose.msra.mxu0 0.0
    %258 = vmatprep.subr.mxu0 0.0
    %259 = vmatpush1.xpose.msra.mxu0 0.0
    %260 = vmatprep.subr.mxu0 0.0
    %261 = vmatpush1.xpose.msra.mxu0 0.0
    %262 = vmatprep.subr.mxu0 0.0
    %263 = vmatpush1.xpose.msra.mxu0 0.0
    %264 = vmatprep.subr.mxu0 0.0
    %265 = vmatpush1.xpose.msra.mxu0 0.0
    %266 = vmatprep.subr.mxu0 0.0
    %267 = vmatpush1.xpose.msra.mxu0 0.0
    %268 = vmatprep.subr.mxu0 0.0
    %269 = vmatpush1.xpose.msra.mxu0 0.0
    %270 = vmatprep.subr.mxu0 0.0
    %271 = vmatpush1.xpose.msra.mxu0 0.0
    %272 = vmatprep.subr.mxu0 0.0
    %273 = vmatpush1.xpose.msra.mxu0 0.0
    %274 = vmatprep.subr.mxu0 0.0
    %275 = vmatpush1.xpose.msra.mxu0 0.0
    %276 = vmatprep.subr.mxu0 0.0
    %277 = vmatpush1.xpose.msra.mxu0 0.0
    %278 = vmatprep.subr.mxu0 0.0
    %279 = vmatpush1.xpose.msra.mxu0 0.0
    %280 = vmatprep.subr.mxu0 0.0
    %281 = vmatpush1.xpose.msra.mxu0 %v250
    %282 = vmatprep.subr.mxu0 0.0
    %283 = vmatpush1.xpose.msra.mxu0 %v248
    %284 = vmatprep.subr.mxu0 0.0
    %285 = vmatpush2.xpose.msra.mxu0 0.0
    %286 = vmatprep.subr.mxu0 0.0
    %287 = vmatpush2.xpose.msra.mxu0 0.0
    %288 = vmatprep.subr.mxu0 0.0
    %289 = vmatpush2.xpose.msra.mxu0 0.0
    %290 = vmatprep.subr.mxu0 0.0
    %291 = vmatpush2.xpose.msra.mxu0 0.0
    %292 = vmatprep.subr.mxu0 0.0
    %293 = vmatpush2.xpose.msra.mxu0 0.0
    %294 = vmatprep.subr.mxu0 0.0
    %295 = vmatpush2.xpose.msra.mxu0 0.0
    %296 = vmatprep.subr.mxu0 0.0
    %297 = vmatpush2.xpose.msra.mxu0 0.0
    %298 = vmatprep.subr.mxu0 0.0
    %299 = vmatpush2.xpose.msra.mxu0 0.0
    %300 = vmatprep.subr.mxu0 0.0
    %301 = vmatpush2.xpose.msra.mxu0 0.0
    %302 = vmatprep.subr.mxu0 0.0
    %303 = vmatpush2.xpose.msra.mxu0 0.0
    %304 = vmatprep.subr.mxu0 0.0
    %305 = vmatpush2.xpose.msra.mxu0 0.0
    %306 = vmatprep.subr.mxu0 0.0
    %307 = vmatpush2.xpose.msra.mxu0 0.0
    %308 = vmatprep.subr.mxu0 0.0
    %309 = vmatpush2.xpose.msra.mxu0 0.0
    %310 = vmatprep.subr.mxu0 0.0
    %311 = vmatpush2.xpose.msra.mxu0 0.0
    %312 = vmatprep.subr.mxu0 0.0
    %313 = vmatpush2.xpose.msra.mxu0 0.0
    %314 = vmatprep.subr.mxu0 0.0
    %315 = vmatpush2.xpose.msra.mxu0 0.0
    %316 = vmatprep.mubr.f32.mxu0 0.0
    %317 = vmatmul.mubr.f32.gmra.mxu0 %v244
    %v318 = vpop.f32.mrf.mxu0
    %v319 = vadd.f32 0.0, %v318
    %v320 = vpop.f32.mrf.mxu0
    %321 = vmatprep.mubr.f32.mxu0 0.0
    %322 = vmatmul.mubr.f32.gmra.mxu0 %v246
    %v323 = vpop.f32.mrf.mxu0
    %v324 = vadd.f32 0.0, %v323
    %v325 = vpop.f32.mrf.mxu0
    %326 = vdwg.mxu0
    %v327 = vmul.f32 %v319, 0.35355338
    %v328 = vmul.f32 %v324, 0.35355338
    %v329 = vadd.f32 %v327, %v97
    %v330 = vadd.f32 %v328, %v98
    %vm331 = vcmask 130048
    %v332 = vsel %vm331, %v329, -inf
    %333 = vmax.xlane.f32.xlu0 %v332
    %v334 = vpop.xlane.xlu0 %333
    %v335 = vsel %vm331, %v330, -inf
    %336 = vmax.xlane.f32.xlu0 %v335
    %v337 = vpop.xlane.xlu0 %336
    %v338 = vsub.f32 %v329, %v334
    %v339 = vsub.f32 %v330, %v337
    %v340 = vmul.f32 %v338, 1.442695
    %v341 = vpow.pop %v340
    %v342 = vmul.f32 %v339, 1.442695
    %v343 = vpow.pop %v342
    %v344 = vsel %vm331, %v341, 0.0
    %345 = vadd.xlane.f32.xlu0 %v344
    %v346 = vpop.xlane.xlu0 %345
    %v347 = vsel %vm331, %v343, 0.0
    %348 = vadd.xlane.f32.xlu0 %v347
    %v349 = vpop.xlane.xlu0 %348
    %v350 = vrcp.pop %v346
    %v351 = vrcp.pop %v349
    %v352 = vmul.f32 %v341, %v350
    %v353 = vmul.f32 %v343, %v351
    %354 = vrot.lane.b32.xlu0 %v229, 64
    %v355 = vpop.permute.xlu0 %354
    %356 = vrot.lane.b32.xlu0 %v234, 64
    %v357 = vpop.permute.xlu0 %356
    %v361 = vsel %vm331, %v352, 0
    %v364 = vsel %vm331, %v353, 0
    %366 = vmatprep.subr.mxu0 0.0
    %367 = vmatpush1.msra.mxu0 0.0
    %368 = vmatprep.subr.mxu0 0.0
    %369 = vmatpush1.msra.mxu0 0.0
    %370 = vmatprep.subr.mxu0 0.0
    %371 = vmatpush1.msra.mxu0 0.0
    %372 = vmatprep.subr.mxu0 0.0
    %373 = vmatpush1.msra.mxu0 0.0
    %374 = vmatprep.subr.mxu0 0.0
    %375 = vmatpush1.msra.mxu0 0.0
    %376 = vmatprep.subr.mxu0 0.0
    %377 = vmatpush1.msra.mxu0 0.0
    %378 = vmatprep.subr.mxu0 0.0
    %379 = vmatpush1.msra.mxu0 0.0
    %380 = vmatprep.subr.mxu0 0.0
    %381 = vmatpush1.msra.mxu0 0.0
    %382 = vmatprep.subr.mxu0 0.0
    %383 = vmatpush1.msra.mxu0 0.0
    %384 = vmatprep.subr.mxu0 0.0
    %385 = vmatpush1.msra.mxu0 0.0
    %386 = vmatprep.subr.mxu0 0.0
    %387 = vmatpush1.msra.mxu0 0.0
    %388 = vmatprep.subr.mxu0 0.0
    %389 = vmatpush1.msra.mxu0 0.0
    %390 = vmatprep.subr.mxu0 0.0
    %391 = vmatpush1.msra.mxu0 0.0
    %392 = vmatprep.subr.mxu0 0.0
    %393 = vmatpush1.msra.mxu0 0.0
    %394 = vmatprep.subr.mxu0 0.0
    %395 = vmatpush1.msra.mxu0 %v357
    %396 = vmatprep.subr.mxu0 0.0
    %397 = vmatpush1.msra.mxu0 %v355
    %398 = vmatprep.subr.mxu0 0.0
    %399 = vmatpush2.msra.mxu0 0.0
    %400 = vmatprep.subr.mxu0 0.0
    %401 = vmatpush2.msra.mxu0 0.0
    %402 = vmatprep.subr.mxu0 0.0
    %403 = vmatpush2.msra.mxu0 0.0
    %404 = vmatprep.subr.mxu0 0.0
    %405 = vmatpush2.msra.mxu0 0.0
    %406 = vmatprep.subr.mxu0 0.0
    %407 = vmatpush2.msra.mxu0 0.0
    %408 = vmatprep.subr.mxu0 0.0
    %409 = vmatpush2.msra.mxu0 0.0
    %410 = vmatprep.subr.mxu0 0.0
    %411 = vmatpush2.msra.mxu0 0.0
    %412 = vmatprep.subr.mxu0 0.0
    %413 = vmatpush2.msra.mxu0 0.0
    %414 = vmatprep.subr.mxu0 0.0
    %415 = vmatpush2.msra.mxu0 0.0
    %416 = vmatprep.subr.mxu0 0.0
    %417 = vmatpush2.msra.mxu0 0.0
    %418 = vmatprep.subr.mxu0 0.0
    %419 = vmatpush2.msra.mxu0 0.0
    %420 = vmatprep.subr.mxu0 0.0
    %421 = vmatpush2.msra.mxu0 0.0
    %422 = vmatprep.subr.mxu0 0.0
    %423 = vmatpush2.msra.mxu0 0.0
    %424 = vmatprep.subr.mxu0 0.0
    %425 = vmatpush2.msra.mxu0 0.0
    %426 = vmatprep.subr.mxu0 0.0
    %427 = vmatpush2.msra.mxu0 0.0
    %428 = vmatprep.subr.mxu0 0.0
    %429 = vmatpush2.msra.mxu0 0.0
    %430 = vmatprep.mubr.f32.mxu0 0.0
    %431 = vmatmul.mubr.f32.gmra.mxu0 %v361
    %v432 = vpop.f32.mrf.mxu0
    %v433 = vadd.f32 0.0, %v432
    %v434 = vpop.f32.mrf.mxu0
    %435 = vmatprep.mubr.f32.mxu0 0.0
    %436 = vmatmul.mubr.f32.gmra.mxu0 %v364
    %v437 = vpop.f32.mrf.mxu0
    %v438 = vadd.f32 0.0, %v437
    %v439 = vpop.f32.mrf.mxu0
    %440 = vdwg.mxu0
    %441 = vrot.lane.b32.xlu0 %v229, 120
    %v442 = vpop.permute.xlu0 %441
    %443 = vrot.lane.b32.xlu0 %v234, 120
    %v444 = vpop.permute.xlu0 %443
    %445 = vrot.lane.b32.xlu0 %v229, 88
    %v446 = vpop.permute.xlu0 %445
    %447 = vrot.lane.b32.xlu0 %v234, 88
    %v448 = vpop.permute.xlu0 %447
    %v449 = vsel %vm243, %v442, 0
    %v451 = vsel %vm243, %v444, 0
    %v453 = vsel %vm243, %v446, 0
    %v455 = vsel %vm243, %v448, 0
    %457 = vmatprep.subr.mxu0 0.0
    %458 = vmatpush1.xpose.msra.mxu0 0.0
    %459 = vmatprep.subr.mxu0 0.0
    %460 = vmatpush1.xpose.msra.mxu0 0.0
    %461 = vmatprep.subr.mxu0 0.0
    %462 = vmatpush1.xpose.msra.mxu0 0.0
    %463 = vmatprep.subr.mxu0 0.0
    %464 = vmatpush1.xpose.msra.mxu0 0.0
    %465 = vmatprep.subr.mxu0 0.0
    %466 = vmatpush1.xpose.msra.mxu0 0.0
    %467 = vmatprep.subr.mxu0 0.0
    %468 = vmatpush1.xpose.msra.mxu0 0.0
    %469 = vmatprep.subr.mxu0 0.0
    %470 = vmatpush1.xpose.msra.mxu0 0.0
    %471 = vmatprep.subr.mxu0 0.0
    %472 = vmatpush1.xpose.msra.mxu0 0.0
    %473 = vmatprep.subr.mxu0 0.0
    %474 = vmatpush1.xpose.msra.mxu0 0.0
    %475 = vmatprep.subr.mxu0 0.0
    %476 = vmatpush1.xpose.msra.mxu0 0.0
    %477 = vmatprep.subr.mxu0 0.0
    %478 = vmatpush1.xpose.msra.mxu0 0.0
    %479 = vmatprep.subr.mxu0 0.0
    %480 = vmatpush1.xpose.msra.mxu0 0.0
    %481 = vmatprep.subr.mxu0 0.0
    %482 = vmatpush1.xpose.msra.mxu0 0.0
    %483 = vmatprep.subr.mxu0 0.0
    %484 = vmatpush1.xpose.msra.mxu0 0.0
    %485 = vmatprep.subr.mxu0 0.0
    %486 = vmatpush1.xpose.msra.mxu0 %v455
    %487 = vmatprep.subr.mxu0 0.0
    %488 = vmatpush1.xpose.msra.mxu0 %v453
    %489 = vmatprep.subr.mxu0 0.0
    %490 = vmatpush2.xpose.msra.mxu0 0.0
    %491 = vmatprep.subr.mxu0 0.0
    %492 = vmatpush2.xpose.msra.mxu0 0.0
    %493 = vmatprep.subr.mxu0 0.0
    %494 = vmatpush2.xpose.msra.mxu0 0.0
    %495 = vmatprep.subr.mxu0 0.0
    %496 = vmatpush2.xpose.msra.mxu0 0.0
    %497 = vmatprep.subr.mxu0 0.0
    %498 = vmatpush2.xpose.msra.mxu0 0.0
    %499 = vmatprep.subr.mxu0 0.0
    %500 = vmatpush2.xpose.msra.mxu0 0.0
    %501 = vmatprep.subr.mxu0 0.0
    %502 = vmatpush2.xpose.msra.mxu0 0.0
    %503 = vmatprep.subr.mxu0 0.0
    %504 = vmatpush2.xpose.msra.mxu0 0.0
    %505 = vmatprep.subr.mxu0 0.0
    %506 = vmatpush2.xpose.msra.mxu0 0.0
    %507 = vmatprep.subr.mxu0 0.0
    %508 = vmatpush2.xpose.msra.mxu0 0.0
    %509 = vmatprep.subr.mxu0 0.0
    %510 = vmatpush2.xpose.msra.mxu0 0.0
    %511 = vmatprep.subr.mxu0 0.0
    %512 = vmatpush2.xpose.msra.mxu0 0.0
    %513 = vmatprep.subr.mxu0 0.0
    %514 = vmatpush2.xpose.msra.mxu0 0.0
    %515 = vmatprep.subr.mxu0 0.0
    %516 = vmatpush2.xpose.msra.mxu0 0.0
    %517 = vmatprep.subr.mxu0 0.0
    %518 = vmatpush2.xpose.msra.mxu0 0.0
    %519 = vmatprep.subr.mxu0 0.0
    %520 = vmatpush2.xpose.msra.mxu0 0.0
    %521 = vmatprep.mubr.f32.mxu0 0.0
    %522 = vmatmul.mubr.f32.gmra.mxu0 %v449
    %v523 = vpop.f32.mrf.mxu0
    %v524 = vadd.f32 0.0, %v523
    %v525 = vpop.f32.mrf.mxu0
    %526 = vmatprep.mubr.f32.mxu0 0.0
    %527 = vmatmul.mubr.f32.gmra.mxu0 %v451
    %v528 = vpop.f32.mrf.mxu0
    %v529 = vadd.f32 0.0, %v528
    %v530 = vpop.f32.mrf.mxu0
    %531 = vdwg.mxu0
    %v532 = vmul.f32 %v524, 0.35355338
    %v533 = vmul.f32 %v529, 0.35355338
    %v534 = vadd.f32 %v532, %v97
    %v535 = vadd.f32 %v533, %v98
    %v536 = vsel %vm331, %v534, -inf
    %537 = vmax.xlane.f32.xlu0 %v536
    %v538 = vpop.xlane.xlu0 %537
    %v539 = vsel %vm331, %v535, -inf
    %540 = vmax.xlane.f32.xlu0 %v539
    %v541 = vpop.xlane.xlu0 %540
    %v542 = vsub.f32 %v534, %v538
    %v543 = vsub.f32 %v535, %v541
    %v544 = vmul.f32 %v542, 1.442695
    %v545 = vpow.pop %v544
    %v546 = vmul.f32 %v543, 1.442695
    %v547 = vpow.pop %v546
    %v548 = vsel %vm331, %v545, 0.0
    %549 = vadd.xlane.f32.xlu0 %v548
    %v550 = vpop.xlane.xlu0 %549
    %v551 = vsel %vm331, %v547, 0.0
    %552 = vadd.xlane.f32.xlu0 %v551
    %v553 = vpop.xlane.xlu0 %552
    %v554 = vrcp.pop %v550
    %v555 = vrcp.pop %v553
    %v556 = vmul.f32 %v545, %v554
    %v557 = vmul.f32 %v547, %v555
    %558 = vrot.lane.b32.xlu0 %v229, 56
    %v559 = vpop.permute.xlu0 %558
    %560 = vrot.lane.b32.xlu0 %v234, 56
    %v561 = vpop.permute.xlu0 %560
    %v565 = vsel %vm331, %v556, 0
    %v568 = vsel %vm331, %v557, 0
    %570 = vmatprep.subr.mxu0 0.0
    %571 = vmatpush1.msra.mxu0 0.0
    %572 = vmatprep.subr.mxu0 0.0
    %573 = vmatpush1.msra.mxu0 0.0
    %574 = vmatprep.subr.mxu0 0.0
    %575 = vmatpush1.msra.mxu0 0.0
    %576 = vmatprep.subr.mxu0 0.0
    %577 = vmatpush1.msra.mxu0 0.0
    %578 = vmatprep.subr.mxu0 0.0
    %579 = vmatpush1.msra.mxu0 0.0
    %580 = vmatprep.subr.mxu0 0.0
    %581 = vmatpush1.msra.mxu0 0.0
    %582 = vmatprep.subr.mxu0 0.0
    %583 = vmatpush1.msra.mxu0 0.0
    %584 = vmatprep.subr.mxu0 0.0
    %585 = vmatpush1.msra.mxu0 0.0
    %586 = vmatprep.subr.mxu0 0.0
    %587 = vmatpush1.msra.mxu0 0.0
    %588 = vmatprep.subr.mxu0 0.0
    %589 = vmatpush1.msra.mxu0 0.0
    %590 = vmatprep.subr.mxu0 0.0
    %591 = vmatpush1.msra.mxu0 0.0
    %592 = vmatprep.subr.mxu0 0.0
    %593 = vmatpush1.msra.mxu0 0.0
    %594 = vmatprep.subr.mxu0 0.0
    %595 = vmatpush1.msra.mxu0 0.0
    %596 = vmatprep.subr.mxu0 0.0
    %597 = vmatpush1.msra.mxu0 0.0
    %598 = vmatprep.subr.mxu0 0.0
    %599 = vmatpush1.msra.mxu0 %v561
    %600 = vmatprep.subr.mxu0 0.0
    %601 = vmatpush1.msra.mxu0 %v559
    %602 = vmatprep.subr.mxu0 0.0
    %603 = vmatpush2.msra.mxu0 0.0
    %604 = vmatprep.subr.mxu0 0.0
    %605 = vmatpush2.msra.mxu0 0.0
    %606 = vmatprep.subr.mxu0 0.0
    %607 = vmatpush2.msra.mxu0 0.0
    %608 = vmatprep.subr.mxu0 0.0
    %609 = vmatpush2.msra.mxu0 0.0
    %610 = vmatprep.subr.mxu0 0.0
    %611 = vmatpush2.msra.mxu0 0.0
    %612 = vmatprep.subr.mxu0 0.0
    %613 = vmatpush2.msra.mxu0 0.0
    %614 = vmatprep.subr.mxu0 0.0
    %615 = vmatpush2.msra.mxu0 0.0
    %616 = vmatprep.subr.mxu0 0.0
    %617 = vmatpush2.msra.mxu0 0.0
    %618 = vmatprep.subr.mxu0 0.0
    %619 = vmatpush2.msra.mxu0 0.0
    %620 = vmatprep.subr.mxu0 0.0
    %621 = vmatpush2.msra.mxu0 0.0
    %622 = vmatprep.subr.mxu0 0.0
    %623 = vmatpush2.msra.mxu0 0.0
    %624 = vmatprep.subr.mxu0 0.0
    %625 = vmatpush2.msra.mxu0 0.0
    %626 = vmatprep.subr.mxu0 0.0
    %627 = vmatpush2.msra.mxu0 0.0
    %628 = vmatprep.subr.mxu0 0.0
    %629 = vmatpush2.msra.mxu0 0.0
    %630 = vmatprep.subr.mxu0 0.0
    %631 = vmatpush2.msra.mxu0 0.0
    %632 = vmatprep.subr.mxu0 0.0
    %633 = vmatpush2.msra.mxu0 0.0
    %634 = vmatprep.mubr.f32.mxu0 0.0
    %635 = vmatmul.mubr.f32.gmra.mxu0 %v565
    %v636 = vpop.f32.mrf.mxu0
    %v637 = vadd.f32 0.0, %v636
    %v638 = vpop.f32.mrf.mxu0
    %639 = vmatprep.mubr.f32.mxu0 0.0
    %640 = vmatmul.mubr.f32.gmra.mxu0 %v568
    %v641 = vpop.f32.mrf.mxu0
    %v642 = vadd.f32 0.0, %v641
    %v643 = vpop.f32.mrf.mxu0
    %644 = vdwg.mxu0
    %645 = vrot.lane.b32.xlu0 %v229, 112
    %v646 = vpop.permute.xlu0 %645
    %647 = vrot.lane.b32.xlu0 %v234, 112
    %v648 = vpop.permute.xlu0 %647
    %649 = vrot.lane.b32.xlu0 %v229, 80
    %v650 = vpop.permute.xlu0 %649
    %651 = vrot.lane.b32.xlu0 %v234, 80
    %v652 = vpop.permute.xlu0 %651
    %v653 = vsel %vm243, %v646, 0
    %v655 = vsel %vm243, %v648, 0
    %v657 = vsel %vm243, %v650, 0
    %v659 = vsel %vm243, %v652, 0
    %661 = vmatprep.subr.mxu0 0.0
    %662 = vmatpush1.xpose.msra.mxu0 0.0
    %663 = vmatprep.subr.mxu0 0.0
    %664 = vmatpush1.xpose.msra.mxu0 0.0
    %665 = vmatprep.subr.mxu0 0.0
    %666 = vmatpush1.xpose.msra.mxu0 0.0
    %667 = vmatprep.subr.mxu0 0.0
    %668 = vmatpush1.xpose.msra.mxu0 0.0
    %669 = vmatprep.subr.mxu0 0.0
    %670 = vmatpush1.xpose.msra.mxu0 0.0
    %671 = vmatprep.subr.mxu0 0.0
    %672 = vmatpush1.xpose.msra.mxu0 0.0
    %673 = vmatprep.subr.mxu0 0.0
    %674 = vmatpush1.xpose.msra.mxu0 0.0
    %675 = vmatprep.subr.mxu0 0.0
    %676 = vmatpush1.xpose.msra.mxu0 0.0
    %677 = vmatprep.subr.mxu0 0.0
    %678 = vmatpush1.xpose.msra.mxu0 0.0
    %679 = vmatprep.subr.mxu0 0.0
    %680 = vmatpush1.xpose.msra.mxu0 0.0
    %681 = vmatprep.subr.mxu0 0.0
    %682 = vmatpush1.xpose.msra.mxu0 0.0
    %683 = vmatprep.subr.mxu0 0.0
    %684 = vmatpush1.xpose.msra.mxu0 0.0
    %685 = vmatprep.subr.mxu0 0.0
    %686 = vmatpush1.xpose.msra.mxu0 0.0
    %687 = vmatprep.subr.mxu0 0.0
    %688 = vmatpush1.xpose.msra.mxu0 0.0
    %689 = vmatprep.subr.mxu0 0.0
    %690 = vmatpush1.xpose.msra.mxu0 %v659
    %691 = vmatprep.subr.mxu0 0.0
    %692 = vmatpush1.xpose.msra.mxu0 %v657
    %693 = vmatprep.subr.mxu0 0.0
    %694 = vmatpush2.xpose.msra.mxu0 0.0
    %695 = vmatprep.subr.mxu0 0.0
    %696 = vmatpush2.xpose.msra.mxu0 0.0
    %697 = vmatprep.subr.mxu0 0.0
    %698 = vmatpush2.xpose.msra.mxu0 0.0
    %699 = vmatprep.subr.mxu0 0.0
    %700 = vmatpush2.xpose.msra.mxu0 0.0
    %701 = vmatprep.subr.mxu0 0.0
    %702 = vmatpush2.xpose.msra.mxu0 0.0
    %703 = vmatprep.subr.mxu0 0.0
    %704 = vmatpush2.xpose.msra.mxu0 0.0
    %705 = vmatprep.subr.mxu0 0.0
    %706 = vmatpush2.xpose.msra.mxu0 0.0
    %707 = vmatprep.subr.mxu0 0.0
    %708 = vmatpush2.xpose.msra.mxu0 0.0
    %709 = vmatprep.subr.mxu0 0.0
    %710 = vmatpush2.xpose.msra.mxu0 0.0
    %711 = vmatprep.subr.mxu0 0.0
    %712 = vmatpush2.xpose.msra.mxu0 0.0
    %713 = vmatprep.subr.mxu0 0.0
    %714 = vmatpush2.xpose.msra.mxu0 0.0
    %715 = vmatprep.subr.mxu0 0.0
    %716 = vmatpush2.xpose.msra.mxu0 0.0
    %717 = vmatprep.subr.mxu0 0.0
    %718 = vmatpush2.xpose.msra.mxu0 0.0
    %719 = vmatprep.subr.mxu0 0.0
    %720 = vmatpush2.xpose.msra.mxu0 0.0
    %721 = vmatprep.subr.mxu0 0.0
    %722 = vmatpush2.xpose.msra.mxu0 0.0
    %723 = vmatprep.subr.mxu0 0.0
    %724 = vmatpush2.xpose.msra.mxu0 0.0
    %725 = vmatprep.mubr.f32.mxu0 0.0
    %726 = vmatmul.mubr.f32.gmra.mxu0 %v653
    %v727 = vpop.f32.mrf.mxu0
    %v728 = vadd.f32 0.0, %v727
    %v729 = vpop.f32.mrf.mxu0
    %730 = vmatprep.mubr.f32.mxu0 0.0
    %731 = vmatmul.mubr.f32.gmra.mxu0 %v655
    %v732 = vpop.f32.mrf.mxu0
    %v733 = vadd.f32 0.0, %v732
    %v734 = vpop.f32.mrf.mxu0
    %735 = vdwg.mxu0
    %v736 = vmul.f32 %v728, 0.35355338
    %v737 = vmul.f32 %v733, 0.35355338
    %v738 = vadd.f32 %v736, %v97
    %v739 = vadd.f32 %v737, %v98
    %v740 = vsel %vm331, %v738, -inf
    %741 = vmax.xlane.f32.xlu0 %v740
    %v742 = vpop.xlane.xlu0 %741
    %v743 = vsel %vm331, %v739, -inf
    %744 = vmax.xlane.f32.xlu0 %v743
    %v745 = vpop.xlane.xlu0 %744
    %v746 = vsub.f32 %v738, %v742
    %v747 = vsub.f32 %v739, %v745
    %v748 = vmul.f32 %v746, 1.442695
    %v749 = vpow.pop %v748
    %v750 = vmul.f32 %v747, 1.442695
    %v751 = vpow.pop %v750
    %v752 = vsel %vm331, %v749, 0.0
    %753 = vadd.xlane.f32.xlu0 %v752
    %v754 = vpop.xlane.xlu0 %753
    %v755 = vsel %vm331, %v751, 0.0
    %756 = vadd.xlane.f32.xlu0 %v755
    %v757 = vpop.xlane.xlu0 %756
    %v758 = vrcp.pop %v754
    %v759 = vrcp.pop %v757
    %v760 = vmul.f32 %v749, %v758
    %v761 = vmul.f32 %v751, %v759
    %762 = vrot.lane.b32.xlu0 %v229, 48
    %v763 = vpop.permute.xlu0 %762
    %764 = vrot.lane.b32.xlu0 %v234, 48
    %v765 = vpop.permute.xlu0 %764
    %v769 = vsel %vm331, %v760, 0
    %v772 = vsel %vm331, %v761, 0
    %774 = vmatprep.subr.mxu0 0.0
    %775 = vmatpush1.msra.mxu0 0.0
    %776 = vmatprep.subr.mxu0 0.0
    %777 = vmatpush1.msra.mxu0 0.0
    %778 = vmatprep.subr.mxu0 0.0
    %779 = vmatpush1.msra.mxu0 0.0
    %780 = vmatprep.subr.mxu0 0.0
    %781 = vmatpush1.msra.mxu0 0.0
    %782 = vmatprep.subr.mxu0 0.0
    %783 = vmatpush1.msra.mxu0 0.0
    %784 = vmatprep.subr.mxu0 0.0
    %785 = vmatpush1.msra.mxu0 0.0
    %786 = vmatprep.subr.mxu0 0.0
    %787 = vmatpush1.msra.mxu0 0.0
    %788 = vmatprep.subr.mxu0 0.0
    %789 = vmatpush1.msra.mxu0 0.0
    %790 = vmatprep.subr.mxu0 0.0
    %791 = vmatpush1.msra.mxu0 0.0
    %792 = vmatprep.subr.mxu0 0.0
    %793 = vmatpush1.msra.mxu0 0.0
    %794 = vmatprep.subr.mxu0 0.0
    %795 = vmatpush1.msra.mxu0 0.0
    %796 = vmatprep.subr.mxu0 0.0
    %797 = vmatpush1.msra.mxu0 0.0
    %798 = vmatprep.subr.mxu0 0.0
    %799 = vmatpush1.msra.mxu0 0.0
    %800 = vmatprep.subr.mxu0 0.0
    %801 = vmatpush1.msra.mxu0 0.0
    %802 = vmatprep.subr.mxu0 0.0
    %803 = vmatpush1.msra.mxu0 %v765
    %804 = vmatprep.subr.mxu0 0.0
    %805 = vmatpush1.msra.mxu0 %v763
    %806 = vmatprep.subr.mxu0 0.0
    %807 = vmatpush2.msra.mxu0 0.0
    %808 = vmatprep.subr.mxu0 0.0
    %809 = vmatpush2.msra.mxu0 0.0
    %810 = vmatprep.subr.mxu0 0.0
    %811 = vmatpush2.msra.mxu0 0.0
    %812 = vmatprep.subr.mxu0 0.0
    %813 = vmatpush2.msra.mxu0 0.0
    %814 = vmatprep.subr.mxu0 0.0
    %815 = vmatpush2.msra.mxu0 0.0
    %816 = vmatprep.subr.mxu0 0.0
    %817 = vmatpush2.msra.mxu0 0.0
    %818 = vmatprep.subr.mxu0 0.0
    %819 = vmatpush2.msra.mxu0 0.0
    %820 = vmatprep.subr.mxu0 0.0
    %821 = vmatpush2.msra.mxu0 0.0
    %822 = vmatprep.subr.mxu0 0.0
    %823 = vmatpush2.msra.mxu0 0.0
    %824 = vmatprep.subr.mxu0 0.0
    %825 = vmatpush2.msra.mxu0 0.0
    %826 = vmatprep.subr.mxu0 0.0
    %827 = vmatpush2.msra.mxu0 0.0
    %828 = vmatprep.subr.mxu0 0.0
    %829 = vmatpush2.msra.mxu0 0.0
    %830 = vmatprep.subr.mxu0 0.0
    %831 = vmatpush2.msra.mxu0 0.0
    %832 = vmatprep.subr.mxu0 0.0
    %833 = vmatpush2.msra.mxu0 0.0
    %834 = vmatprep.subr.mxu0 0.0
    %835 = vmatpush2.msra.mxu0 0.0
    %836 = vmatprep.subr.mxu0 0.0
    %837 = vmatpush2.msra.mxu0 0.0
    %838 = vmatprep.mubr.f32.mxu0 0.0
    %839 = vmatmul.mubr.f32.gmra.mxu0 %v769
    %v840 = vpop.f32.mrf.mxu0
    %v841 = vadd.f32 0.0, %v840
    %v842 = vpop.f32.mrf.mxu0
    %843 = vmatprep.mubr.f32.mxu0 0.0
    %844 = vmatmul.mubr.f32.gmra.mxu0 %v772
    %v845 = vpop.f32.mrf.mxu0
    %v846 = vadd.f32 0.0, %v845
    %v847 = vpop.f32.mrf.mxu0
    %848 = vdwg.mxu0
    %849 = vrot.lane.b32.xlu0 %v229, 104
    %v850 = vpop.permute.xlu0 %849
    %851 = vrot.lane.b32.xlu0 %v234, 104
    %v852 = vpop.permute.xlu0 %851
    %853 = vrot.lane.b32.xlu0 %v229, 72
    %v854 = vpop.permute.xlu0 %853
    %855 = vrot.lane.b32.xlu0 %v234, 72
    %v856 = vpop.permute.xlu0 %855
    %v857 = vsel %vm243, %v850, 0
    %v859 = vsel %vm243, %v852, 0
    %v861 = vsel %vm243, %v854, 0
    %v863 = vsel %vm243, %v856, 0
    %865 = vmatprep.subr.mxu0 0.0
    %866 = vmatpush1.xpose.msra.mxu0 0.0
    %867 = vmatprep.subr.mxu0 0.0
    %868 = vmatpush1.xpose.msra.mxu0 0.0
    %869 = vmatprep.subr.mxu0 0.0
    %870 = vmatpush1.xpose.msra.mxu0 0.0
    %871 = vmatprep.subr.mxu0 0.0
    %872 = vmatpush1.xpose.msra.mxu0 0.0
    %873 = vmatprep.subr.mxu0 0.0
    %874 = vmatpush1.xpose.msra.mxu0 0.0
    %875 = vmatprep.subr.mxu0 0.0
    %876 = vmatpush1.xpose.msra.mxu0 0.0
    %877 = vmatprep.subr.mxu0 0.0
    %878 = vmatpush1.xpose.msra.mxu0 0.0
    %879 = vmatprep.subr.mxu0 0.0
    %880 = vmatpush1.xpose.msra.mxu0 0.0
    %881 = vmatprep.subr.mxu0 0.0
    %882 = vmatpush1.xpose.msra.mxu0 0.0
    %883 = vmatprep.subr.mxu0 0.0
    %884 = vmatpush1.xpose.msra.mxu0 0.0
    %885 = vmatprep.subr.mxu0 0.0
    %886 = vmatpush1.xpose.msra.mxu0 0.0
    %887 = vmatprep.subr.mxu0 0.0
    %888 = vmatpush1.xpose.msra.mxu0 0.0
    %889 = vmatprep.subr.mxu0 0.0
    %890 = vmatpush1.xpose.msra.mxu0 0.0
    %891 = vmatprep.subr.mxu0 0.0
    %892 = vmatpush1.xpose.msra.mxu0 0.0
    %893 = vmatprep.subr.mxu0 0.0
    %894 = vmatpush1.xpose.msra.mxu0 %v863
    %895 = vmatprep.subr.mxu0 0.0
    %896 = vmatpush1.xpose.msra.mxu0 %v861
    %897 = vmatprep.subr.mxu0 0.0
    %898 = vmatpush2.xpose.msra.mxu0 0.0
    %899 = vmatprep.subr.mxu0 0.0
    %900 = vmatpush2.xpose.msra.mxu0 0.0
    %901 = vmatprep.subr.mxu0 0.0
    %902 = vmatpush2.xpose.msra.mxu0 0.0
    %903 = vmatprep.subr.mxu0 0.0
    %904 = vmatpush2.xpose.msra.mxu0 0.0
    %905 = vmatprep.subr.mxu0 0.0
    %906 = vmatpush2.xpose.msra.mxu0 0.0
    %907 = vmatprep.subr.mxu0 0.0
    %908 = vmatpush2.xpose.msra.mxu0 0.0
    %909 = vmatprep.subr.mxu0 0.0
    %910 = vmatpush2.xpose.msra.mxu0 0.0
    %911 = vmatprep.subr.mxu0 0.0
    %912 = vmatpush2.xpose.msra.mxu0 0.0
    %913 = vmatprep.subr.mxu0 0.0
    %914 = vmatpush2.xpose.msra.mxu0 0.0
    %915 = vmatprep.subr.mxu0 0.0
    %916 = vmatpush2.xpose.msra.mxu0 0.0
    %917 = vmatprep.subr.mxu0 0.0
    %918 = vmatpush2.xpose.msra.mxu0 0.0
    %919 = vmatprep.subr.mxu0 0.0
    %920 = vmatpush2.xpose.msra.mxu0 0.0
    %921 = vmatprep.subr.mxu0 0.0
    %922 = vmatpush2.xpose.msra.mxu0 0.0
    %923 = vmatprep.subr.mxu0 0.0
    %924 = vmatpush2.xpose.msra.mxu0 0.0
    %925 = vmatprep.subr.mxu0 0.0
    %926 = vmatpush2.xpose.msra.mxu0 0.0
    %927 = vmatprep.subr.mxu0 0.0
    %928 = vmatpush2.xpose.msra.mxu0 0.0
    %929 = vmatprep.mubr.f32.mxu0 0.0
    %930 = vmatmul.mubr.f32.gmra.mxu0 %v857
    %v931 = vpop.f32.mrf.mxu0
    %v932 = vadd.f32 0.0, %v931
    %v933 = vpop.f32.mrf.mxu0
    %934 = vmatprep.mubr.f32.mxu0 0.0
    %935 = vmatmul.mubr.f32.gmra.mxu0 %v859
    %v936 = vpop.f32.mrf.mxu0
    %v937 = vadd.f32 0.0, %v936
    %v938 = vpop.f32.mrf.mxu0
    %939 = vdwg.mxu0
    %v940 = vmul.f32 %v932, 0.35355338
    %v941 = vmul.f32 %v937, 0.35355338
    %v942 = vadd.f32 %v940, %v97
    %v943 = vadd.f32 %v941, %v98
    %v944 = vsel %vm331, %v942, -inf
    %945 = vmax.xlane.f32.xlu0 %v944
    %v946 = vpop.xlane.xlu0 %945
    %v947 = vsel %vm331, %v943, -inf
    %948 = vmax.xlane.f32.xlu0 %v947
    %v949 = vpop.xlane.xlu0 %948
    %v950 = vsub.f32 %v942, %v946
    %v951 = vsub.f32 %v943, %v949
    %v952 = vmul.f32 %v950, 1.442695
    %v953 = vpow.pop %v952
    %v954 = vmul.f32 %v951, 1.442695
    %v955 = vpow.pop %v954
    %v956 = vsel %vm331, %v953, 0.0
    %957 = vadd.xlane.f32.xlu0 %v956
    %v958 = vpop.xlane.xlu0 %957
    %v959 = vsel %vm331, %v955, 0.0
    %960 = vadd.xlane.f32.xlu0 %v959
    %v961 = vpop.xlane.xlu0 %960
    %v962 = vrcp.pop %v958
    %v963 = vrcp.pop %v961
    %v964 = vmul.f32 %v953, %v962
    %v965 = vmul.f32 %v955, %v963
    %966 = vrot.lane.b32.xlu0 %v229, 40
    %v967 = vpop.permute.xlu0 %966
    %968 = vrot.lane.b32.xlu0 %v234, 40
    %v969 = vpop.permute.xlu0 %968
    %v973 = vsel %vm331, %v964, 0
    %v976 = vsel %vm331, %v965, 0
    %978 = vmatprep.subr.mxu0 0.0
    %979 = vmatpush1.msra.mxu0 0.0
    %980 = vmatprep.subr.mxu0 0.0
    %981 = vmatpush1.msra.mxu0 0.0
    %982 = vmatprep.subr.mxu0 0.0
    %983 = vmatpush1.msra.mxu0 0.0
    %984 = vmatprep.subr.mxu0 0.0
    %985 = vmatpush1.msra.mxu0 0.0
    %986 = vmatprep.subr.mxu0 0.0
    %987 = vmatpush1.msra.mxu0 0.0
    %988 = vmatprep.subr.mxu0 0.0
    %989 = vmatpush1.msra.mxu0 0.0
    %990 = vmatprep.subr.mxu0 0.0
    %991 = vmatpush1.msra.mxu0 0.0
    %992 = vmatprep.subr.mxu0 0.0
    %993 = vmatpush1.msra.mxu0 0.0
    %994 = vmatprep.subr.mxu0 0.0
    %995 = vmatpush1.msra.mxu0 0.0
    %996 = vmatprep.subr.mxu0 0.0
    %997 = vmatpush1.msra.mxu0 0.0
    %998 = vmatprep.subr.mxu0 0.0
    %999 = vmatpush1.msra.mxu0 0.0
    %1000 = vmatprep.subr.mxu0 0.0
    %1001 = vmatpush1.msra.mxu0 0.0
    %1002 = vmatprep.subr.mxu0 0.0
    %1003 = vmatpush1.msra.mxu0 0.0
    %1004 = vmatprep.subr.mxu0 0.0
    %1005 = vmatpush1.msra.mxu0 0.0
    %1006 = vmatprep.subr.mxu0 0.0
    %1007 = vmatpush1.msra.mxu0 %v969
    %1008 = vmatprep.subr.mxu0 0.0
    %1009 = vmatpush1.msra.mxu0 %v967
    %1010 = vmatprep.subr.mxu0 0.0
    %1011 = vmatpush2.msra.mxu0 0.0
    %1012 = vmatprep.subr.mxu0 0.0
    %1013 = vmatpush2.msra.mxu0 0.0
    %1014 = vmatprep.subr.mxu0 0.0
    %1015 = vmatpush2.msra.mxu0 0.0
    %1016 = vmatprep.subr.mxu0 0.0
    %1017 = vmatpush2.msra.mxu0 0.0
    %1018 = vmatprep.subr.mxu0 0.0
    %1019 = vmatpush2.msra.mxu0 0.0
    %1020 = vmatprep.subr.mxu0 0.0
    %1021 = vmatpush2.msra.mxu0 0.0
    %1022 = vmatprep.subr.mxu0 0.0
    %1023 = vmatpush2.msra.mxu0 0.0
    %1024 = vmatprep.subr.mxu0 0.0
    %1025 = vmatpush2.msra.mxu0 0.0
    %1026 = vmatprep.subr.mxu0 0.0
    %1027 = vmatpush2.msra.mxu0 0.0
    %1028 = vmatprep.subr.mxu0 0.0
    %1029 = vmatpush2.msra.mxu0 0.0
    %1030 = vmatprep.subr.mxu0 0.0
    %1031 = vmatpush2.msra.mxu0 0.0
    %1032 = vmatprep.subr.mxu0 0.0
    %1033 = vmatpush2.msra.mxu0 0.0
    %1034 = vmatprep.subr.mxu0 0.0
    %1035 = vmatpush2.msra.mxu0 0.0
    %1036 = vmatprep.subr.mxu0 0.0
    %1037 = vmatpush2.msra.mxu0 0.0
    %1038 = vmatprep.subr.mxu0 0.0
    %1039 = vmatpush2.msra.mxu0 0.0
    %1040 = vmatprep.subr.mxu0 0.0
    %1041 = vmatpush2.msra.mxu0 0.0
    %1042 = vmatprep.mubr.f32.mxu0 0.0
    %1043 = vmatmul.mubr.f32.gmra.mxu0 %v973
    %v1044 = vpop.f32.mrf.mxu0
    %v1045 = vadd.f32 0.0, %v1044
    %v1046 = vpop.f32.mrf.mxu0
    %1047 = vmatprep.mubr.f32.mxu0 0.0
    %1048 = vmatmul.mubr.f32.gmra.mxu0 %v976
    %v1049 = vpop.f32.mrf.mxu0
    %v1050 = vadd.f32 0.0, %v1049
    %v1051 = vpop.f32.mrf.mxu0
    %1052 = vdwg.mxu0
    %1055 = vrot.lane.b32.xlu0 %v637, 8
    %v1056 = vpop.permute.xlu0 %1055
    %1057 = vrot.lane.b32.xlu0 %v642, 8
    %v1058 = vpop.permute.xlu0 %1057
    %1063 = vrot.lane.b32.xlu0 %v841, 16
    %v1064 = vpop.permute.xlu0 %1063
    %1065 = vrot.lane.b32.xlu0 %v846, 16
    %v1066 = vpop.permute.xlu0 %1065
    %1071 = vrot.lane.b32.xlu0 %v1045, 24
    %v1072 = vpop.permute.xlu0 %1071
    %1073 = vrot.lane.b32.xlu0 %v1050, 24
    %v1074 = vpop.permute.xlu0 %1073
    %v1077 = vsel %vm243, %v433, %v1056
    %v1078 = vsel %vm243, %v438, %v1058
    %v1079 = vsel %vm331, %v1077, %v1064
    %v1080 = vsel %vm331, %v1078, %v1066
    %vm1081 = vcmask 195584
    %v1082 = vsel %vm1081, %v1079, %v1072
    %v1083 = vsel %vm1081, %v1080, %v1074
    %v1084 = vld [vmem:[%s6] sm:$0xff]
    %v1085 = vld [vmem:[%s6 + $0x8] sm:$0xff]
    %v1086 = vld [vmem:[%s6 + $0x10] sm:$0xff]
    %v1087 = vld [vmem:[%s6 + $0x18] sm:$0xff]
    %v1088 = vld [vmem:[%s7] sm:$0x1]
    %v1090 = vlaneseq
    %v1091 = vshrl.u32 %v1090, 7
    %v1092 = vsub.s32 0, %v1091
    %v1093 = vrot.slane %v1088, %v1092
    %v1096 = vsel %vm101, %v1082, 0
    %v1099 = vsel %vm101, %v1083, 0
    %1101 = vmatprep.subr.mxu0 0.0
    %1102 = vmatpush1.msra.mxu0 0.0
    %1103 = vmatprep.subr.mxu0 0.0
    %1104 = vmatpush1.msra.mxu0 0.0
    %1105 = vmatprep.subr.mxu0 0.0
    %1106 = vmatpush1.msra.mxu0 0.0
    %1107 = vmatprep.subr.mxu0 0.0
    %1108 = vmatpush1.msra.mxu0 0.0
    %1109 = vmatprep.subr.mxu0 0.0
    %1110 = vmatpush1.msra.mxu0 0.0
    %1111 = vmatprep.subr.mxu0 0.0
    %1112 = vmatpush1.msra.mxu0 0.0
    %1113 = vmatprep.subr.mxu0 0.0
    %1114 = vmatpush1.msra.mxu0 0.0
    %1115 = vmatprep.subr.mxu0 0.0
    %1116 = vmatpush1.msra.mxu0 0.0
    %1117 = vmatprep.subr.mxu0 0.0
    %1118 = vmatpush1.msra.mxu0 0.0
    %1119 = vmatprep.subr.mxu0 0.0
    %1120 = vmatpush1.msra.mxu0 0.0
    %1121 = vmatprep.subr.mxu0 0.0
    %1122 = vmatpush1.msra.mxu0 0.0
    %1123 = vmatprep.subr.mxu0 0.0
    %1124 = vmatpush1.msra.mxu0 0.0
    %1125 = vmatprep.subr.mxu0 0.0
    %1126 = vmatpush1.msra.mxu0 %v1087
    %1127 = vmatprep.subr.mxu0 0.0
    %1128 = vmatpush1.msra.mxu0 %v1086
    %1129 = vmatprep.subr.mxu0 0.0
    %1130 = vmatpush1.msra.mxu0 %v1085
    %1131 = vmatprep.subr.mxu0 0.0
    %1132 = vmatpush1.msra.mxu0 %v1084
    %1133 = vmatprep.subr.mxu0 0.0
    %1134 = vmatpush2.msra.mxu0 0.0
    %1135 = vmatprep.subr.mxu0 0.0
    %1136 = vmatpush2.msra.mxu0 0.0
    %1137 = vmatprep.subr.mxu0 0.0
    %1138 = vmatpush2.msra.mxu0 0.0
    %1139 = vmatprep.subr.mxu0 0.0
    %1140 = vmatpush2.msra.mxu0 0.0
    %1141 = vmatprep.subr.mxu0 0.0
    %1142 = vmatpush2.msra.mxu0 0.0
    %1143 = vmatprep.subr.mxu0 0.0
    %1144 = vmatpush2.msra.mxu0 0.0
    %1145 = vmatprep.subr.mxu0 0.0
    %1146 = vmatpush2.msra.mxu0 0.0
    %1147 = vmatprep.subr.mxu0 0.0
    %1148 = vmatpush2.msra.mxu0 0.0
    %1149 = vmatprep.subr.mxu0 0.0
    %1150 = vmatpush2.msra.mxu0 0.0
    %1151 = vmatprep.subr.mxu0 0.0
    %1152 = vmatpush2.msra.mxu0 0.0
    %1153 = vmatprep.subr.mxu0 0.0
    %1154 = vmatpush2.msra.mxu0 0.0
    %1155 = vmatprep.subr.mxu0 0.0
    %1156 = vmatpush2.msra.mxu0 0.0
    %1157 = vmatprep.subr.mxu0 0.0
    %1158 = vmatpush2.msra.mxu0 0.0
    %1159 = vmatprep.subr.mxu0 0.0
    %1160 = vmatpush2.msra.mxu0 0.0
    %1161 = vmatprep.subr.mxu0 0.0
    %1162 = vmatpush2.msra.mxu0 0.0
    %1163 = vmatprep.subr.mxu0 0.0
    %1164 = vmatpush2.msra.mxu0 0.0
    %1165 = vmatprep.mubr.f32.mxu0 0.0
    %1166 = vmatmul.mubr.f32.gmra.mxu0 %v1096
    %v1167 = vpop.f32.mrf.mxu0
    %v1168 = vadd.f32 %v1093, %v1167
    %v1169 = vpop.f32.mrf.mxu0
    %1170 = vmatprep.mubr.f32.mxu0 0.0
    %1171 = vmatmul.mubr.f32.gmra.mxu0 %v1099
    %v1172 = vpop.f32.mrf.mxu0
    %v1173 = vadd.f32 %v1093, %v1172
    %v1174 = vpop.f32.mrf.mxu0
    %1175 = vdwg.mxu0
    %v1176 = vadd.f32 %v95, %v1168
    %v1177 = vadd.f32 %v96, %v1173
    %v1178 = vld [vmem:[%s8] sm:$0x1]
    %v1179 = vld [vmem:[%s9] sm:$0x1]
    %v1180 = vsel %vm101, %v1176, 0.0
    %1181 = vadd.xlane.f32.xlu0 %v1180
    %v1182 = vpop.xlane.xlu0 %1181
    %v1183 = vsel %vm101, %v1177, 0.0
    %1184 = vadd.xlane.f32.xlu0 %v1183
    %v1185 = vpop.xlane.xlu0 %1184
    %v1186 = vmul.f32 %v1182, %v108
    %v1187 = vmul.f32 %v1185, %v108
    %v1188 = vsub.f32 %v1176, %v1186
    %v1189 = vsub.f32 %v1177, %v1187
    %v1190 = vmul.f32 %v1188, %v1188
    %v1191 = vmul.f32 %v1189, %v1189
    %v1192 = vsel %vm101, %v1190, 0.0
    %1193 = vadd.xlane.f32.xlu0 %v1192
    %v1194 = vpop.xlane.xlu0 %1193
    %v1195 = vsel %vm101, %v1191, 0.0
    %1196 = vadd.xlane.f32.xlu0 %v1195
    %v1197 = vpop.xlane.xlu0 %1196
    %v1198 = vmul.f32 %v1194, %v108
    %v1199 = vmul.f32 %v1197, %v108
    %v1200 = vadd.f32 %v1198, 1e-06
    %v1201 = vadd.f32 %v1199, 1e-06
    %v1202 = vrsqrt.pop %v1200
    %v1203 = vrsqrt.pop %v1201
    %v1204 = vmul.f32 %v1188, %v1202
    %v1205 = vmul.f32 %v1189, %v1203
    %v1207 = vlaneseq
    %v1208 = vshrl.u32 %v1207, 7
    %v1209 = vsub.s32 0, %v1208
    %v1210 = vrot.slane %v1178, %v1209
    %v1212 = vmul.f32 %v1204, %v1210
    %v1213 = vmul.f32 %v1205, %v1210
    %v1215 = vlaneseq
    %v1216 = vshrl.u32 %v1215, 7
    %v1217 = vsub.s32 0, %v1216
    %v1218 = vrot.slane %v1179, %v1217
    %v1220 = vadd.f32 %v1212, %v1218
    %v1221 = vadd.f32 %v1213, %v1218
    %v1222 = vld [vmem:[%s10] sm:$0xff]
    %v1223 = vld [vmem:[%s10 + $0x8] sm:$0xff]
    %v1224 = vld [vmem:[%s10 + $0x10] sm:$0xff]
    %v1225 = vld [vmem:[%s10 + $0x18] sm:$0xff]
    %v1226 = vld [vmem:[%s11] sm:$0x1]
    %v1228 = vlaneseq
    %v1229 = vshrl.u32 %v1228, 7
    %v1230 = vsub.s32 0, %v1229
    %v1231 = vrot.slane %v1226, %v1230
    %v1234 = vsel %vm101, %v1220, 0
    %v1237 = vsel %vm101, %v1221, 0
    %1239 = vmatprep.subr.mxu0 0.0
    %1240 = vmatpush1.msra.mxu0 0.0
    %1241 = vmatprep.subr.mxu0 0.0
    %1242 = vmatpush1.msra.mxu0 0.0
    %1243 = vmatprep.subr.mxu0 0.0
    %1244 = vmatpush1.msra.mxu0 0.0
    %1245 = vmatprep.subr.mxu0 0.0
    %1246 = vmatpush1.msra.mxu0 0.0
    %1247 = vmatprep.subr.mxu0 0.0
    %1248 = vmatpush1.msra.mxu0 0.0
    %1249 = vmatprep.subr.mxu0 0.0
    %1250 = vmatpush1.msra.mxu0 0.0
    %1251 = vmatprep.subr.mxu0 0.0
    %1252 = vmatpush1.msra.mxu0 0.0
    %1253 = vmatprep.subr.mxu0 0.0
    %1254 = vmatpush1.msra.mxu0 0.0
    %1255 = vmatprep.subr.mxu0 0.0
    %1256 = vmatpush1.msra.mxu0 0.0
    %1257 = vmatprep.subr.mxu0 0.0
    %1258 = vmatpush1.msra.mxu0 0.0
    %1259 = vmatprep.subr.mxu0 0.0
    %1260 = vmatpush1.msra.mxu0 0.0
    %1261 = vmatprep.subr.mxu0 0.0
    %1262 = vmatpush1.msra.mxu0 0.0
    %1263 = vmatprep.subr.mxu0 0.0
    %1264 = vmatpush1.msra.mxu0 %v1225
    %1265 = vmatprep.subr.mxu0 0.0
    %1266 = vmatpush1.msra.mxu0 %v1224
    %1267 = vmatprep.subr.mxu0 0.0
    %1268 = vmatpush1.msra.mxu0 %v1223
    %1269 = vmatprep.subr.mxu0 0.0
    %1270 = vmatpush1.msra.mxu0 %v1222
    %1271 = vmatprep.subr.mxu0 0.0
    %1272 = vmatpush2.msra.mxu0 0.0
    %1273 = vmatprep.subr.mxu0 0.0
    %1274 = vmatpush2.msra.mxu0 0.0
    %1275 = vmatprep.subr.mxu0 0.0
    %1276 = vmatpush2.msra.mxu0 0.0
    %1277 = vmatprep.subr.mxu0 0.0
    %1278 = vmatpush2.msra.mxu0 0.0
    %1279 = vmatprep.subr.mxu0 0.0
    %1280 = vmatpush2.msra.mxu0 0.0
    %1281 = vmatprep.subr.mxu0 0.0
    %1282 = vmatpush2.msra.mxu0 0.0
    %1283 = vmatprep.subr.mxu0 0.0
    %1284 = vmatpush2.msra.mxu0 0.0
    %1285 = vmatprep.subr.mxu0 0.0
    %1286 = vmatpush2.msra.mxu0 0.0
    %1287 = vmatprep.subr.mxu0 0.0
    %1288 = vmatpush2.msra.mxu0 0.0
    %1289 = vmatprep.subr.mxu0 0.0
    %1290 = vmatpush2.msra.mxu0 0.0
    %1291 = vmatprep.subr.mxu0 0.0
    %1292 = vmatpush2.msra.mxu0 0.0
    %1293 = vmatprep.subr.mxu0 0.0
    %1294 = vmatpush2.msra.mxu0 0.0
    %1295 = vmatprep.subr.mxu0 0.0
    %1296 = vmatpush2.msra.mxu0 0.0
    %1297 = vmatprep.subr.mxu0 0.0
    %1298 = vmatpush2.msra.mxu0 0.0
    %1299 = vmatprep.subr.mxu0 0.0
    %1300 = vmatpush2.msra.mxu0 0.0
    %1301 = vmatprep.subr.mxu0 0.0
    %1302 = vmatpush2.msra.mxu0 0.0
    %1303 = vmatprep.mubr.f32.mxu0 0.0
    %1304 = vmatmul.mubr.f32.gmra.mxu0 %v1234
    %v1305 = vpop.f32.mrf.mxu0
    %v1306 = vadd.f32 %v1231, %v1305
    %v1307 = vpop.f32.mrf.mxu0
    %1308 = vmatprep.mubr.f32.mxu0 0.0
    %1309 = vmatmul.mubr.f32.gmra.mxu0 %v1237
    %v1310 = vpop.f32.mrf.mxu0
    %v1311 = vadd.f32 %v1231, %v1310
    %v1312 = vpop.f32.mrf.mxu0
    %1313 = vdwg.mxu0
    %v1314 = vmax.f32 %v1306, 0.0
    %v1315 = vmax.f32 %v1311, 0.0
    %v1316 = vld [vmem:[%s12] sm:$0xff]
    %v1317 = vld [vmem:[%s12 + $0x8] sm:$0xff]
    %v1318 = vld [vmem:[%s12 + $0x10] sm:$0xff]
    %v1319 = vld [vmem:[%s12 + $0x18] sm:$0xff]
    %v1320 = vld [vmem:[%s12 + $0x20] sm:$0xff]
    %v1321 = vld [vmem:[%s12 + $0x28] sm:$0xff]
    %v1322 = vld [vmem:[%s12 + $0x30] sm:$0xff]
    %v1323 = vld [vmem:[%s12 + $0x38] sm:$0xff]
    %v1324 = vld [vmem:[%s13] sm:$0x1]
    %v1326 = vlaneseq
    %v1327 = vshrl.u32 %v1326, 7
    %v1328 = vsub.s32 0, %v1327
    %v1329 = vrot.slane %v1324, %v1328
    %vm1331 = vcmask 523264
    %v1333 = vsel %vm1331, %v1314, 0
    %v1336 = vsel %vm1331, %v1315, 0
    %1338 = vmatprep.subr.mxu0 0.0
    %1339 = vmatpush1.msra.mxu0 0.0
    %1340 = vmatprep.subr.mxu0 0.0
    %1341 = vmatpush1.msra.mxu0 0.0
    %1342 = vmatprep.subr.mxu0 0.0
    %1343 = vmatpush1.msra.mxu0 0.0
    %1344 = vmatprep.subr.mxu0 0.0
    %1345 = vmatpush1.msra.mxu0 0.0
    %1346 = vmatprep.subr.mxu0 0.0
    %1347 = vmatpush1.msra.mxu0 0.0
    %1348 = vmatprep.subr.mxu0 0.0
    %1349 = vmatpush1.msra.mxu0 0.0
    %1350 = vmatprep.subr.mxu0 0.0
    %1351 = vmatpush1.msra.mxu0 0.0
    %1352 = vmatprep.subr.mxu0 0.0
    %1353 = vmatpush1.msra.mxu0 0.0
    %1354 = vmatprep.subr.mxu0 0.0
    %1355 = vmatpush1.msra.mxu0 %v1323
    %1356 = vmatprep.subr.mxu0 0.0
    %1357 = vmatpush1.msra.mxu0 %v1322
    %1358 = vmatprep.subr.mxu0 0.0
    %1359 = vmatpush1.msra.mxu0 %v1321
    %1360 = vmatprep.subr.mxu0 0.0
    %1361 = vmatpush1.msra.mxu0 %v1320
    %1362 = vmatprep.subr.mxu0 0.0
    %1363 = vmatpush1.msra.mxu0 %v1319
    %1364 = vmatprep.subr.mxu0 0.0
    %1365 = vmatpush1.msra.mxu0 %v1318
    %1366 = vmatprep.subr.mxu0 0.0
    %1367 = vmatpush1.msra.mxu0 %v1317
    %1368 = vmatprep.subr.mxu0 0.0
    %1369 = vmatpush1.msra.mxu0 %v1316
    %1370 = vmatprep.subr.mxu0 0.0
    %1371 = vmatpush2.msra.mxu0 0.0
    %1372 = vmatprep.subr.mxu0 0.0
    %1373 = vmatpush2.msra.mxu0 0.0
    %1374 = vmatprep.subr.mxu0 0.0
    %1375 = vmatpush2.msra.mxu0 0.0
    %1376 = vmatprep.subr.mxu0 0.0
    %1377 = vmatpush2.msra.mxu0 0.0
    %1378 = vmatprep.subr.mxu0 0.0
    %1379 = vmatpush2.msra.mxu0 0.0
    %1380 = vmatprep.subr.mxu0 0.0
    %1381 = vmatpush2.msra.mxu0 0.0
    %1382 = vmatprep.subr.mxu0 0.0
    %1383 = vmatpush2.msra.mxu0 0.0
    %1384 = vmatprep.subr.mxu0 0.0
    %1385 = vmatpush2.msra.mxu0 0.0
    %1386 = vmatprep.subr.mxu0 0.0
    %1387 = vmatpush2.msra.mxu0 0.0
    %1388 = vmatprep.subr.mxu0 0.0
    %1389 = vmatpush2.msra.mxu0 0.0
    %1390 = vmatprep.subr.mxu0 0.0
    %1391 = vmatpush2.msra.mxu0 0.0
    %1392 = vmatprep.subr.mxu0 0.0
    %1393 = vmatpush2.msra.mxu0 0.0
    %1394 = vmatprep.subr.mxu0 0.0
    %1395 = vmatpush2.msra.mxu0 0.0
    %1396 = vmatprep.subr.mxu0 0.0
    %1397 = vmatpush2.msra.mxu0 0.0
    %1398 = vmatprep.subr.mxu0 0.0
    %1399 = vmatpush2.msra.mxu0 0.0
    %1400 = vmatprep.subr.mxu0 0.0
    %1401 = vmatpush2.msra.mxu0 0.0
    %1402 = vmatprep.mubr.f32.mxu0 0.0
    %1403 = vmatmul.mubr.f32.gmra.mxu0 %v1333
    %v1404 = vpop.f32.mrf.mxu0
    %v1405 = vadd.f32 %v1329, %v1404
    %v1406 = vpop.f32.mrf.mxu0
    %1407 = vmatprep.mubr.f32.mxu0 0.0
    %1408 = vmatmul.mubr.f32.gmra.mxu0 %v1336
    %v1409 = vpop.f32.mrf.mxu0
    %v1410 = vadd.f32 %v1329, %v1409
    %v1411 = vpop.f32.mrf.mxu0
    %1412 = vdwg.mxu0
    %v1413 = vadd.f32 %v1176, %v1405
    %v1414 = vadd.f32 %v1177, %v1410
    %s1415 = scalar_lea.vmem %s2, 1
    %v1416 = vld [vmem:[%s1415] sm:$0x1]
    %s1417 = scalar_lea.vmem [#allocation7], 1
    %v1418 = vld [vmem:[%s1417] sm:$0x1]
    %v1419 = vsel %vm101, %v1413, 0.0
    %1420 = vadd.xlane.f32.xlu0 %v1419
    %v1421 = vpop.xlane.xlu0 %1420
    %v1422 = vsel %vm101, %v1414, 0.0
    %1423 = vadd.xlane.f32.xlu0 %v1422
    %v1424 = vpop.xlane.xlu0 %1423
    %v1425 = vmul.f32 %v1421, %v108
    %v1426 = vmul.f32 %v1424, %v108
    %v1427 = vsub.f32 %v1413, %v1425
    %v1428 = vsub.f32 %v1414, %v1426
    %v1429 = vmul.f32 %v1427, %v1427
    %v1430 = vmul.f32 %v1428, %v1428
    %v1431 = vsel %vm101, %v1429, 0.0
    %1432 = vadd.xlane.f32.xlu0 %v1431
    %v1433 = vpop.xlane.xlu0 %1432
    %v1434 = vsel %vm101, %v1430, 0.0
    %1435 = vadd.xlane.f32.xlu0 %v1434
    %v1436 = vpop.xlane.xlu0 %1435
    %v1437 = vmul.f32 %v1433, %v108
    %v1438 = vmul.f32 %v1436, %v108
    %v1439 = vadd.f32 %v1437, 1e-06
    %v1440 = vadd.f32 %v1438, 1e-06
    %v1441 = vrsqrt.pop %v1439
    %v1442 = vrsqrt.pop %v1440
    %v1443 = vmul.f32 %v1427, %v1441
    %v1444 = vmul.f32 %v1428, %v1442
    %v1446 = vlaneseq
    %v1447 = vshrl.u32 %v1446, 7
    %v1448 = vsub.s32 0, %v1447
    %v1449 = vrot.slane %v1416, %v1448
    %v1451 = vmul.f32 %v1443, %v1449
    %v1452 = vmul.f32 %v1444, %v1449
    %v1454 = vlaneseq
    %v1455 = vshrl.u32 %v1454, 7
    %v1456 = vsub.s32 0, %v1455
    %v1457 = vrot.slane %v1418, %v1456
    %v1459 = vadd.f32 %v1451, %v1457
    %v1460 = vadd.f32 %v1452, %v1457
    %s1461 = scalar_lea.vmem %s4, 32
    %v1462 = vld [vmem:[%s1461] sm:$0xff]
    %v1463 = vld [vmem:[%s1461 + $0x8] sm:$0xff]
    %v1464 = vld [vmem:[%s1461 + $0x10] sm:$0xff]
    %v1465 = vld [vmem:[%s1461 + $0x18] sm:$0xff]
    %s1466 = scalar_lea.vmem %s5, 1
    %v1467 = vld [vmem:[%s1466] sm:$0x1]
    %v1469 = vlaneseq
    %v1470 = vshrl.u32 %v1469, 7
    %v1471 = vsub.s32 0, %v1470
    %v1472 = vrot.slane %v1467, %v1471
    %v1475 = vsel %vm101, %v1459, 0
    %v1478 = vsel %vm101, %v1460, 0
    %1480 = vmatprep.subr.mxu0 0.0
    %1481 = vmatpush1.msra.mxu0 0.0
    %1482 = vmatprep.subr.mxu0 0.0
    %1483 = vmatpush1.msra.mxu0 0.0
    %1484 = vmatprep.subr.mxu0 0.0
    %1485 = vmatpush1.msra.mxu0 0.0
    %1486 = vmatprep.subr.mxu0 0.0
    %1487 = vmatpush1.msra.mxu0 0.0
    %1488 = vmatprep.subr.mxu0 0.0
    %1489 = vmatpush1.msra.mxu0 0.0
    %1490 = vmatprep.subr.mxu0 0.0
    %1491 = vmatpush1.msra.mxu0 0.0
    %1492 = vmatprep.subr.mxu0 0.0
    %1493 = vmatpush1.msra.mxu0 0.0
    %1494 = vmatprep.subr.mxu0 0.0
    %1495 = vmatpush1.msra.mxu0 0.0
    %1496 = vmatprep.subr.mxu0 0.0
    %1497 = vmatpush1.msra.mxu0 0.0
    %1498 = vmatprep.subr.mxu0 0.0
    %1499 = vmatpush1.msra.mxu0 0.0
    %1500 = vmatprep.subr.mxu0 0.0
    %1501 = vmatpush1.msra.mxu0 0.0
    %1502 = vmatprep.subr.mxu0 0.0
    %1503 = vmatpush1.msra.mxu0 0.0
    %1504 = vmatprep.subr.mxu0 0.0
    %1505 = vmatpush1.msra.mxu0 %v1465
    %1506 = vmatprep.subr.mxu0 0.0
    %1507 = vmatpush1.msra.mxu0 %v1464
    %1508 = vmatprep.subr.mxu0 0.0
    %1509 = vmatpush1.msra.mxu0 %v1463
    %1510 = vmatprep.subr.mxu0 0.0
    %1511 = vmatpush1.msra.mxu0 %v1462
    %1512 = vmatprep.subr.mxu0 0.0
    %1513 = vmatpush2.msra.mxu0 0.0
    %1514 = vmatprep.subr.mxu0 0.0
    %1515 = vmatpush2.msra.mxu0 0.0
    %1516 = vmatprep.subr.mxu0 0.0
    %1517 = vmatpush2.msra.mxu0 0.0
    %1518 = vmatprep.subr.mxu0 0.0
    %1519 = vmatpush2.msra.mxu0 0.0
    %1520 = vmatprep.subr.mxu0 0.0
    %1521 = vmatpush2.msra.mxu0 0.0
    %1522 = vmatprep.subr.mxu0 0.0
    %1523 = vmatpush2.msra.mxu0 0.0
    %1524 = vmatprep.subr.mxu0 0.0
    %1525 = vmatpush2.msra.mxu0 0.0
    %1526 = vmatprep.subr.mxu0 0.0
    %1527 = vmatpush2.msra.mxu0 0.0
    %1528 = vmatprep.subr.mxu0 0.0
    %1529 = vmatpush2.msra.mxu0 0.0
    %1530 = vmatprep.subr.mxu0 0.0
    %1531 = vmatpush2.msra.mxu0 0.0
    %1532 = vmatprep.subr.mxu0 0.0
    %1533 = vmatpush2.msra.mxu0 0.0
    %1534 = vmatprep.subr.mxu0 0.0
    %1535 = vmatpush2.msra.mxu0 0.0
    %1536 = vmatprep.subr.mxu0 0.0
    %1537 = vmatpush2.msra.mxu0 0.0
    %1538 = vmatprep.subr.mxu0 0.0
    %1539 = vmatpush2.msra.mxu0 0.0
    %1540 = vmatprep.subr.mxu0 0.0
    %1541 = vmatpush2.msra.mxu0 0.0
    %1542 = vmatprep.subr.mxu0 0.0
    %1543 = vmatpush2.msra.mxu0 0.0
    %1544 = vmatprep.mubr.f32.mxu0 0.0
    %1545 = vmatmul.mubr.f32.gmra.mxu0 %v1475
    %v1546 = vpop.f32.mrf.mxu0
    %v1547 = vadd.f32 %v1472, %v1546
    %v1548 = vpop.f32.mrf.mxu0
    %1549 = vmatprep.mubr.f32.mxu0 0.0
    %1550 = vmatmul.mubr.f32.gmra.mxu0 %v1478
    %v1551 = vpop.f32.mrf.mxu0
    %v1552 = vadd.f32 %v1472, %v1551
    %v1553 = vpop.f32.mrf.mxu0
    %1554 = vdwg.mxu0
    %1557 = vrot.lane.b32.xlu0 %v1547, 96
    %v1558 = vpop.permute.xlu0 %1557
    %1559 = vrot.lane.b32.xlu0 %v1552, 96
    %v1560 = vpop.permute.xlu0 %1559
    %v1561 = vsel %vm243, %v1547, 0
    %v1563 = vsel %vm243, %v1552, 0
    %v1565 = vsel %vm243, %v1558, 0
    %v1567 = vsel %vm243, %v1560, 0
    %1569 = vmatprep.subr.mxu0 0.0
    %1570 = vmatpush1.xpose.msra.mxu0 0.0
    %1571 = vmatprep.subr.mxu0 0.0
    %1572 = vmatpush1.xpose.msra.mxu0 0.0
    %1573 = vmatprep.subr.mxu0 0.0
    %1574 = vmatpush1.xpose.msra.mxu0 0.0
    %1575 = vmatprep.subr.mxu0 0.0
    %1576 = vmatpush1.xpose.msra.mxu0 0.0
    %1577 = vmatprep.subr.mxu0 0.0
    %1578 = vmatpush1.xpose.msra.mxu0 0.0
    %1579 = vmatprep.subr.mxu0 0.0
    %1580 = vmatpush1.xpose.msra.mxu0 0.0
    %1581 = vmatprep.subr.mxu0 0.0
    %1582 = vmatpush1.xpose.msra.mxu0 0.0
    %1583 = vmatprep.subr.mxu0 0.0
    %1584 = vmatpush1.xpose.msra.mxu0 0.0
    %1585 = vmatprep.subr.mxu0 0.0
    %1586 = vmatpush1.xpose.msra.mxu0 0.0
    %1587 = vmatprep.subr.mxu0 0.0
    %1588 = vmatpush1.xpose.msra.mxu0 0.0
    %1589 = vmatprep.subr.mxu0 0.0
    %1590 = vmatpush1.xpose.msra.mxu0 0.0
    %1591 = vmatprep.subr.mxu0 0.0
    %1592 = vmatpush1.xpose.msra.mxu0 0.0
    %1593 = vmatprep.subr.mxu0 0.0
    %1594 = vmatpush1.xpose.msra.mxu0 0.0
    %1595 = vmatprep.subr.mxu0 0.0
    %1596 = vmatpush1.xpose.msra.mxu0 0.0
    %1597 = vmatprep.subr.mxu0 0.0
    %1598 = vmatpush1.xpose.msra.mxu0 %v1567
    %1599 = vmatprep.subr.mxu0 0.0
    %1600 = vmatpush1.xpose.msra.mxu0 %v1565
    %1601 = vmatprep.subr.mxu0 0.0
    %1602 = vmatpush2.xpose.msra.mxu0 0.0
    %1603 = vmatprep.subr.mxu0 0.0
    %1604 = vmatpush2.xpose.msra.mxu0 0.0
    %1605 = vmatprep.subr.mxu0 0.0
    %1606 = vmatpush2.xpose.msra.mxu0 0.0
    %1607 = vmatprep.subr.mxu0 0.0
    %1608 = vmatpush2.xpose.msra.mxu0 0.0
    %1609 = vmatprep.subr.mxu0 0.0
    %1610 = vmatpush2.xpose.msra.mxu0 0.0
    %1611 = vmatprep.subr.mxu0 0.0
    %1612 = vmatpush2.xpose.msra.mxu0 0.0
    %1613 = vmatprep.subr.mxu0 0.0
    %1614 = vmatpush2.xpose.msra.mxu0 0.0
    %1615 = vmatprep.subr.mxu0 0.0
    %1616 = vmatpush2.xpose.msra.mxu0 0.0
    %1617 = vmatprep.subr.mxu0 0.0
    %1618 = vmatpush2.xpose.msra.mxu0 0.0
    %1619 = vmatprep.subr.mxu0 0.0
    %1620 = vmatpush2.xpose.msra.mxu0 0.0
    %1621 = vmatprep.subr.mxu0 0.0
    %1622 = vmatpush2.xpose.msra.mxu0 0.0
    %1623 = vmatprep.subr.mxu0 0.0
    %1624 = vmatpush2.xpose.msra.mxu0 0.0
    %1625 = vmatprep.subr.mxu0 0.0
    %1626 = vmatpush2.xpose.msra.mxu0 0.0
    %1627 = vmatprep.subr.mxu0 0.0
    %1628 = vmatpush2.xpose.msra.mxu0 0.0
    %1629 = vmatprep.subr.mxu0 0.0
    %1630 = vmatpush2.xpose.msra.mxu0 0.0
    %1631 = vmatprep.subr.mxu0 0.0
    %1632 = vmatpush2.xpose.msra.mxu0 0.0
    %1633 = vmatprep.mubr.f32.mxu0 0.0
    %1634 = vmatmul.mubr.f32.gmra.mxu0 %v1561
    %v1635 = vpop.f32.mrf.mxu0
    %v1636 = vadd.f32 0.0, %v1635
    %v1637 = vpop.f32.mrf.mxu0
    %1638 = vmatprep.mubr.f32.mxu0 0.0
    %1639 = vmatmul.mubr.f32.gmra.mxu0 %v1563
    %v1640 = vpop.f32.mrf.mxu0
    %v1641 = vadd.f32 0.0, %v1640
    %v1642 = vpop.f32.mrf.mxu0
    %1643 = vdwg.mxu0
    %v1644 = vmul.f32 %v1636, 0.35355338
    %v1645 = vmul.f32 %v1641, 0.35355338
    %v1646 = vadd.f32 %v1644, %v97
    %v1647 = vadd.f32 %v1645, %v98
    %v1648 = vsel %vm331, %v1646, -inf
    %1649 = vmax.xlane.f32.xlu0 %v1648
    %v1650 = vpop.xlane.xlu0 %1649
    %v1651 = vsel %vm331, %v1647, -inf
    %1652 = vmax.xlane.f32.xlu0 %v1651
    %v1653 = vpop.xlane.xlu0 %1652
    %v1654 = vsub.f32 %v1646, %v1650
    %v1655 = vsub.f32 %v1647, %v1653
    %v1656 = vmul.f32 %v1654, 1.442695
    %v1657 = vpow.pop %v1656
    %v1658 = vmul.f32 %v1655, 1.442695
    %v1659 = vpow.pop %v1658
    %v1660 = vsel %vm331, %v1657, 0.0
    %1661 = vadd.xlane.f32.xlu0 %v1660
    %v1662 = vpop.xlane.xlu0 %1661
    %v1663 = vsel %vm331, %v1659, 0.0
    %1664 = vadd.xlane.f32.xlu0 %v1663
    %v1665 = vpop.xlane.xlu0 %1664
    %v1666 = vrcp.pop %v1662
    %v1667 = vrcp.pop %v1665
    %v1668 = vmul.f32 %v1657, %v1666
    %v1669 = vmul.f32 %v1659, %v1667
    %1670 = vrot.lane.b32.xlu0 %v1547, 64
    %v1671 = vpop.permute.xlu0 %1670
    %1672 = vrot.lane.b32.xlu0 %v1552, 64
    %v1673 = vpop.permute.xlu0 %1672
    %v1677 = vsel %vm331, %v1668, 0
    %v1680 = vsel %vm331, %v1669, 0
    %1682 = vmatprep.subr.mxu0 0.0
    %1683 = vmatpush1.msra.mxu0 0.0
    %1684 = vmatprep.subr.mxu0 0.0
    %1685 = vmatpush1.msra.mxu0 0.0
    %1686 = vmatprep.subr.mxu0 0.0
    %1687 = vmatpush1.msra.mxu0 0.0
    %1688 = vmatprep.subr.mxu0 0.0
    %1689 = vmatpush1.msra.mxu0 0.0
    %1690 = vmatprep.subr.mxu0 0.0
    %1691 = vmatpush1.msra.mxu0 0.0
    %1692 = vmatprep.subr.mxu0 0.0
    %1693 = vmatpush1.msra.mxu0 0.0
    %1694 = vmatprep.subr.mxu0 0.0
    %1695 = vmatpush1.msra.mxu0 0.0
    %1696 = vmatprep.subr.mxu0 0.0
    %1697 = vmatpush1.msra.mxu0 0.0
    %1698 = vmatprep.subr.mxu0 0.0
    %1699 = vmatpush1.msra.mxu0 0.0
    %1700 = vmatprep.subr.mxu0 0.0
    %1701 = vmatpush1.msra.mxu0 0.0
    %1702 = vmatprep.subr.mxu0 0.0
    %1703 = vmatpush1.msra.mxu0 0.0
    %1704 = vmatprep.subr.mxu0 0.0
    %1705 = vmatpush1.msra.mxu0 0.0
    %1706 = vmatprep.subr.mxu0 0.0
    %1707 = vmatpush1.msra.mxu0 0.0
    %1708 = vmatprep.subr.mxu0 0.0
    %1709 = vmatpush1.msra.mxu0 0.0
    %1710 = vmatprep.subr.mxu0 0.0
    %1711 = vmatpush1.msra.mxu0 %v1673
    %1712 = vmatprep.subr.mxu0 0.0
    %1713 = vmatpush1.msra.mxu0 %v1671
    %1714 = vmatprep.subr.mxu0 0.0
    %1715 = vmatpush2.msra.mxu0 0.0
    %1716 = vmatprep.subr.mxu0 0.0
    %1717 = vmatpush2.msra.mxu0 0.0
    %1718 = vmatprep.subr.mxu0 0.0
    %1719 = vmatpush2.msra.mxu0 0.0
    %1720 = vmatprep.subr.mxu0 0.0
    %1721 = vmatpush2.msra.mxu0 0.0
    %1722 = vmatprep.subr.mxu0 0.0
    %1723 = vmatpush2.msra.mxu0 0.0
    %1724 = vmatprep.subr.mxu0 0.0
    %1725 = vmatpush2.msra.mxu0 0.0
    %1726 = vmatprep.subr.mxu0 0.0
    %1727 = vmatpush2.msra.mxu0 0.0
    %1728 = vmatprep.subr.mxu0 0.0
    %1729 = vmatpush2.msra.mxu0 0.0
    %1730 = vmatprep.subr.mxu0 0.0
    %1731 = vmatpush2.msra.mxu0 0.0
    %1732 = vmatprep.subr.mxu0 0.0
    %1733 = vmatpush2.msra.mxu0 0.0
    %1734 = vmatprep.subr.mxu0 0.0
    %1735 = vmatpush2.msra.mxu0 0.0
    %1736 = vmatprep.subr.mxu0 0.0
    %1737 = vmatpush2.msra.mxu0 0.0
    %1738 = vmatprep.subr.mxu0 0.0
    %1739 = vmatpush2.msra.mxu0 0.0
    %1740 = vmatprep.subr.mxu0 0.0
    %1741 = vmatpush2.msra.mxu0 0.0
    %1742 = vmatprep.subr.mxu0 0.0
    %1743 = vmatpush2.msra.mxu0 0.0
    %1744 = vmatprep.subr.mxu0 0.0
    %1745 = vmatpush2.msra.mxu0 0.0
    %1746 = vmatprep.mubr.f32.mxu0 0.0
    %1747 = vmatmul.mubr.f32.gmra.mxu0 %v1677
    %v1748 = vpop.f32.mrf.mxu0
    %v1749 = vadd.f32 0.0, %v1748
    %v1750 = vpop.f32.mrf.mxu0
    %1751 = vmatprep.mubr.f32.mxu0 0.0
    %1752 = vmatmul.mubr.f32.gmra.mxu0 %v1680
    %v1753 = vpop.f32.mrf.mxu0
    %v1754 = vadd.f32 0.0, %v1753
    %v1755 = vpop.f32.mrf.mxu0
    %1756 = vdwg.mxu0
    %1757 = vrot.lane.b32.xlu0 %v1547, 120
    %v1758 = vpop.permute.xlu0 %1757
    %1759 = vrot.lane.b32.xlu0 %v1552, 120
    %v1760 = vpop.permute.xlu0 %1759
    %1761 = vrot.lane.b32.xlu0 %v1547, 88
    %v1762 = vpop.permute.xlu0 %1761
    %1763 = vrot.lane.b32.xlu0 %v1552, 88
    %v1764 = vpop.permute.xlu0 %1763
    %v1765 = vsel %vm243, %v1758, 0
    %v1767 = vsel %vm243, %v1760, 0
    %v1769 = vsel %vm243, %v1762, 0
    %v1771 = vsel %vm243, %v1764, 0
    %1773 = vmatprep.subr.mxu0 0.0
    %1774 = vmatpush1.xpose.msra.mxu0 0.0
    %1775 = vmatprep.subr.mxu0 0.0
    %1776 = vmatpush1.xpose.msra.mxu0 0.0
    %1777 = vmatprep.subr.mxu0 0.0
    %1778 = vmatpush1.xpose.msra.mxu0 0.0
    %1779 = vmatprep.subr.mxu0 0.0
    %1780 = vmatpush1.xpose.msra.mxu0 0.0
    %1781 = vmatprep.subr.mxu0 0.0
    %1782 = vmatpush1.xpose.msra.mxu0 0.0
    %1783 = vmatprep.subr.mxu0 0.0
    %1784 = vmatpush1.xpose.msra.mxu0 0.0
    %1785 = vmatprep.subr.mxu0 0.0
    %1786 = vmatpush1.xpose.msra.mxu0 0.0
    %1787 = vmatprep.subr.mxu0 0.0
    %1788 = vmatpush1.xpose.msra.mxu0 0.0
    %1789 = vmatprep.subr.mxu0 0.0
    %1790 = vmatpush1.xpose.msra.mxu0 0.0
    %1791 = vmatprep.subr.mxu0 0.0
    %1792 = vmatpush1.xpose.msra.mxu0 0.0
    %1793 = vmatprep.subr.mxu0 0.0
    %1794 = vmatpush1.xpose.msra.mxu0 0.0
    %1795 = vmatprep.subr.mxu0 0.0
    %1796 = vmatpush1.xpose.msra.mxu0 0.0
    %1797 = vmatprep.subr.mxu0 0.0
    %1798 = vmatpush1.xpose.msra.mxu0 0.0
    %1799 = vmatprep.subr.mxu0 0.0
    %1800 = vmatpush1.xpose.msra.mxu0 0.0
    %1801 = vmatprep.subr.mxu0 0.0
    %1802 = vmatpush1.xpose.msra.mxu0 %v1771
    %1803 = vmatprep.subr.mxu0 0.0
    %1804 = vmatpush1.xpose.msra.mxu0 %v1769
    %1805 = vmatprep.subr.mxu0 0.0
    %1806 = vmatpush2.xpose.msra.mxu0 0.0
    %1807 = vmatprep.subr.mxu0 0.0
    %1808 = vmatpush2.xpose.msra.mxu0 0.0
    %1809 = vmatprep.subr.mxu0 0.0
    %1810 = vmatpush2.xpose.msra.mxu0 0.0
    %1811 = vmatprep.subr.mxu0 0.0
    %1812 = vmatpush2.xpose.msra.mxu0 0.0
    %1813 = vmatprep.subr.mxu0 0.0
    %1814 = vmatpush2.xpose.msra.mxu0 0.0
    %1815 = vmatprep.subr.mxu0 0.0
    %1816 = vmatpush2.xpose.msra.mxu0 0.0
    %1817 = vmatprep.subr.mxu0 0.0
    %1818 = vmatpush2.xpose.msra.mxu0 0.0
    %1819 = vmatprep.subr.mxu0 0.0
    %1820 = vmatpush2.xpose.msra.mxu0 0.0
    %1821 = vmatprep.subr.mxu0 0.0
    %1822 = vmatpush2.xpose.msra.mxu0 0.0
    %1823 = vmatprep.subr.mxu0 0.0
    %1824 = vmatpush2.xpose.msra.mxu0 0.0
    %1825 = vmatprep.subr.mxu0 0.0
    %1826 = vmatpush2.xpose.msra.mxu0 0.0
    %1827 = vmatprep.subr.mxu0 0.0
    %1828 = vmatpush2.xpose.msra.mxu0 0.0
    %1829 = vmatprep.subr.mxu0 0.0
    %1830 = vmatpush2.xpose.msra.mxu0 0.0
    %1831 = vmatprep.subr.mxu0 0.0
    %1832 = vmatpush2.xpose.msra.mxu0 0.0
    %1833 = vmatprep.subr.mxu0 0.0
    %1834 = vmatpush2.xpose.msra.mxu0 0.0
    %1835 = vmatprep.subr.mxu0 0.0
    %1836 = vmatpush2.xpose.msra.mxu0 0.0
    %1837 = vmatprep.mubr.f32.mxu0 0.0
    %1838 = vmatmul.mubr.f32.gmra.mxu0 %v1765
    %v1839 = vpop.f32.mrf.mxu0
    %v1840 = vadd.f32 0.0, %v1839
    %v1841 = vpop.f32.mrf.mxu0
    %1842 = vmatprep.mubr.f32.mxu0 0.0
    %1843 = vmatmul.mubr.f32.gmra.mxu0 %v1767
    %v1844 = vpop.f32.mrf.mxu0
    %v1845 = vadd.f32 0.0, %v1844
    %v1846 = vpop.f32.mrf.mxu0
    %1847 = vdwg.mxu0
    %v1848 = vmul.f32 %v1840, 0.35355338
    %v1849 = vmul.f32 %v1845, 0.35355338
    %v1850 = vadd.f32 %v1848, %v97
    %v1851 = vadd.f32 %v1849, %v98
    %v1852 = vsel %vm331, %v1850, -inf
    %1853 = vmax.xlane.f32.xlu0 %v1852
    %v1854 = vpop.xlane.xlu0 %1853
    %v1855 = vsel %vm331, %v1851, -inf
    %1856 = vmax.xlane.f32.xlu0 %v1855
    %v1857 = vpop.xlane.xlu0 %1856
    %v1858 = vsub.f32 %v1850, %v1854
    %v1859 = vsub.f32 %v1851, %v1857
    %v1860 = vmul.f32 %v1858, 1.442695
    %v1861 = vpow.pop %v1860
    %v1862 = vmul.f32 %v1859, 1.442695
    %v1863 = vpow.pop %v1862
    %v1864 = vsel %vm331, %v1861, 0.0
    %1865 = vadd.xlane.f32.xlu0 %v1864
    %v1866 = vpop.xlane.xlu0 %1865
    %v1867 = vsel %vm331, %v1863, 0.0
    %1868 = vadd.xlane.f32.xlu0 %v1867
    %v1869 = vpop.xlane.xlu0 %1868
    %v1870 = vrcp.pop %v1866
    %v1871 = vrcp.pop %v1869
    %v1872 = vmul.f32 %v1861, %v1870
    %v1873 = vmul.f32 %v1863, %v1871
    %1874 = vrot.lane.b32.xlu0 %v1547, 56
    %v1875 = vpop.permute.xlu0 %1874
    %1876 = vrot.lane.b32.xlu0 %v1552, 56
    %v1877 = vpop.permute.xlu0 %1876
    %v1881 = vsel %vm331, %v1872, 0
    %v1884 = vsel %vm331, %v1873, 0
    %1886 = vmatprep.subr.mxu0 0.0
    %1887 = vmatpush1.msra.mxu0 0.0
    %1888 = vmatprep.subr.mxu0 0.0
    %1889 = vmatpush1.msra.mxu0 0.0
    %1890 = vmatprep.subr.mxu0 0.0
    %1891 = vmatpush1.msra.mxu0 0.0
    %1892 = vmatprep.subr.mxu0 0.0
    %1893 = vmatpush1.msra.mxu0 0.0
    %1894 = vmatprep.subr.mxu0 0.0
    %1895 = vmatpush1.msra.mxu0 0.0
    %1896 = vmatprep.subr.mxu0 0.0
    %1897 = vmatpush1.msra.mxu0 0.0
    %1898 = vmatprep.subr.mxu0 0.0
    %1899 = vmatpush1.msra.mxu0 0.0
    %1900 = vmatprep.subr.mxu0 0.0
    %1901 = vmatpush1.msra.mxu0 0.0
    %1902 = vmatprep.subr.mxu0 0.0
    %1903 = vmatpush1.msra.mxu0 0.0
    %1904 = vmatprep.subr.mxu0 0.0
    %1905 = vmatpush1.msra.mxu0 0.0
    %1906 = vmatprep.subr.mxu0 0.0
    %1907 = vmatpush1.msra.mxu0 0.0
    %1908 = vmatprep.subr.mxu0 0.0
    %1909 = vmatpush1.msra.mxu0 0.0
    %1910 = vmatprep.subr.mxu0 0.0
    %1911 = vmatpush1.msra.mxu0 0.0
    %1912 = vmatprep.subr.mxu0 0.0
    %1913 = vmatpush1.msra.mxu0 0.0
    %1914 = vmatprep.subr.mxu0 0.0
    %1915 = vmatpush1.msra.mxu0 %v1877
    %1916 = vmatprep.subr.mxu0 0.0
    %1917 = vmatpush1.msra.mxu0 %v1875
    %1918 = vmatprep.subr.mxu0 0.0
    %1919 = vmatpush2.msra.mxu0 0.0
    %1920 = vmatprep.subr.mxu0 0.0
    %1921 = vmatpush2.msra.mxu0 0.0
    %1922 = vmatprep.subr.mxu0 0.0
    %1923 = vmatpush2.msra.mxu0 0.0
    %1924 = vmatprep.subr.mxu0 0.0
    %1925 = vmatpush2.msra.mxu0 0.0
    %1926 = vmatprep.subr.mxu0 0.0
    %1927 = vmatpush2.msra.mxu0 0.0
    %1928 = vmatprep.subr.mxu0 0.0
    %1929 = vmatpush2.msra.mxu0 0.0
    %1930 = vmatprep.subr.mxu0 0.0
    %1931 = vmatpush2.msra.mxu0 0.0
    %1932 = vmatprep.subr.mxu0 0.0
    %1933 = vmatpush2.msra.mxu0 0.0
    %1934 = vmatprep.subr.mxu0 0.0
    %1935 = vmatpush2.msra.mxu0 0.0
    %1936 = vmatprep.subr.mxu0 0.0
    %1937 = vmatpush2.msra.mxu0 0.0
    %1938 = vmatprep.subr.mxu0 0.0
    %1939 = vmatpush2.msra.mxu0 0.0
    %1940 = vmatprep.subr.mxu0 0.0
    %1941 = vmatpush2.msra.mxu0 0.0
    %1942 = vmatprep.subr.mxu0 0.0
    %1943 = vmatpush2.msra.mxu0 0.0
    %1944 = vmatprep.subr.mxu0 0.0
    %1945 = vmatpush2.msra.mxu0 0.0
    %1946 = vmatprep.subr.mxu0 0.0
    %1947 = vmatpush2.msra.mxu0 0.0
    %1948 = vmatprep.subr.mxu0 0.0
    %1949 = vmatpush2.msra.mxu0 0.0
    %1950 = vmatprep.mubr.f32.mxu0 0.0
    %1951 = vmatmul.mubr.f32.gmra.mxu0 %v1881
    %v1952 = vpop.f32.mrf.mxu0
    %v1953 = vadd.f32 0.0, %v1952
    %v1954 = vpop.f32.mrf.mxu0
    %1955 = vmatprep.mubr.f32.mxu0 0.0
    %1956 = vmatmul.mubr.f32.gmra.mxu0 %v1884
    %v1957 = vpop.f32.mrf.mxu0
    %v1958 = vadd.f32 0.0, %v1957
    %v1959 = vpop.f32.mrf.mxu0
    %1960 = vdwg.mxu0
    %1961 = vrot.lane.b32.xlu0 %v1547, 112
    %v1962 = vpop.permute.xlu0 %1961
    %1963 = vrot.lane.b32.xlu0 %v1552, 112
    %v1964 = vpop.permute.xlu0 %1963
    %1965 = vrot.lane.b32.xlu0 %v1547, 80
    %v1966 = vpop.permute.xlu0 %1965
    %1967 = vrot.lane.b32.xlu0 %v1552, 80
    %v1968 = vpop.permute.xlu0 %1967
    %v1969 = vsel %vm243, %v1962, 0
    %v1971 = vsel %vm243, %v1964, 0
    %v1973 = vsel %vm243, %v1966, 0
    %v1975 = vsel %vm243, %v1968, 0
    %1977 = vmatprep.subr.mxu0 0.0
    %1978 = vmatpush1.xpose.msra.mxu0 0.0
    %1979 = vmatprep.subr.mxu0 0.0
    %1980 = vmatpush1.xpose.msra.mxu0 0.0
    %1981 = vmatprep.subr.mxu0 0.0
    %1982 = vmatpush1.xpose.msra.mxu0 0.0
    %1983 = vmatprep.subr.mxu0 0.0
    %1984 = vmatpush1.xpose.msra.mxu0 0.0
    %1985 = vmatprep.subr.mxu0 0.0
    %1986 = vmatpush1.xpose.msra.mxu0 0.0
    %1987 = vmatprep.subr.mxu0 0.0
    %1988 = vmatpush1.xpose.msra.mxu0 0.0
    %1989 = vmatprep.subr.mxu0 0.0
    %1990 = vmatpush1.xpose.msra.mxu0 0.0
    %1991 = vmatprep.subr.mxu0 0.0
    %1992 = vmatpush1.xpose.msra.mxu0 0.0
    %1993 = vmatprep.subr.mxu0 0.0
    %1994 = vmatpush1.xpose.msra.mxu0 0.0
    %1995 = vmatprep.subr.mxu0 0.0
    %1996 = vmatpush1.xpose.msra.mxu0 0.0
    %1997 = vmatprep.subr.mxu0 0.0
    %1998 = vmatpush1.xpose.msra.mxu0 0.0
    %1999 = vmatprep.subr.mxu0 0.0
    %2000 = vmatpush1.xpose.msra.mxu0 0.0
    %2001 = vmatprep.subr.mxu0 0.0
    %2002 = vmatpush1.xpose.msra.mxu0 0.0
    %2003 = vmatprep.subr.mxu0 0.0
    %2004 = vmatpush1.xpose.msra.mxu0 0.0
    %2005 = vmatprep.subr.mxu0 0.0
    %2006 = vmatpush1.xpose.msra.mxu0 %v1975
    %2007 = vmatprep.subr.mxu0 0.0
    %2008 = vmatpush1.xpose.msra.mxu0 %v1973
    %2009 = vmatprep.subr.mxu0 0.0
    %2010 = vmatpush2.xpose.msra.mxu0 0.0
    %2011 = vmatprep.subr.mxu0 0.0
    %2012 = vmatpush2.xpose.msra.mxu0 0.0
    %2013 = vmatprep.subr.mxu0 0.0
    %2014 = vmatpush2.xpose.msra.mxu0 0.0
    %2015 = vmatprep.subr.mxu0 0.0
    %2016 = vmatpush2.xpose.msra.mxu0 0.0
    %2017 = vmatprep.subr.mxu0 0.0
    %2018 = vmatpush2.xpose.msra.mxu0 0.0
    %2019 = vmatprep.subr.mxu0 0.0
    %2020 = vmatpush2.xpose.msra.mxu0 0.0
    %2021 = vmatprep.subr.mxu0 0.0
    %2022 = vmatpush2.xpose.msra.mxu0 0.0
    %2023 = vmatprep.subr.mxu0 0.0
    %2024 = vmatpush2.xpose.msra.mxu0 0.0
    %2025 = vmatprep.subr.mxu0 0.0
    %2026 = vmatpush2.xpose.msra.mxu0 0.0
    %2027 = vmatprep.subr.mxu0 0.0
    %2028 = vmatpush2.xpose.msra.mxu0 0.0
    %2029 = vmatprep.subr.mxu0 0.0
    %2030 = vmatpush2.xpose.msra.mxu0 0.0
    %2031 = vmatprep.subr.mxu0 0.0
    %2032 = vmatpush2.xpose.msra.mxu0 0.0
    %2033 = vmatprep.subr.mxu0 0.0
    %2034 = vmatpush2.xpose.msra.mxu0 0.0
    %2035 = vmatprep.subr.mxu0 0.0
    %2036 = vmatpush2.xpose.msra.mxu0 0.0
    %2037 = vmatprep.subr.mxu0 0.0
    %2038 = vmatpush2.xpose.msra.mxu0 0.0
    %2039 = vmatprep.subr.mxu0 0.0
    %2040 = vmatpush2.xpose.msra.mxu0 0.0
    %2041 = vmatprep.mubr.f32.mxu0 0.0
    %2042 = vmatmul.mubr.f32.gmra.mxu0 %v1969
    %v2043 = vpop.f32.mrf.mxu0
    %v2044 = vadd.f32 0.0, %v2043
    %v2045 = vpop.f32.mrf.mxu0
    %2046 = vmatprep.mubr.f32.mxu0 0.0
    %2047 = vmatmul.mubr.f32.gmra.mxu0 %v1971
    %v2048 = vpop.f32.mrf.mxu0
    %v2049 = vadd.f32 0.0, %v2048
    %v2050 = vpop.f32.mrf.mxu0
    %2051 = vdwg.mxu0
    %v2052 = vmul.f32 %v2044, 0.35355338
    %v2053 = vmul.f32 %v2049, 0.35355338
    %v2054 = vadd.f32 %v2052, %v97
    %v2055 = vadd.f32 %v2053, %v98
    %v2056 = vsel %vm331, %v2054, -inf
    %2057 = vmax.xlane.f32.xlu0 %v2056
    %v2058 = vpop.xlane.xlu0 %2057
    %v2059 = vsel %vm331, %v2055, -inf
    %2060 = vmax.xlane.f32.xlu0 %v2059
    %v2061 = vpop.xlane.xlu0 %2060
    %v2062 = vsub.f32 %v2054, %v2058
    %v2063 = vsub.f32 %v2055, %v2061
    %v2064 = vmul.f32 %v2062, 1.442695
    %v2065 = vpow.pop %v2064
    %v2066 = vmul.f32 %v2063, 1.442695
    %v2067 = vpow.pop %v2066
    %v2068 = vsel %vm331, %v2065, 0.0
    %2069 = vadd.xlane.f32.xlu0 %v2068
    %v2070 = vpop.xlane.xlu0 %2069
    %v2071 = vsel %vm331, %v2067, 0.0
    %2072 = vadd.xlane.f32.xlu0 %v2071
    %v2073 = vpop.xlane.xlu0 %2072
    %v2074 = vrcp.pop %v2070
    %v2075 = vrcp.pop %v2073
    %v2076 = vmul.f32 %v2065, %v2074
    %v2077 = vmul.f32 %v2067, %v2075
    %2078 = vrot.lane.b32.xlu0 %v1547, 48
    %v2079 = vpop.permute.xlu0 %2078
    %2080 = vrot.lane.b32.xlu0 %v1552, 48
    %v2081 = vpop.permute.xlu0 %2080
    %v2085 = vsel %vm331, %v2076, 0
    %v2088 = vsel %vm331, %v2077, 0
    %2090 = vmatprep.subr.mxu0 0.0
    %2091 = vmatpush1.msra.mxu0 0.0
    %2092 = vmatprep.subr.mxu0 0.0
    %2093 = vmatpush1.msra.mxu0 0.0
    %2094 = vmatprep.subr.mxu0 0.0
    %2095 = vmatpush1.msra.mxu0 0.0
    %2096 = vmatprep.subr.mxu0 0.0
    %2097 = vmatpush1.msra.mxu0 0.0
    %2098 = vmatprep.subr.mxu0 0.0
    %2099 = vmatpush1.msra.mxu0 0.0
    %2100 = vmatprep.subr.mxu0 0.0
    %2101 = vmatpush1.msra.mxu0 0.0
    %2102 = vmatprep.subr.mxu0 0.0
    %2103 = vmatpush1.msra.mxu0 0.0
    %2104 = vmatprep.subr.mxu0 0.0
    %2105 = vmatpush1.msra.mxu0 0.0
    %2106 = vmatprep.subr.mxu0 0.0
    %2107 = vmatpush1.msra.mxu0 0.0
    %2108 = vmatprep.subr.mxu0 0.0
    %2109 = vmatpush1.msra.mxu0 0.0
    %2110 = vmatprep.subr.mxu0 0.0
    %2111 = vmatpush1.msra.mxu0 0.0
    %2112 = vmatprep.subr.mxu0 0.0
    %2113 = vmatpush1.msra.mxu0 0.0
    %2114 = vmatprep.subr.mxu0 0.0
    %2115 = vmatpush1.msra.mxu0 0.0
    %2116 = vmatprep.subr.mxu0 0.0
    %2117 = vmatpush1.msra.mxu0 0.0
    %2118 = vmatprep.subr.mxu0 0.0
    %2119 = vmatpush1.msra.mxu0 %v2081
    %2120 = vmatprep.subr.mxu0 0.0
    %2121 = vmatpush1.msra.mxu0 %v2079
    %2122 = vmatprep.subr.mxu0 0.0
    %2123 = vmatpush2.msra.mxu0 0.0
    %2124 = vmatprep.subr.mxu0 0.0
    %2125 = vmatpush2.msra.mxu0 0.0
    %2126 = vmatprep.subr.mxu0 0.0
    %2127 = vmatpush2.msra.mxu0 0.0
    %2128 = vmatprep.subr.mxu0 0.0
    %2129 = vmatpush2.msra.mxu0 0.0
    %2130 = vmatprep.subr.mxu0 0.0
    %2131 = vmatpush2.msra.mxu0 0.0
    %2132 = vmatprep.subr.mxu0 0.0
    %2133 = vmatpush2.msra.mxu0 0.0
    %2134 = vmatprep.subr.mxu0 0.0
    %2135 = vmatpush2.msra.mxu0 0.0
    %2136 = vmatprep.subr.mxu0 0.0
    %2137 = vmatpush2.msra.mxu0 0.0
    %2138 = vmatprep.subr.mxu0 0.0
    %2139 = vmatpush2.msra.mxu0 0.0
    %2140 = vmatprep.subr.mxu0 0.0
    %2141 = vmatpush2.msra.mxu0 0.0
    %2142 = vmatprep.subr.mxu0 0.0
    %2143 = vmatpush2.msra.mxu0 0.0
    %2144 = vmatprep.subr.mxu0 0.0
    %2145 = vmatpush2.msra.mxu0 0.0
    %2146 = vmatprep.subr.mxu0 0.0
    %2147 = vmatpush2.msra.mxu0 0.0
    %2148 = vmatprep.subr.mxu0 0.0
    %2149 = vmatpush2.msra.mxu0 0.0
    %2150 = vmatprep.subr.mxu0 0.0
    %2151 = vmatpush2.msra.mxu0 0.0
    %2152 = vmatprep.subr.mxu0 0.0
    %2153 = vmatpush2.msra.mxu0 0.0
    %2154 = vmatprep.mubr.f32.mxu0 0.0
    %2155 = vmatmul.mubr.f32.gmra.mxu0 %v2085
    %v2156 = vpop.f32.mrf.mxu0
    %v2157 = vadd.f32 0.0, %v2156
    %v2158 = vpop.f32.mrf.mxu0
    %2159 = vmatprep.mubr.f32.mxu0 0.0
    %2160 = vmatmul.mubr.f32.gmra.mxu0 %v2088
    %v2161 = vpop.f32.mrf.mxu0
    %v2162 = vadd.f32 0.0, %v2161
    %v2163 = vpop.f32.mrf.mxu0
    %2164 = vdwg.mxu0
    %2165 = vrot.lane.b32.xlu0 %v1547, 104
    %v2166 = vpop.permute.xlu0 %2165
    %2167 = vrot.lane.b32.xlu0 %v1552, 104
    %v2168 = vpop.permute.xlu0 %2167
    %2169 = vrot.lane.b32.xlu0 %v1547, 72
    %v2170 = vpop.permute.xlu0 %2169
    %2171 = vrot.lane.b32.xlu0 %v1552, 72
    %v2172 = vpop.permute.xlu0 %2171
    %v2173 = vsel %vm243, %v2166, 0
    %v2175 = vsel %vm243, %v2168, 0
    %v2177 = vsel %vm243, %v2170, 0
    %v2179 = vsel %vm243, %v2172, 0
    %2181 = vmatprep.subr.mxu0 0.0
    %2182 = vmatpush1.xpose.msra.mxu0 0.0
    %2183 = vmatprep.subr.mxu0 0.0
    %2184 = vmatpush1.xpose.msra.mxu0 0.0
    %2185 = vmatprep.subr.mxu0 0.0
    %2186 = vmatpush1.xpose.msra.mxu0 0.0
    %2187 = vmatprep.subr.mxu0 0.0
    %2188 = vmatpush1.xpose.msra.mxu0 0.0
    %2189 = vmatprep.subr.mxu0 0.0
    %2190 = vmatpush1.xpose.msra.mxu0 0.0
    %2191 = vmatprep.subr.mxu0 0.0
    %2192 = vmatpush1.xpose.msra.mxu0 0.0
    %2193 = vmatprep.subr.mxu0 0.0
    %2194 = vmatpush1.xpose.msra.mxu0 0.0
    %2195 = vmatprep.subr.mxu0 0.0
    %2196 = vmatpush1.xpose.msra.mxu0 0.0
    %2197 = vmatprep.subr.mxu0 0.0
    %2198 = vmatpush1.xpose.msra.mxu0 0.0
    %2199 = vmatprep.subr.mxu0 0.0
    %2200 = vmatpush1.xpose.msra.mxu0 0.0
    %2201 = vmatprep.subr.mxu0 0.0
    %2202 = vmatpush1.xpose.msra.mxu0 0.0
    %2203 = vmatprep.subr.mxu0 0.0
    %2204 = vmatpush1.xpose.msra.mxu0 0.0
    %2205 = vmatprep.subr.mxu0 0.0
    %2206 = vmatpush1.xpose.msra.mxu0 0.0
    %2207 = vmatprep.subr.mxu0 0.0
    %2208 = vmatpush1.xpose.msra.mxu0 0.0
    %2209 = vmatprep.subr.mxu0 0.0
    %2210 = vmatpush1.xpose.msra.mxu0 %v2179
    %2211 = vmatprep.subr.mxu0 0.0
    %2212 = vmatpush1.xpose.msra.mxu0 %v2177
    %2213 = vmatprep.subr.mxu0 0.0
    %2214 = vmatpush2.xpose.msra.mxu0 0.0
    %2215 = vmatprep.subr.mxu0 0.0
    %2216 = vmatpush2.xpose.msra.mxu0 0.0
    %2217 = vmatprep.subr.mxu0 0.0
    %2218 = vmatpush2.xpose.msra.mxu0 0.0
    %2219 = vmatprep.subr.mxu0 0.0
    %2220 = vmatpush2.xpose.msra.mxu0 0.0
    %2221 = vmatprep.subr.mxu0 0.0
    %2222 = vmatpush2.xpose.msra.mxu0 0.0
    %2223 = vmatprep.subr.mxu0 0.0
    %2224 = vmatpush2.xpose.msra.mxu0 0.0
    %2225 = vmatprep.subr.mxu0 0.0
    %2226 = vmatpush2.xpose.msra.mxu0 0.0
    %2227 = vmatprep.subr.mxu0 0.0
    %2228 = vmatpush2.xpose.msra.mxu0 0.0
    %2229 = vmatprep.subr.mxu0 0.0
    %2230 = vmatpush2.xpose.msra.mxu0 0.0
    %2231 = vmatprep.subr.mxu0 0.0
    %2232 = vmatpush2.xpose.msra.mxu0 0.0
    %2233 = vmatprep.subr.mxu0 0.0
    %2234 = vmatpush2.xpose.msra.mxu0 0.0
    %2235 = vmatprep.subr.mxu0 0.0
    %2236 = vmatpush2.xpose.msra.mxu0 0.0
    %2237 = vmatprep.subr.mxu0 0.0
    %2238 = vmatpush2.xpose.msra.mxu0 0.0
    %2239 = vmatprep.subr.mxu0 0.0
    %2240 = vmatpush2.xpose.msra.mxu0 0.0
    %2241 = vmatprep.subr.mxu0 0.0
    %2242 = vmatpush2.xpose.msra.mxu0 0.0
    %2243 = vmatprep.subr.mxu0 0.0
    %2244 = vmatpush2.xpose.msra.mxu0 0.0
    %2245 = vmatprep.mubr.f32.mxu0 0.0
    %2246 = vmatmul.mubr.f32.gmra.mxu0 %v2173
    %v2247 = vpop.f32.mrf.mxu0
    %v2248 = vadd.f32 0.0, %v2247
    %v2249 = vpop.f32.mrf.mxu0
    %2250 = vmatprep.mubr.f32.mxu0 0.0
    %2251 = vmatmul.mubr.f32.gmra.mxu0 %v2175
    %v2252 = vpop.f32.mrf.mxu0
    %v2253 = vadd.f32 0.0, %v2252
    %v2254 = vpop.f32.mrf.mxu0
    %2255 = vdwg.mxu0
    %v2256 = vmul.f32 %v2248, 0.35355338
    %v2257 = vmul.f32 %v2253, 0.35355338
    %v2258 = vadd.f32 %v2256, %v97
    %v2259 = vadd.f32 %v2257, %v98
    %v2260 = vsel %vm331, %v2258, -inf
    %2261 = vmax.xlane.f32.xlu0 %v2260
    %v2262 = vpop.xlane.xlu0 %2261
    %v2263 = vsel %vm331, %v2259, -inf
    %2264 = vmax.xlane.f32.xlu0 %v2263
    %v2265 = vpop.xlane.xlu0 %2264
    %v2266 = vsub.f32 %v2258, %v2262
    %v2267 = vsub.f32 %v2259, %v2265
    %v2268 = vmul.f32 %v2266, 1.442695
    %v2269 = vpow.pop %v2268
    %v2270 = vmul.f32 %v2267, 1.442695
    %v2271 = vpow.pop %v2270
    %v2272 = vsel %vm331, %v2269, 0.0
    %2273 = vadd.xlane.f32.xlu0 %v2272
    %v2274 = vpop.xlane.xlu0 %2273
    %v2275 = vsel %vm331, %v2271, 0.0
    %2276 = vadd.xlane.f32.xlu0 %v2275
    %v2277 = vpop.xlane.xlu0 %2276
    %v2278 = vrcp.pop %v2274
    %v2279 = vrcp.pop %v2277
    %v2280 = vmul.f32 %v2269, %v2278
    %v2281 = vmul.f32 %v2271, %v2279
    %2282 = vrot.lane.b32.xlu0 %v1547, 40
    %v2283 = vpop.permute.xlu0 %2282
    %2284 = vrot.lane.b32.xlu0 %v1552, 40
    %v2285 = vpop.permute.xlu0 %2284
    %v2289 = vsel %vm331, %v2280, 0
    %v2292 = vsel %vm331, %v2281, 0
    %2294 = vmatprep.subr.mxu0 0.0
    %2295 = vmatpush1.msra.mxu0 0.0
    %2296 = vmatprep.subr.mxu0 0.0
    %2297 = vmatpush1.msra.mxu0 0.0
    %2298 = vmatprep.subr.mxu0 0.0
    %2299 = vmatpush1.msra.mxu0 0.0
    %2300 = vmatprep.subr.mxu0 0.0
    %2301 = vmatpush1.msra.mxu0 0.0
    %2302 = vmatprep.subr.mxu0 0.0
    %2303 = vmatpush1.msra.mxu0 0.0
    %2304 = vmatprep.subr.mxu0 0.0
    %2305 = vmatpush1.msra.mxu0 0.0
    %2306 = vmatprep.subr.mxu0 0.0
    %2307 = vmatpush1.msra.mxu0 0.0
    %2308 = vmatprep.subr.mxu0 0.0
    %2309 = vmatpush1.msra.mxu0 0.0
    %2310 = vmatprep.subr.mxu0 0.0
    %2311 = vmatpush1.msra.mxu0 0.0
    %2312 = vmatprep.subr.mxu0 0.0
    %2313 = vmatpush1.msra.mxu0 0.0
    %2314 = vmatprep.subr.mxu0 0.0
    %2315 = vmatpush1.msra.mxu0 0.0
    %2316 = vmatprep.subr.mxu0 0.0
    %2317 = vmatpush1.msra.mxu0 0.0
    %2318 = vmatprep.subr.mxu0 0.0
    %2319 = vmatpush1.msra.mxu0 0.0
    %2320 = vmatprep.subr.mxu0 0.0
    %2321 = vmatpush1.msra.mxu0 0.0
    %2322 = vmatprep.subr.mxu0 0.0
    %2323 = vmatpush1.msra.mxu0 %v2285
    %2324 = vmatprep.subr.mxu0 0.0
    %2325 = vmatpush1.msra.mxu0 %v2283
    %2326 = vmatprep.subr.mxu0 0.0
    %2327 = vmatpush2.msra.mxu0 0.0
    %2328 = vmatprep.subr.mxu0 0.0
    %2329 = vmatpush2.msra.mxu0 0.0
    %2330 = vmatprep.subr.mxu0 0.0
    %2331 = vmatpush2.msra.mxu0 0.0
    %2332 = vmatprep.subr.mxu0 0.0
    %2333 = vmatpush2.msra.mxu0 0.0
    %2334 = vmatprep.subr.mxu0 0.0
    %2335 = vmatpush2.msra.mxu0 0.0
    %2336 = vmatprep.subr.mxu0 0.0
    %2337 = vmatpush2.msra.mxu0 0.0
    %2338 = vmatprep.subr.mxu0 0.0
    %2339 = vmatpush2.msra.mxu0 0.0
    %2340 = vmatprep.subr.mxu0 0.0
    %2341 = vmatpush2.msra.mxu0 0.0
    %2342 = vmatprep.subr.mxu0 0.0
    %2343 = vmatpush2.msra.mxu0 0.0
    %2344 = vmatprep.subr.mxu0 0.0
    %2345 = vmatpush2.msra.mxu0 0.0
    %2346 = vmatprep.subr.mxu0 0.0
    %2347 = vmatpush2.msra.mxu0 0.0
    %2348 = vmatprep.subr.mxu0 0.0
    %2349 = vmatpush2.msra.mxu0 0.0
    %2350 = vmatprep.subr.mxu0 0.0
    %2351 = vmatpush2.msra.mxu0 0.0
    %2352 = vmatprep.subr.mxu0 0.0
    %2353 = vmatpush2.msra.mxu0 0.0
    %2354 = vmatprep.subr.mxu0 0.0
    %2355 = vmatpush2.msra.mxu0 0.0
    %2356 = vmatprep.subr.mxu0 0.0
    %2357 = vmatpush2.msra.mxu0 0.0
    %2358 = vmatprep.mubr.f32.mxu0 0.0
    %2359 = vmatmul.mubr.f32.gmra.mxu0 %v2289
    %v2360 = vpop.f32.mrf.mxu0
    %v2361 = vadd.f32 0.0, %v2360
    %v2362 = vpop.f32.mrf.mxu0
    %2363 = vmatprep.mubr.f32.mxu0 0.0
    %2364 = vmatmul.mubr.f32.gmra.mxu0 %v2292
    %v2365 = vpop.f32.mrf.mxu0
    %v2366 = vadd.f32 0.0, %v2365
    %v2367 = vpop.f32.mrf.mxu0
    %2368 = vdwg.mxu0
    %2371 = vrot.lane.b32.xlu0 %v1953, 8
    %v2372 = vpop.permute.xlu0 %2371
    %2373 = vrot.lane.b32.xlu0 %v1958, 8
    %v2374 = vpop.permute.xlu0 %2373
    %2379 = vrot.lane.b32.xlu0 %v2157, 16
    %v2380 = vpop.permute.xlu0 %2379
    %2381 = vrot.lane.b32.xlu0 %v2162, 16
    %v2382 = vpop.permute.xlu0 %2381
    %2387 = vrot.lane.b32.xlu0 %v2361, 24
    %v2388 = vpop.permute.xlu0 %2387
    %2389 = vrot.lane.b32.xlu0 %v2366, 24
    %v2390 = vpop.permute.xlu0 %2389
    %v2393 = vsel %vm243, %v1749, %v2372
    %v2394 = vsel %vm243, %v1754, %v2374
    %v2395 = vsel %vm331, %v2393, %v2380
    %v2396 = vsel %vm331, %v2394, %v2382
    %v2397 = vsel %vm1081, %v2395, %v2388
    %v2398 = vsel %vm1081, %v2396, %v2390
    %s2399 = scalar_lea.vmem %s6, 32
    %v2400 = vld [vmem:[%s2399] sm:$0xff]
    %v2401 = vld [vmem:[%s2399 + $0x8] sm:$0xff]
    %v2402 = vld [vmem:[%s2399 + $0x10] sm:$0xff]
    %v2403 = vld [vmem:[%s2399 + $0x18] sm:$0xff]
    %s2404 = scalar_lea.vmem %s7, 1
    %v2405 = vld [vmem:[%s2404] sm:$0x1]
    %v2407 = vlaneseq
    %v2408 = vshrl.u32 %v2407, 7
    %v2409 = vsub.s32 0, %v2408
    %v2410 = vrot.slane %v2405, %v2409
    %v2413 = vsel %vm101, %v2397, 0
    %v2416 = vsel %vm101, %v2398, 0
    %2418 = vmatprep.subr.mxu0 0.0
    %2419 = vmatpush1.msra.mxu0 0.0
    %2420 = vmatprep.subr.mxu0 0.0
    %2421 = vmatpush1.msra.mxu0 0.0
    %2422 = vmatprep.subr.mxu0 0.0
    %2423 = vmatpush1.msra.mxu0 0.0
    %2424 = vmatprep.subr.mxu0 0.0
    %2425 = vmatpush1.msra.mxu0 0.0
    %2426 = vmatprep.subr.mxu0 0.0
    %2427 = vmatpush1.msra.mxu0 0.0
    %2428 = vmatprep.subr.mxu0 0.0
    %2429 = vmatpush1.msra.mxu0 0.0
    %2430 = vmatprep.subr.mxu0 0.0
    %2431 = vmatpush1.msra.mxu0 0.0
    %2432 = vmatprep.subr.mxu0 0.0
    %2433 = vmatpush1.msra.mxu0 0.0
    %2434 = vmatprep.subr.mxu0 0.0
    %2435 = vmatpush1.msra.mxu0 0.0
    %2436 = vmatprep.subr.mxu0 0.0
    %2437 = vmatpush1.msra.mxu0 0.0
    %2438 = vmatprep.subr.mxu0 0.0
    %2439 = vmatpush1.msra.mxu0 0.0
    %2440 = vmatprep.subr.mxu0 0.0
    %2441 = vmatpush1.msra.mxu0 0.0
    %2442 = vmatprep.subr.mxu0 0.0
    %2443 = vmatpush1.msra.mxu0 %v2403
    %2444 = vmatprep.subr.mxu0 0.0
    %2445 = vmatpush1.msra.mxu0 %v2402
    %2446 = vmatprep.subr.mxu0 0.0
    %2447 = vmatpush1.msra.mxu0 %v2401
    %2448 = vmatprep.subr.mxu0 0.0
    %2449 = vmatpush1.msra.mxu0 %v2400
    %2450 = vmatprep.subr.mxu0 0.0
    %2451 = vmatpush2.msra.mxu0 0.0
    %2452 = vmatprep.subr.mxu0 0.0
    %2453 = vmatpush2.msra.mxu0 0.0
    %2454 = vmatprep.subr.mxu0 0.0
    %2455 = vmatpush2.msra.mxu0 0.0
    %2456 = vmatprep.subr.mxu0 0.0
    %2457 = vmatpush2.msra.mxu0 0.0
    %2458 = vmatprep.subr.mxu0 0.0
    %2459 = vmatpush2.msra.mxu0 0.0
    %2460 = vmatprep.subr.mxu0 0.0
    %2461 = vmatpush2.msra.mxu0 0.0
    %2462 = vmatprep.subr.mxu0 0.0
    %2463 = vmatpush2.msra.mxu0 0.0
    %2464 = vmatprep.subr.mxu0 0.0
    %2465 = vmatpush2.msra.mxu0 0.0
    %2466 = vmatprep.subr.mxu0 0.0
    %2467 = vmatpush2.msra.mxu0 0.0
    %2468 = vmatprep.subr.mxu0 0.0
    %2469 = vmatpush2.msra.mxu0 0.0
    %2470 = vmatprep.subr.mxu0 0.0
    %2471 = vmatpush2.msra.mxu0 0.0
    %2472 = vmatprep.subr.mxu0 0.0
    %2473 = vmatpush2.msra.mxu0 0.0
    %2474 = vmatprep.subr.mxu0 0.0
    %2475 = vmatpush2.msra.mxu0 0.0
    %2476 = vmatprep.subr.mxu0 0.0
    %2477 = vmatpush2.msra.mxu0 0.0
    %2478 = vmatprep.subr.mxu0 0.0
    %2479 = vmatpush2.msra.mxu0 0.0
    %2480 = vmatprep.subr.mxu0 0.0
    %2481 = vmatpush2.msra.mxu0 0.0
    %2482 = vmatprep.mubr.f32.mxu0 0.0
    %2483 = vmatmul.mubr.f32.gmra.mxu0 %v2413
    %v2484 = vpop.f32.mrf.mxu0
    %v2485 = vadd.f32 %v2410, %v2484
    %v2486 = vpop.f32.mrf.mxu0
    %2487 = vmatprep.mubr.f32.mxu0 0.0
    %2488 = vmatmul.mubr.f32.gmra.mxu0 %v2416
    %v2489 = vpop.f32.mrf.mxu0
    %v2490 = vadd.f32 %v2410, %v2489
    %v2491 = vpop.f32.mrf.mxu0
    %2492 = vdwg.mxu0
    %v2493 = vadd.f32 %v1413, %v2485
    %v2494 = vadd.f32 %v1414, %v2490
    %s2495 = scalar_lea.vmem %s8, 1
    %v2496 = vld [vmem:[%s2495] sm:$0x1]
    %s2497 = scalar_lea.vmem %s9, 1
    %v2498 = vld [vmem:[%s2497] sm:$0x1]
    %v2499 = vsel %vm101, %v2493, 0.0
    %2500 = vadd.xlane.f32.xlu0 %v2499
    %v2501 = vpop.xlane.xlu0 %2500
    %v2502 = vsel %vm101, %v2494, 0.0
    %2503 = vadd.xlane.f32.xlu0 %v2502
    %v2504 = vpop.xlane.xlu0 %2503
    %v2505 = vmul.f32 %v2501, %v108
    %v2506 = vmul.f32 %v2504, %v108
    %v2507 = vsub.f32 %v2493, %v2505
    %v2508 = vsub.f32 %v2494, %v2506
    %v2509 = vmul.f32 %v2507, %v2507
    %v2510 = vmul.f32 %v2508, %v2508
    %v2511 = vsel %vm101, %v2509, 0.0
    %2512 = vadd.xlane.f32.xlu0 %v2511
    %v2513 = vpop.xlane.xlu0 %2512
    %v2514 = vsel %vm101, %v2510, 0.0
    %2515 = vadd.xlane.f32.xlu0 %v2514
    %v2516 = vpop.xlane.xlu0 %2515
    %v2517 = vmul.f32 %v2513, %v108
    %v2518 = vmul.f32 %v2516, %v108
    %v2519 = vadd.f32 %v2517, 1e-06
    %v2520 = vadd.f32 %v2518, 1e-06
    %v2521 = vrsqrt.pop %v2519
    %v2522 = vrsqrt.pop %v2520
    %v2523 = vmul.f32 %v2507, %v2521
    %v2524 = vmul.f32 %v2508, %v2522
    %v2526 = vlaneseq
    %v2527 = vshrl.u32 %v2526, 7
    %v2528 = vsub.s32 0, %v2527
    %v2529 = vrot.slane %v2496, %v2528
    %v2531 = vmul.f32 %v2523, %v2529
    %v2532 = vmul.f32 %v2524, %v2529
    %v2534 = vlaneseq
    %v2535 = vshrl.u32 %v2534, 7
    %v2536 = vsub.s32 0, %v2535
    %v2537 = vrot.slane %v2498, %v2536
    %v2539 = vadd.f32 %v2531, %v2537
    %v2540 = vadd.f32 %v2532, %v2537
    %s2541 = scalar_lea.vmem %s10, 32
    %v2542 = vld [vmem:[%s2541] sm:$0xff]
    %v2543 = vld [vmem:[%s2541 + $0x8] sm:$0xff]
    %v2544 = vld [vmem:[%s2541 + $0x10] sm:$0xff]
    %v2545 = vld [vmem:[%s2541 + $0x18] sm:$0xff]
    %s2546 = scalar_lea.vmem %s11, 1
    %v2547 = vld [vmem:[%s2546] sm:$0x1]
    %v2549 = vlaneseq
    %v2550 = vshrl.u32 %v2549, 7
    %v2551 = vsub.s32 0, %v2550
    %v2552 = vrot.slane %v2547, %v2551
    %v2555 = vsel %vm101, %v2539, 0
    %v2558 = vsel %vm101, %v2540, 0
    %2560 = vmatprep.subr.mxu0 0.0
    %2561 = vmatpush1.msra.mxu0 0.0
    %2562 = vmatprep.subr.mxu0 0.0
    %2563 = vmatpush1.msra.mxu0 0.0
    %2564 = vmatprep.subr.mxu0 0.0
    %2565 = vmatpush1.msra.mxu0 0.0
    %2566 = vmatprep.subr.mxu0 0.0
    %2567 = vmatpush1.msra.mxu0 0.0
    %2568 = vmatprep.subr.mxu0 0.0
    %2569 = vmatpush1.msra.mxu0 0.0
    %2570 = vmatprep.subr.mxu0 0.0
    %2571 = vmatpush1.msra.mxu0 0.0
    %2572 = vmatprep.subr.mxu0 0.0
    %2573 = vmatpush1.msra.mxu0 0.0
    %2574 = vmatprep.subr.mxu0 0.0
    %2575 = vmatpush1.msra.mxu0 0.0
    %2576 = vmatprep.subr.mxu0 0.0
    %2577 = vmatpush1.msra.mxu0 0.0
    %2578 = vmatprep.subr.mxu0 0.0
    %2579 = vmatpush1.msra.mxu0 0.0
    %2580 = vmatprep.subr.mxu0 0.0
    %2581 = vmatpush1.msra.mxu0 0.0
    %2582 = vmatprep.subr.mxu0 0.0
    %2583 = vmatpush1.msra.mxu0 0.0
    %2584 = vmatprep.subr.mxu0 0.0
    %2585 = vmatpush1.msra.mxu0 %v2545
    %2586 = vmatprep.subr.mxu0 0.0
    %2587 = vmatpush1.msra.mxu0 %v2544
    %2588 = vmatprep.subr.mxu0 0.0
    %2589 = vmatpush1.msra.mxu0 %v2543
    %2590 = vmatprep.subr.mxu0 0.0
    %2591 = vmatpush1.msra.mxu0 %v2542
    %2592 = vmatprep.subr.mxu0 0.0
    %2593 = vmatpush2.msra.mxu0 0.0
    %2594 = vmatprep.subr.mxu0 0.0
    %2595 = vmatpush2.msra.mxu0 0.0
    %2596 = vmatprep.subr.mxu0 0.0
    %2597 = vmatpush2.msra.mxu0 0.0
    %2598 = vmatprep.subr.mxu0 0.0
    %2599 = vmatpush2.msra.mxu0 0.0
    %2600 = vmatprep.subr.mxu0 0.0
    %2601 = vmatpush2.msra.mxu0 0.0
    %2602 = vmatprep.subr.mxu0 0.0
    %2603 = vmatpush2.msra.mxu0 0.0
    %2604 = vmatprep.subr.mxu0 0.0
    %2605 = vmatpush2.msra.mxu0 0.0
    %2606 = vmatprep.subr.mxu0 0.0
    %2607 = vmatpush2.msra.mxu0 0.0
    %2608 = vmatprep.subr.mxu0 0.0
    %2609 = vmatpush2.msra.mxu0 0.0
    %2610 = vmatprep.subr.mxu0 0.0
    %2611 = vmatpush2.msra.mxu0 0.0
    %2612 = vmatprep.subr.mxu0 0.0
    %2613 = vmatpush2.msra.mxu0 0.0
    %2614 = vmatprep.subr.mxu0 0.0
    %2615 = vmatpush2.msra.mxu0 0.0
    %2616 = vmatprep.subr.mxu0 0.0
    %2617 = vmatpush2.msra.mxu0 0.0
    %2618 = vmatprep.subr.mxu0 0.0
    %2619 = vmatpush2.msra.mxu0 0.0
    %2620 = vmatprep.subr.mxu0 0.0
    %2621 = vmatpush2.msra.mxu0 0.0
    %2622 = vmatprep.subr.mxu0 0.0
    %2623 = vmatpush2.msra.mxu0 0.0
    %2624 = vmatprep.mubr.f32.mxu0 0.0
    %2625 = vmatmul.mubr.f32.gmra.mxu0 %v2555
    %v2626 = vpop.f32.mrf.mxu0
    %v2627 = vadd.f32 %v2552, %v2626
    %v2628 = vpop.f32.mrf.mxu0
    %2629 = vmatprep.mubr.f32.mxu0 0.0
    %2630 = vmatmul.mubr.f32.gmra.mxu0 %v2558
    %v2631 = vpop.f32.mrf.mxu0
    %v2632 = vadd.f32 %v2552, %v2631
    %v2633 = vpop.f32.mrf.mxu0
    %2634 = vdwg.mxu0
    %v2635 = vmax.f32 %v2627, 0.0
    %v2636 = vmax.f32 %v2632, 0.0
    %s2637 = scalar_lea.vmem %s12, 64
    %v2638 = vld [vmem:[%s2637] sm:$0xff]
    %v2639 = vld [vmem:[%s2637 + $0x8] sm:$0xff]
    %v2640 = vld [vmem:[%s2637 + $0x10] sm:$0xff]
    %v2641 = vld [vmem:[%s2637 + $0x18] sm:$0xff]
    %v2642 = vld [vmem:[%s2637 + $0x20] sm:$0xff]
    %v2643 = vld [vmem:[%s2637 + $0x28] sm:$0xff]
    %v2644 = vld [vmem:[%s2637 + $0x30] sm:$0xff]
    %v2645 = vld [vmem:[%s2637 + $0x38] sm:$0xff]
    %s2646 = scalar_lea.vmem %s13, 1
    %v2647 = vld [vmem:[%s2646] sm:$0x1]
    %v2649 = vlaneseq
    %v2650 = vshrl.u32 %v2649, 7
    %v2651 = vsub.s32 0, %v2650
    %v2652 = vrot.slane %v2647, %v2651
    %v2655 = vsel %vm1331, %v2635, 0
    %v2658 = vsel %vm1331, %v2636, 0
    %2660 = vmatprep.subr.mxu0 0.0
    %2661 = vmatpush1.msra.mxu0 0.0
    %2662 = vmatprep.subr.mxu0 0.0
    %2663 = vmatpush1.msra.mxu0 0.0
    %2664 = vmatprep.subr.mxu0 0.0
    %2665 = vmatpush1.msra.mxu0 0.0
    %2666 = vmatprep.subr.mxu0 0.0
    %2667 = vmatpush1.msra.mxu0 0.0
    %2668 = vmatprep.subr.mxu0 0.0
    %2669 = vmatpush1.msra.mxu0 0.0
    %2670 = vmatprep.subr.mxu0 0.0
    %2671 = vmatpush1.msra.mxu0 0.0
    %2672 = vmatprep.subr.mxu0 0.0
    %2673 = vmatpush1.msra.mxu0 0.0
    %2674 = vmatprep.subr.mxu0 0.0
    %2675 = vmatpush1.msra.mxu0 0.0
    %2676 = vmatprep.subr.mxu0 0.0
    %2677 = vmatpush1.msra.mxu0 %v2645
    %2678 = vmatprep.subr.mxu0 0.0
    %2679 = vmatpush1.msra.mxu0 %v2644
    %2680 = vmatprep.subr.mxu0 0.0
    %2681 = vmatpush1.msra.mxu0 %v2643
    %2682 = vmatprep.subr.mxu0 0.0
    %2683 = vmatpush1.msra.mxu0 %v2642
    %2684 = vmatprep.subr.mxu0 0.0
    %2685 = vmatpush1.msra.mxu0 %v2641
    %2686 = vmatprep.subr.mxu0 0.0
    %2687 = vmatpush1.msra.mxu0 %v2640
    %2688 = vmatprep.subr.mxu0 0.0
    %2689 = vmatpush1.msra.mxu0 %v2639
    %2690 = vmatprep.subr.mxu0 0.0
    %2691 = vmatpush1.msra.mxu0 %v2638
    %2692 = vmatprep.subr.mxu0 0.0
    %2693 = vmatpush2.msra.mxu0 0.0
    %2694 = vmatprep.subr.mxu0 0.0
    %2695 = vmatpush2.msra.mxu0 0.0
    %2696 = vmatprep.subr.mxu0 0.0
    %2697 = vmatpush2.msra.mxu0 0.0
    %2698 = vmatprep.subr.mxu0 0.0
    %2699 = vmatpush2.msra.mxu0 0.0
    %2700 = vmatprep.subr.mxu0 0.0
    %2701 = vmatpush2.msra.mxu0 0.0
    %2702 = vmatprep.subr.mxu0 0.0
    %2703 = vmatpush2.msra.mxu0 0.0
    %2704 = vmatprep.subr.mxu0 0.0
    %2705 = vmatpush2.msra.mxu0 0.0
    %2706 = vmatprep.subr.mxu0 0.0
    %2707 = vmatpush2.msra.mxu0 0.0
    %2708 = vmatprep.subr.mxu0 0.0
    %2709 = vmatpush2.msra.mxu0 0.0
    %2710 = vmatprep.subr.mxu0 0.0
    %2711 = vmatpush2.msra.mxu0 0.0
    %2712 = vmatprep.subr.mxu0 0.0
    %2713 = vmatpush2.msra.mxu0 0.0
    %2714 = vmatprep.subr.mxu0 0.0
    %2715 = vmatpush2.msra.mxu0 0.0
    %2716 = vmatprep.subr.mxu0 0.0
    %2717 = vmatpush2.msra.mxu0 0.0
    %2718 = vmatprep.subr.mxu0 0.0
    %2719 = vmatpush2.msra.mxu0 0.0
    %2720 = vmatprep.subr.mxu0 0.0
    %2721 = vmatpush2.msra.mxu0 0.0
    %2722 = vmatprep.subr.mxu0 0.0
    %2723 = vmatpush2.msra.mxu0 0.0
    %2724 = vmatprep.mubr.f32.mxu0 0.0
    %2725 = vmatmul.mubr.f32.gmra.mxu0 %v2655
    %v2726 = vpop.f32.mrf.mxu0
    %v2727 = vadd.f32 %v2652, %v2726
    %v2728 = vpop.f32.mrf.mxu0
    %2729 = vmatprep.mubr.f32.mxu0 0.0
    %2730 = vmatmul.mubr.f32.gmra.mxu0 %v2658
    %v2731 = vpop.f32.mrf.mxu0
    %v2732 = vadd.f32 %v2652, %v2731
    %v2733 = vpop.f32.mrf.mxu0
    %2734 = vdwg.mxu0
    %v2735 = vadd.f32 %v2493, %v2727
    %v2736 = vadd.f32 %v2494, %v2732
    %v2737 = vld [vmem:[%s14] sm:$0x1]
    %v2738 = vld [vmem:[%s15] sm:$0x1]
    %v2739 = vsel %vm101, %v2735, 0.0
    %2740 = vadd.xlane.f32.xlu0 %v2739
    %v2741 = vpop.xlane.xlu0 %2740
    %v2742 = vsel %vm101, %v2736, 0.0
    %2743 = vadd.xlane.f32.xlu0 %v2742
    %v2744 = vpop.xlane.xlu0 %2743
    %v2745 = vmul.f32 %v2741, %v108
    %v2746 = vmul.f32 %v2744, %v108
    %v2747 = vsub.f32 %v2735, %v2745
    %v2748 = vsub.f32 %v2736, %v2746
    %v2749 = vmul.f32 %v2747, %v2747
    %v2750 = vmul.f32 %v2748, %v2748
    %v2751 = vsel %vm101, %v2749, 0.0
    %2752 = vadd.xlane.f32.xlu0 %v2751
    %v2753 = vpop.xlane.xlu0 %2752
    %v2754 = vsel %vm101, %v2750, 0.0
    %2755 = vadd.xlane.f32.xlu0 %v2754
    %v2756 = vpop.xlane.xlu0 %2755
    %v2757 = vmul.f32 %v2753, %v108
    %v2758 = vmul.f32 %v2756, %v108
    %v2759 = vadd.f32 %v2757, 1e-06
    %v2760 = vadd.f32 %v2758, 1e-06
    %v2761 = vrsqrt.pop %v2759
    %v2762 = vrsqrt.pop %v2760
    %v2763 = vmul.f32 %v2747, %v2761
    %v2764 = vmul.f32 %v2748, %v2762
    %v2766 = vlaneseq
    %v2767 = vshrl.u32 %v2766, 7
    %v2768 = vsub.s32 0, %v2767
    %v2769 = vrot.slane %v2737, %v2768
    %v2771 = vmul.f32 %v2763, %v2769
    %v2772 = vmul.f32 %v2764, %v2769
    %v2774 = vlaneseq
    %v2775 = vshrl.u32 %v2774, 7
    %v2776 = vsub.s32 0, %v2775
    %v2777 = vrot.slane %v2738, %v2776
    %v2779 = vadd.f32 %v2771, %v2777
    %v2780 = vadd.f32 %v2772, %v2777
    %2781 = vst.msk [vmem:[#allocation8] sm:$0xff] %vm101, %v2779
    %2782 = vst.msk [vmem:[#allocation8 + $0x8] sm:$0xff] %vm101, %v2780
    // Predicated region
    $region78: #{tpu_custom_call.1} parent=1 // pred_check
      _
    $region79: #{tpu_custom_call.1} parent=1 // pred_check_branch
      %2784 = sbr.rel (0) target = $region81
    $region80: #{tpu_custom_call.1} parent=1 // pred_region
      %s2786 = ssub.s32 256, 256
      %2787 = vsyncadd [#allocation4], %s2786
      %s2788 = sshll.u32 [#allocation8], 4
      %s2789 = int_to_ptr.vmem [resolvable:$true] %s2788
      %2794 = dma.vmem_to_hbm [thread:$0]  %s2789, 256, %s16, [#allocation4], 128, 128, 8
    $region81: #{tpu_custom_call.1} parent=1 // pred_fallthru
      _
    // Predicated region
    $region82: #{tpu_custom_call.1} parent=1 // pred_check
      _
    $region83: #{tpu_custom_call.1} parent=1 // pred_check_branch
      %2796 = sbr.rel (0) target = $region85
    $region84: #{tpu_custom_call.1} parent=1 // pred_region
      %2797 = dma.done [#allocation4], 256
    $region85: #{tpu_custom_call.1} parent=1 // pred_fallthru
      _
    %2798 = vsyncpa [#allocation3], 1
    %2799 = vsyncpa [#allocation6], 1
    %2800 = vsyncpa [#allocation4], 1

</llo_original>
